<compile_context>
chip_gen: v7x
topology: tpu7x:2x2x1
jax: 0.10.0
libtpu: 0.0.40
codegen_flags: <defaults>
</compile_context>

<pallas_src>
import functools

import jax
import jax.numpy as jnp
from jax.experimental import pallas as pl
from jax.experimental.pallas import tpu as pltpu


_LANE = 128


def _round_up(x, m):
    return (x + m - 1) // m * m


# ----------------------------------------------------------------------------
# Capability probes (kept defensive so the script always runs cleanly)
# ----------------------------------------------------------------------------
def _detect_param_pipeline_mode():
    """pl.Buffered(1) for grid-constant params, if this JAX build supports it."""
    if not hasattr(pl, "Buffered"):
        return None
    for ctor in (lambda: pl.Buffered(1), lambda: pl.Buffered(buffer_count=1)):
        try:
            mode = ctor()
            pl.BlockSpec((8, 128), lambda i: (0, 0), pipeline_mode=mode)
            return mode
        except Exception:
            continue
    return None


_PARAM_PIPELINE_MODE = _detect_param_pipeline_mode()


def _vmem_capacity_bytes():
    try:
        info = pltpu.get_tpu_info()
        for attr in ("vmem_capacity_bytes", "vmem_size_bytes", "vmem_bytes"):
            v = getattr(info, attr, None)
            if v:
                return int(v)
    except Exception:
        pass
    return 64 * 1024 * 1024   # conservative: v7x per-TensorCore VMEM


def _const_param_spec(shape, single_buffer):
    """Grid-constant (fetched-once) parameter BlockSpec."""
    index_map = lambda *_: (0,) * len(shape)
    if single_buffer and _PARAM_PIPELINE_MODE is not None:
        return pl.BlockSpec(shape, index_map, pipeline_mode=_PARAM_PIPELINE_MODE)
    return pl.BlockSpec(shape, index_map)


# ----------------------------------------------------------------------------
# Pallas kernel: the entire MLP, fused, on one row tile
# ----------------------------------------------------------------------------
def _mlp_kernel(x_ref, *rest, layer_meta, nlactv, last_op, compute_dtype):
    """rest = (w0[, w0_res], b0, w1[, w1_res], b1, ..., o_ref).

    All channel dims are pre-padded to multiples of 128 with zeros, so every
    matmul is a full-lane MXU tile and every load/store is unmasked.  Operands
    are bf16 on the MXU; accumulation, bias and activation are f32.
    """
    o_ref = rest[-1]
    param_refs = rest[:-1]

    x0 = x_ref[...]                      # bf16 (tm, c_in_pad): residual source, loaded once
    h = x0
    idx = 0
    n_layers = len(layer_meta)
    for i, has_res in enumerate(layer_meta):
        w_ref = param_refs[idx]; idx += 1
        wr_ref = None
        if has_res:
            wr_ref = param_refs[idx]; idx += 1
        b_ref = param_refs[idx]; idx += 1

        acc = jnp.dot(h, w_ref[...], preferred_element_type=jnp.float32)
        if has_res:
            # residual "concat" realized as a second matmul against the
            # VMEM-resident (already bf16) input tile — no HBM concat traffic.
            acc = acc + jnp.dot(x0, wr_ref[...], preferred_element_type=jnp.float32)
        acc = acc + b_ref[...]           # bias add in f32

        if i == n_layers - 1:            # final layer: last_op only
            if last_op == "sigmoid":
                acc = jax.nn.sigmoid(acc)
            elif last_op == "tanh":
                acc = jnp.tanh(acc)
            # Padded output lanes hold activation(0) (e.g. 0.5 for sigmoid);
            # the wrapper slices them off — never consume o_ref directly.
            o_ref[...] = acc.astype(o_ref.dtype)
        else:                            # hidden layers: nlactv
            if nlactv == "leaky_relu":
                acc = jnp.where(acc >= 0.0, acc, 0.02 * acc)  # module uses slope 0.02
            elif nlactv == "soft_plus":
                acc = jax.nn.softplus(acc)
            else:                        # 'relu' default
                acc = jnp.maximum(acc, 0.0)
            h = acc.astype(compute_dtype)


# ----------------------------------------------------------------------------
# Parameter init (mimics PyTorch Conv1d default init bounds; w stored (c_in, c_out))
# ----------------------------------------------------------------------------
def init_mlp_params(key, in_channels, out_channels, inter_channels, res_layers):
    all_channels = [in_channels] + list(inter_channels) + [out_channels]
    num_layers = len(all_channels) - 1
    params = []
    for l in range(num_layers):
        c_in = all_channels[l]
        if l in res_layers and l < num_layers - 1:
            c_in = all_channels[l] + all_channels[0]
        c_out = all_channels[l + 1]
        key, kw, kb = jax.random.split(key, 3)
        bound = 1.0 / float(c_in) ** 0.5
        w = jax.random.uniform(kw, (c_in, c_out), jnp.float32, -bound, bound)
        b = jax.random.uniform(kb, (1, c_out), jnp.float32, -bound, bound)
        params.append((w, b))
    return params


# ----------------------------------------------------------------------------
# One-time parameter preparation (pad + cast, hoisted out of the forward)
# ----------------------------------------------------------------------------
def prepare_mlp_params(params, *, in_channels, res_layers=(), compute_dtype=jnp.bfloat16):
    num_layers = len(params)
    res_set = {int(r) for r in res_layers}
    c_in0 = int(in_channels)
    c_in0_pad = _round_up(c_in0, _LANE)

    flat = []
    layer_meta = []
    param_bytes = 0
    max_width_pad = c_in0_pad
    flops_per_row = 0          # true (unpadded) flops per row
    hidden_out_true = 0        # sum of true hidden widths (softplus transc. count)

    k_prev, k_prev_pad = c_in0, c_in0_pad
    for i, (w, b) in enumerate(params):
        has_res = (i in res_set) and (i < num_layers - 1)
        c_out = int(w.shape[1])
        c_out_pad = _round_up(c_out, _LANE)
        max_width_pad = max(max_width_pad, c_out_pad)

        if has_res:
            assert w.shape[0] == k_prev + c_in0, "residual weight shape mismatch"
            w_main, w_res = w[:k_prev], w[k_prev:]
        else:
            assert w.shape[0] == k_prev, "weight shape mismatch"
            w_main, w_res = w, None

        wm = jnp.pad(w_main.astype(compute_dtype),
                     ((0, k_prev_pad - k_prev), (0, c_out_pad - c_out)))
        flat.append(wm)
        param_bytes += wm.size * wm.dtype.itemsize
        flops_per_row += 2 * k_prev * c_out

        if has_res:
            wr = jnp.pad(w_res.astype(compute_dtype),
                         ((0, c_in0_pad - c_in0), (0, c_out_pad - c_out)))
            flat.append(wr)
            param_bytes += wr.size * wr.dtype.itemsize
            flops_per_row += 2 * c_in0 * c_out

        bp = jnp.pad(b.astype(jnp.float32), ((0, 0), (0, c_out_pad - c_out)))
        flat.append(bp)
        param_bytes += bp.size * bp.dtype.itemsize

        if i < num_layers - 1:
            hidden_out_true += c_out
        layer_meta.append(has_res)
        k_prev, k_prev_pad = c_out, c_out_pad

    flat = tuple(jax.block_until_ready(p) for p in flat)   # materialize once

    return dict(
        flat=flat,
        layer_meta=tuple(layer_meta),
        compute_dtype=compute_dtype,
        c_in=c_in0, c_in_pad=c_in0_pad,
        c_out=k_prev, c_out_pad=k_prev_pad,
        param_bytes=int(param_bytes),
        max_width_pad=int(max_width_pad),
        flops_per_row=int(flops_per_row),
        hidden_out_true=int(hidden_out_true),
    )


# ----------------------------------------------------------------------------
# Forward pass (layout glue in JAX, all compute in one Pallas kernel)
# ----------------------------------------------------------------------------
def mlp_forward(x, prepared, *, nlactv="relu", last_op="sigmoid", tm=1024):
    """x: (N, C_in, L) -> (N, C_out, L), matching PyTorch MLP.forward."""
    compute_dtype = prepared["compute_dtype"]
    c_in, c_in_pad = prepared["c_in"], prepared["c_in_pad"]
    c_out, c_out_pad = prepared["c_out"], prepared["c_out_pad"]
    flat = prepared["flat"]
    layer_meta = prepared["layer_meta"]
    param_bytes = prepared["param_bytes"]
    max_width_pad = prepared["max_width_pad"]

    n, cx, L = x.shape
    assert cx == c_in, "input channel mismatch"
    M = n * L

    io_itemsize = jnp.dtype(compute_dtype).itemsize
    single_buf = _PARAM_PIPELINE_MODE is not None
    param_mult = 1 if single_buf else 2       # default pipelining double-buffers params

    def _vmem_est(t):
        return (2 * t * c_in_pad * io_itemsize     # double-buffered bf16 input tile
                + 2 * t * c_out_pad * io_itemsize  # double-buffered bf16 output tile
                + param_mult * param_bytes         # resident weights + biases
                + 3 * t * max_width_pad * 4)       # f32 live intermediate activations

    cap = _vmem_capacity_bytes()                   # 64 MiB on v7x, 128 MiB on v5e/v6e
    budget = int(0.6 * cap)

    # ---- row tile: large to amortize per-step overhead, capped by VMEM budget,
    #      and >= 2 grid steps when possible so both v7x TensorCores get work.
    M_lane = _round_up(M, _LANE)
    tm = max(_LANE, min(int(tm), M_lane))
    if M_lane >= 2 * _LANE:
        tm = min(tm, max(_LANE, (M_lane // 2) // _LANE * _LANE))
    while tm > _LANE and _vmem_est(tm) > budget:
        tm = max(_LANE, tm // 2)
    steps = -(-M_lane // tm)
    tm = _round_up(-(-M_lane // steps), 8)         # balance tiles (last one not mostly pad)
    M_pad = steps * tm

    # NCL -> (M, C) channels-last rows in bf16 (halves this layout pass's HBM bytes).
    # TODO(synk): if upstream keeps activations channels-last, this transpose/pad
    #             pass (and the inverse on the output) disappears entirely.
    x_mat = jnp.transpose(x.astype(compute_dtype), (0, 2, 1)).reshape(M, c_in)
    x_p = jnp.pad(x_mat, ((0, M_pad - M), (0, c_in_pad - c_in)))

    kernel = functools.partial(
        _mlp_kernel, layer_meta=layer_meta, nlactv=nlactv,
        last_op=last_op, compute_dtype=compute_dtype)

    # ---- advisory cost estimate from TRUE (unpadded) dims
    flops = prepared["flops_per_row"] * M
    transcendentals = 0
    if last_op in ("sigmoid", "tanh"):
        transcendentals += M * c_out
    if nlactv == "soft_plus":
        transcendentals += 2 * M * prepared["hidden_out_true"]
    bytes_accessed = (M_pad * c_in_pad * io_itemsize + param_bytes
                      + M_pad * c_out_pad * io_itemsize)

    vmem_limit = int(min(0.85 * cap, max(_vmem_est(tm) + (16 << 20), 32 << 20)))

    def _run(use_single_buffer_params):
        param_specs = [_const_param_spec(p.shape, use_single_buffer_params) for p in flat]
        return pl.pallas_call(
            kernel,
            out_shape=jax.ShapeDtypeStruct((M_pad, c_out_pad), compute_dtype),
            grid=(M_pad // tm,),
            in_specs=[pl.BlockSpec((tm, c_in_pad), lambda i: (i, 0))] + param_specs,
            out_specs=pl.BlockSpec((tm, c_out_pad), lambda i: (i, 0)),
            compiler_params=pltpu.CompilerParams(
                dimension_semantics=("parallel",),
                vmem_limit_bytes=vmem_limit,
            ),
            cost_estimate=pl.CostEstimate(
                flops=int(flops),
                transcendentals=int(transcendentals),
                bytes_accessed=int(bytes_accessed),
            ),
        )(x_p, *flat)

    if single_buf:
        try:
            out_p = _run(True)
        except Exception:     # backend rejected pipeline_mode -> default buffering
            out_p = _run(False)
    else:
        out_p = _run(False)

    out = out_p[:M, :c_out].astype(jnp.float32)
    return jnp.transpose(out.reshape(n, L, c_out), (0, 2, 1))


# ----------------------------------------------------------------------------
# Pure-JAX (f32) reference for a sanity check
# ----------------------------------------------------------------------------
def mlp_reference(x, params, *, res_layers=(), nlactv="relu", last_op="sigmoid"):
    n, c_in, L = x.shape
    num_layers = len(params)
    res_set = {int(r) for r in res_layers}
    x_mat = jnp.transpose(x, (0, 2, 1)).reshape(n * L, c_in)
    tmpx = x_mat
    for i, (w, b) in enumerate(params):
        if i in res_set and i < num_layers - 1:
            x_mat = jnp.concatenate([x_mat, tmpx], axis=-1)
        x_mat = x_mat @ w + b
        if i == num_layers - 1:
            if last_op == "sigmoid":
                x_mat = jax.nn.sigmoid(x_mat)
            elif last_op == "tanh":
                x_mat = jnp.tanh(x_mat)
        else:
            if nlactv == "leaky_relu":
                x_mat = jnp.where(x_mat >= 0.0, x_mat, 0.02 * x_mat)
            elif nlactv == "soft_plus":
                x_mat = jax.nn.softplus(x_mat)
            else:
                x_mat = jnp.maximum(x_mat, 0.0)
    c_out = x_mat.shape[-1]
    return jnp.transpose(x_mat.reshape(n, L, c_out), (0, 2, 1))


if __name__ == "__main__":
    # Small shapes consistent with the module (Conv1d stack on (N, C, L)).
    batch = 2
    L = 64                              # M = N * L = 128 rows
    in_channels = 16
    out_channels = 4
    inter_channels = [32, 32, 48, 32]   # small stand-in for [512,512,512,343,512,512]
    res_layers = [2]                    # exercise the residual (split-weight) path

    key = jax.random.PRNGKey(0)
    key, kx = jax.random.split(key)
    x = jax.random.normal(kx, (batch, in_channels, L), jnp.float32)

    params = init_mlp_params(key, in_channels, out_channels, inter_channels, res_layers)
    prepared = prepare_mlp_params(params, in_channels=in_channels,
                                  res_layers=tuple(res_layers))

    out = mlp_forward(x, prepared, nlactv="relu", last_op="sigmoid")
    out = jax.block_until_ready(out)

    ref = mlp_reference(x, params, res_layers=tuple(res_layers),
                        nlactv="relu", last_op="sigmoid")

    assert out.shape == (batch, out_channels, L), out.shape
    # bf16 MXU matmuls + bf16 output tile vs f32 reference -> loosened tolerance.
    max_err = float(jnp.max(jnp.abs(out - ref)))
    assert max_err < 3e-2, f"mismatch vs reference, max abs err = {max_err}"

    print("KERNEL_OK")
</pallas_src>

<mosaic_0001>
module attributes {stable_mosaic.version = 11 : i64} {
  func.func @_mlp_kernel(%arg0: i32, %arg1: memref<128x128xbf16, #tpu.memory_space<vmem>>, %arg2: memref<128x128xbf16, #tpu.memory_space<vmem>>, %arg3: memref<1x128xf32, #tpu.memory_space<vmem>>, %arg4: memref<128x128xbf16, #tpu.memory_space<vmem>>, %arg5: memref<1x128xf32, #tpu.memory_space<vmem>>, %arg6: memref<128x128xbf16, #tpu.memory_space<vmem>>, %arg7: memref<128x128xbf16, #tpu.memory_space<vmem>>, %arg8: memref<1x128xf32, #tpu.memory_space<vmem>>, %arg9: memref<128x128xbf16, #tpu.memory_space<vmem>>, %arg10: memref<1x128xf32, #tpu.memory_space<vmem>>, %arg11: memref<128x128xbf16, #tpu.memory_space<vmem>>, %arg12: memref<1x128xf32, #tpu.memory_space<vmem>>, %arg13: memref<128x128xbf16, #tpu.memory_space<vmem>>) attributes {dimension_semantics = [#tpu.dimension_semantics<parallel>], iteration_bounds = array<i64: 1>, scalar_prefetch = 0 : i64, scratch_operands = 0 : i64, tpu.core_type = #tpu.core_type<tc>, window_params = [{transform_indices = @transform_0, window_bounds = array<i64: 128, 128>}, {pipeline_mode = #tpu.pipeline_mode<synchronous>, transform_indices = @transform_1, window_bounds = array<i64: 128, 128>}, {pipeline_mode = #tpu.pipeline_mode<synchronous>, transform_indices = @transform_2, window_bounds = array<i64: 1, 128>}, {pipeline_mode = #tpu.pipeline_mode<synchronous>, transform_indices = @transform_3, window_bounds = array<i64: 128, 128>}, {pipeline_mode = #tpu.pipeline_mode<synchronous>, transform_indices = @transform_4, window_bounds = array<i64: 1, 128>}, {pipeline_mode = #tpu.pipeline_mode<synchronous>, transform_indices = @transform_5, window_bounds = array<i64: 128, 128>}, {pipeline_mode = #tpu.pipeline_mode<synchronous>, transform_indices = @transform_6, window_bounds = array<i64: 128, 128>}, {pipeline_mode = #tpu.pipeline_mode<synchronous>, transform_indices = @transform_7, window_bounds = array<i64: 1, 128>}, {pipeline_mode = #tpu.pipeline_mode<synchronous>, transform_indices = @transform_8, window_bounds = array<i64: 128, 128>}, {pipeline_mode = #tpu.pipeline_mode<synchronous>, transform_indices = @transform_9, window_bounds = array<i64: 1, 128>}, {pipeline_mode = #tpu.pipeline_mode<synchronous>, transform_indices = @transform_10, window_bounds = array<i64: 128, 128>}, {pipeline_mode = #tpu.pipeline_mode<synchronous>, transform_indices = @transform_11, window_bounds = array<i64: 1, 128>}, {transform_indices = @transform_12, window_bounds = array<i64: 128, 128>}]} {
    %c0 = arith.constant 0 : index
    %c0_0 = arith.constant 0 : index
    %0 = vector.load %arg1[%c0, %c0_0] : memref<128x128xbf16, #tpu.memory_space<vmem>>, vector<128x128xbf16>
    %c0_1 = arith.constant 0 : index
    %c0_2 = arith.constant 0 : index
    %1 = vector.load %arg2[%c0_1, %c0_2] : memref<128x128xbf16, #tpu.memory_space<vmem>>, vector<128x128xbf16>
    %cst = arith.constant dense<0.000000e+00> : vector<128x128xf32>
    %2 = tpu.matmul %0, %1, %cst {dimension_numbers = #tpu.dot_dimension_numbers<[1], [0], [0], [1], [0, 0, 1, 1], [], []>} : vector<128x128xbf16>, vector<128x128xbf16>, vector<128x128xf32> -> vector<128x128xf32>
    %c0_3 = arith.constant 0 : index
    %c0_4 = arith.constant 0 : index
    %3 = vector.load %arg3[%c0_3, %c0_4] : memref<1x128xf32, #tpu.memory_space<vmem>>, vector<1x128xf32>
    %4 = vector.broadcast %3 : vector<1x128xf32> to vector<128x128xf32>
    %5 = arith.addf %2, %4 : vector<128x128xf32>
    %cst_5 = arith.constant 0.000000e+00 : f32
    %6 = vector.broadcast %cst_5 : f32 to vector<128x128xf32>
    %7 = arith.maximumf %5, %6 : vector<128x128xf32>
    %8 = arith.truncf %7 : vector<128x128xf32> to vector<128x128xbf16>
    %c0_6 = arith.constant 0 : index
    %c0_7 = arith.constant 0 : index
    %9 = vector.load %arg4[%c0_6, %c0_7] : memref<128x128xbf16, #tpu.memory_space<vmem>>, vector<128x128xbf16>
    %cst_8 = arith.constant dense<0.000000e+00> : vector<128x128xf32>
    %10 = tpu.matmul %8, %9, %cst_8 {dimension_numbers = #tpu.dot_dimension_numbers<[1], [0], [0], [1], [0, 0, 1, 1], [], []>} : vector<128x128xbf16>, vector<128x128xbf16>, vector<128x128xf32> -> vector<128x128xf32>
    %c0_9 = arith.constant 0 : index
    %c0_10 = arith.constant 0 : index
    %11 = vector.load %arg5[%c0_9, %c0_10] : memref<1x128xf32, #tpu.memory_space<vmem>>, vector<1x128xf32>
    %12 = vector.broadcast %11 : vector<1x128xf32> to vector<128x128xf32>
    %13 = arith.addf %10, %12 : vector<128x128xf32>
    %cst_11 = arith.constant 0.000000e+00 : f32
    %14 = vector.broadcast %cst_11 : f32 to vector<128x128xf32>
    %15 = arith.maximumf %13, %14 : vector<128x128xf32>
    %16 = arith.truncf %15 : vector<128x128xf32> to vector<128x128xbf16>
    %c0_12 = arith.constant 0 : index
    %c0_13 = arith.constant 0 : index
    %17 = vector.load %arg6[%c0_12, %c0_13] : memref<128x128xbf16, #tpu.memory_space<vmem>>, vector<128x128xbf16>
    %cst_14 = arith.constant dense<0.000000e+00> : vector<128x128xf32>
    %18 = tpu.matmul %16, %17, %cst_14 {dimension_numbers = #tpu.dot_dimension_numbers<[1], [0], [0], [1], [0, 0, 1, 1], [], []>} : vector<128x128xbf16>, vector<128x128xbf16>, vector<128x128xf32> -> vector<128x128xf32>
    %c0_15 = arith.constant 0 : index
    %c0_16 = arith.constant 0 : index
    %19 = vector.load %arg7[%c0_15, %c0_16] : memref<128x128xbf16, #tpu.memory_space<vmem>>, vector<128x128xbf16>
    %cst_17 = arith.constant dense<0.000000e+00> : vector<128x128xf32>
    %20 = tpu.matmul %0, %19, %cst_17 {dimension_numbers = #tpu.dot_dimension_numbers<[1], [0], [0], [1], [0, 0, 1, 1], [], []>} : vector<128x128xbf16>, vector<128x128xbf16>, vector<128x128xf32> -> vector<128x128xf32>
    %21 = arith.addf %18, %20 : vector<128x128xf32>
    %c0_18 = arith.constant 0 : index
    %c0_19 = arith.constant 0 : index
    %22 = vector.load %arg8[%c0_18, %c0_19] : memref<1x128xf32, #tpu.memory_space<vmem>>, vector<1x128xf32>
    %23 = vector.broadcast %22 : vector<1x128xf32> to vector<128x128xf32>
    %24 = arith.addf %21, %23 : vector<128x128xf32>
    %cst_20 = arith.constant 0.000000e+00 : f32
    %25 = vector.broadcast %cst_20 : f32 to vector<128x128xf32>
    %26 = arith.maximumf %24, %25 : vector<128x128xf32>
    %27 = arith.truncf %26 : vector<128x128xf32> to vector<128x128xbf16>
    %c0_21 = arith.constant 0 : index
    %c0_22 = arith.constant 0 : index
    %28 = vector.load %arg9[%c0_21, %c0_22] : memref<128x128xbf16, #tpu.memory_space<vmem>>, vector<128x128xbf16>
    %cst_23 = arith.constant dense<0.000000e+00> : vector<128x128xf32>
    %29 = tpu.matmul %27, %28, %cst_23 {dimension_numbers = #tpu.dot_dimension_numbers<[1], [0], [0], [1], [0, 0, 1, 1], [], []>} : vector<128x128xbf16>, vector<128x128xbf16>, vector<128x128xf32> -> vector<128x128xf32>
    %c0_24 = arith.constant 0 : index
    %c0_25 = arith.constant 0 : index
    %30 = vector.load %arg10[%c0_24, %c0_25] : memref<1x128xf32, #tpu.memory_space<vmem>>, vector<1x128xf32>
    %31 = vector.broadcast %30 : vector<1x128xf32> to vector<128x128xf32>
    %32 = arith.addf %29, %31 : vector<128x128xf32>
    %cst_26 = arith.constant 0.000000e+00 : f32
    %33 = vector.broadcast %cst_26 : f32 to vector<128x128xf32>
    %34 = arith.maximumf %32, %33 : vector<128x128xf32>
    %35 = arith.truncf %34 : vector<128x128xf32> to vector<128x128xbf16>
    %c0_27 = arith.constant 0 : index
    %c0_28 = arith.constant 0 : index
    %36 = vector.load %arg11[%c0_27, %c0_28] : memref<128x128xbf16, #tpu.memory_space<vmem>>, vector<128x128xbf16>
    %cst_29 = arith.constant dense<0.000000e+00> : vector<128x128xf32>
    %37 = tpu.matmul %35, %36, %cst_29 {dimension_numbers = #tpu.dot_dimension_numbers<[1], [0], [0], [1], [0, 0, 1, 1], [], []>} : vector<128x128xbf16>, vector<128x128xbf16>, vector<128x128xf32> -> vector<128x128xf32>
    %c0_30 = arith.constant 0 : index
    %c0_31 = arith.constant 0 : index
    %38 = vector.load %arg12[%c0_30, %c0_31] : memref<1x128xf32, #tpu.memory_space<vmem>>, vector<1x128xf32>
    %39 = vector.broadcast %38 : vector<1x128xf32> to vector<128x128xf32>
    %40 = arith.addf %37, %39 : vector<128x128xf32>
    %41 = arith.negf %40 : vector<128x128xf32>
    %42 = math.exp %41 : vector<128x128xf32>
    %cst_32 = arith.constant 1.000000e+00 : f32
    %43 = vector.broadcast %cst_32 : f32 to vector<128x128xf32>
    %44 = arith.addf %43, %42 : vector<128x128xf32>
    %45 = arith.divf %43, %44 : vector<128x128xf32>
    %46 = arith.truncf %45 : vector<128x128xf32> to vector<128x128xbf16>
    %c0_33 = arith.constant 0 : index
    %c0_34 = arith.constant 0 : index
    %47 = vector.load %arg13[%c0_33, %c0_34] : memref<128x128xbf16, #tpu.memory_space<vmem>>, vector<128x128xbf16>
    tpu.vector_store %arg13[%c0_33, %c0_34], %46 {strides = array<i32>} : memref<128x128xbf16, #tpu.memory_space<vmem>>, vector<128x128xbf16>,
    return
  }
  func.func @transform_0(%arg0: i32) -> (i32, i32) {
    %c0_i32 = arith.constant 0 : i32
    %c0_i32_0 = arith.constant 0 : i32
    return %arg0, %c0_i32 : i32, i32
  }
  func.func @transform_1(%arg0: i32) -> (i32, i32) {
    %c0_i32 = arith.constant 0 : i32
    %c0_i32_0 = arith.constant 0 : i32
    %c0_i32_1 = arith.constant 0 : i32
    return %c0_i32, %c0_i32_0 : i32, i32
  }
  func.func @transform_2(%arg0: i32) -> (i32, i32) {
    %c0_i32 = arith.constant 0 : i32
    %c0_i32_0 = arith.constant 0 : i32
    %c0_i32_1 = arith.constant 0 : i32
    return %c0_i32, %c0_i32_0 : i32, i32
  }
  func.func @transform_3(%arg0: i32) -> (i32, i32) {
    %c0_i32 = arith.constant 0 : i32
    %c0_i32_0 = arith.constant 0 : i32
    %c0_i32_1 = arith.constant 0 : i32
    return %c0_i32, %c0_i32_0 : i32, i32
  }
  func.func @transform_4(%arg0: i32) -> (i32, i32) {
    %c0_i32 = arith.constant 0 : i32
    %c0_i32_0 = arith.constant 0 : i32
    %c0_i32_1 = arith.constant 0 : i32
    return %c0_i32, %c0_i32_0 : i32, i32
  }
  func.func @transform_5(%arg0: i32) -> (i32, i32) {
    %c0_i32 = arith.constant 0 : i32
    %c0_i32_0 = arith.constant 0 : i32
    %c0_i32_1 = arith.constant 0 : i32
    return %c0_i32, %c0_i32_0 : i32, i32
  }
  func.func @transform_6(%arg0: i32) -> (i32, i32) {
    %c0_i32 = arith.constant 0 : i32
    %c0_i32_0 = arith.constant 0 : i32
    %c0_i32_1 = arith.constant 0 : i32
    return %c0_i32, %c0_i32_0 : i32, i32
  }
  func.func @transform_7(%arg0: i32) -> (i32, i32) {
    %c0_i32 = arith.constant 0 : i32
    %c0_i32_0 = arith.constant 0 : i32
    %c0_i32_1 = arith.constant 0 : i32
    return %c0_i32, %c0_i32_0 : i32, i32
  }
  func.func @transform_8(%arg0: i32) -> (i32, i32) {
    %c0_i32 = arith.constant 0 : i32
    %c0_i32_0 = arith.constant 0 : i32
    %c0_i32_1 = arith.constant 0 : i32
    return %c0_i32, %c0_i32_0 : i32, i32
  }
  func.func @transform_9(%arg0: i32) -> (i32, i32) {
    %c0_i32 = arith.constant 0 : i32
    %c0_i32_0 = arith.constant 0 : i32
    %c0_i32_1 = arith.constant 0 : i32
    return %c0_i32, %c0_i32_0 : i32, i32
  }
  func.func @transform_10(%arg0: i32) -> (i32, i32) {
    %c0_i32 = arith.constant 0 : i32
    %c0_i32_0 = arith.constant 0 : i32
    %c0_i32_1 = arith.constant 0 : i32
    return %c0_i32, %c0_i32_0 : i32, i32
  }
  func.func @transform_11(%arg0: i32) -> (i32, i32) {
    %c0_i32 = arith.constant 0 : i32
    %c0_i32_0 = arith.constant 0 : i32
    %c0_i32_1 = arith.constant 0 : i32
    return %c0_i32, %c0_i32_0 : i32, i32
  }
  func.func @transform_12(%arg0: i32) -> (i32, i32) {
    %c0_i32 = arith.constant 0 : i32
    %c0_i32_0 = arith.constant 0 : i32
    return %arg0, %c0_i32 : i32, i32
  }
}

module attributes {stable_mosaic.version = 11 : i64} {
  func.func @_mlp_kernel(%arg0: i32, %arg1: memref<128x128xbf16, #tpu.memory_space<vmem>>, %arg2: memref<128x128xbf16, #tpu.memory_space<vmem>>, %arg3: memref<1x128xf32, #tpu.memory_space<vmem>>, %arg4: memref<128x128xbf16, #tpu.memory_space<vmem>>, %arg5: memref<1x128xf32, #tpu.memory_space<vmem>>, %arg6: memref<128x128xbf16, #tpu.memory_space<vmem>>, %arg7: memref<128x128xbf16, #tpu.memory_space<vmem>>, %arg8: memref<1x128xf32, #tpu.memory_space<vmem>>, %arg9: memref<128x128xbf16, #tpu.memory_space<vmem>>, %arg10: memref<1x128xf32, #tpu.memory_space<vmem>>, %arg11: memref<128x128xbf16, #tpu.memory_space<vmem>>, %arg12: memref<1x128xf32, #tpu.memory_space<vmem>>, %arg13: memref<128x128xbf16, #tpu.memory_space<vmem>>) attributes {dimension_semantics = [#tpu.dimension_semantics<parallel>], iteration_bounds = array<i64: 1>, scalar_prefetch = 0 : i64, scratch_operands = 0 : i64, tpu.core_type = #tpu.core_type<tc>, window_params = [{transform_indices = @transform_0, window_bounds = array<i64: 128, 128>}, {pipeline_mode = #tpu.pipeline_mode<synchronous>, transform_indices = @transform_1, window_bounds = array<i64: 128, 128>}, {pipeline_mode = #tpu.pipeline_mode<synchronous>, transform_indices = @transform_2, window_bounds = array<i64: 1, 128>}, {pipeline_mode = #tpu.pipeline_mode<synchronous>, transform_indices = @transform_3, window_bounds = array<i64: 128, 128>}, {pipeline_mode = #tpu.pipeline_mode<synchronous>, transform_indices = @transform_4, window_bounds = array<i64: 1, 128>}, {pipeline_mode = #tpu.pipeline_mode<synchronous>, transform_indices = @transform_5, window_bounds = array<i64: 128, 128>}, {pipeline_mode = #tpu.pipeline_mode<synchronous>, transform_indices = @transform_6, window_bounds = array<i64: 128, 128>}, {pipeline_mode = #tpu.pipeline_mode<synchronous>, transform_indices = @transform_7, window_bounds = array<i64: 1, 128>}, {pipeline_mode = #tpu.pipeline_mode<synchronous>, transform_indices = @transform_8, window_bounds = array<i64: 128, 128>}, {pipeline_mode = #tpu.pipeline_mode<synchronous>, transform_indices = @transform_9, window_bounds = array<i64: 1, 128>}, {pipeline_mode = #tpu.pipeline_mode<synchronous>, transform_indices = @transform_10, window_bounds = array<i64: 128, 128>}, {pipeline_mode = #tpu.pipeline_mode<synchronous>, transform_indices = @transform_11, window_bounds = array<i64: 1, 128>}, {transform_indices = @transform_12, window_bounds = array<i64: 128, 128>}]} {
    %c0 = arith.constant 0 : index
    %c0_0 = arith.constant 0 : index
    %0 = vector.load %arg1[%c0, %c0_0] : memref<128x128xbf16, #tpu.memory_space<vmem>>, vector<128x128xbf16>
    %c0_1 = arith.constant 0 : index
    %c0_2 = arith.constant 0 : index
    %1 = vector.load %arg2[%c0_1, %c0_2] : memref<128x128xbf16, #tpu.memory_space<vmem>>, vector<128x128xbf16>
    %cst = arith.constant dense<0.000000e+00> : vector<128x128xf32>
    %2 = tpu.matmul %0, %1, %cst {dimension_numbers = #tpu.dot_dimension_numbers<[1], [0], [0], [1], [0, 0, 1, 1], [], []>} : vector<128x128xbf16>, vector<128x128xbf16>, vector<128x128xf32> -> vector<128x128xf32>
    %c0_3 = arith.constant 0 : index
    %c0_4 = arith.constant 0 : index
    %3 = vector.load %arg3[%c0_3, %c0_4] : memref<1x128xf32, #tpu.memory_space<vmem>>, vector<1x128xf32>
    %4 = vector.broadcast %3 : vector<1x128xf32> to vector<128x128xf32>
    %5 = arith.addf %2, %4 : vector<128x128xf32>
    %cst_5 = arith.constant 0.000000e+00 : f32
    %6 = vector.broadcast %cst_5 : f32 to vector<128x128xf32>
    %7 = arith.maximumf %5, %6 : vector<128x128xf32>
    %8 = arith.truncf %7 : vector<128x128xf32> to vector<128x128xbf16>
    %c0_6 = arith.constant 0 : index
    %c0_7 = arith.constant 0 : index
    %9 = vector.load %arg4[%c0_6, %c0_7] : memref<128x128xbf16, #tpu.memory_space<vmem>>, vector<128x128xbf16>
    %cst_8 = arith.constant dense<0.000000e+00> : vector<128x128xf32>
    %10 = tpu.matmul %8, %9, %cst_8 {dimension_numbers = #tpu.dot_dimension_numbers<[1], [0], [0], [1], [0, 0, 1, 1], [], []>} : vector<128x128xbf16>, vector<128x128xbf16>, vector<128x128xf32> -> vector<128x128xf32>
    %c0_9 = arith.constant 0 : index
    %c0_10 = arith.constant 0 : index
    %11 = vector.load %arg5[%c0_9, %c0_10] : memref<1x128xf32, #tpu.memory_space<vmem>>, vector<1x128xf32>
    %12 = vector.broadcast %11 : vector<1x128xf32> to vector<128x128xf32>
    %13 = arith.addf %10, %12 : vector<128x128xf32>
    %cst_11 = arith.constant 0.000000e+00 : f32
    %14 = vector.broadcast %cst_11 : f32 to vector<128x128xf32>
    %15 = arith.maximumf %13, %14 : vector<128x128xf32>
    %16 = arith.truncf %15 : vector<128x128xf32> to vector<128x128xbf16>
    %c0_12 = arith.constant 0 : index
    %c0_13 = arith.constant 0 : index
    %17 = vector.load %arg6[%c0_12, %c0_13] : memref<128x128xbf16, #tpu.memory_space<vmem>>, vector<128x128xbf16>
    %cst_14 = arith.constant dense<0.000000e+00> : vector<128x128xf32>
    %18 = tpu.matmul %16, %17, %cst_14 {dimension_numbers = #tpu.dot_dimension_numbers<[1], [0], [0], [1], [0, 0, 1, 1], [], []>} : vector<128x128xbf16>, vector<128x128xbf16>, vector<128x128xf32> -> vector<128x128xf32>
    %c0_15 = arith.constant 0 : index
    %c0_16 = arith.constant 0 : index
    %19 = vector.load %arg7[%c0_15, %c0_16] : memref<128x128xbf16, #tpu.memory_space<vmem>>, vector<128x128xbf16>
    %cst_17 = arith.constant dense<0.000000e+00> : vector<128x128xf32>
    %20 = tpu.matmul %0, %19, %cst_17 {dimension_numbers = #tpu.dot_dimension_numbers<[1], [0], [0], [1], [0, 0, 1, 1], [], []>} : vector<128x128xbf16>, vector<128x128xbf16>, vector<128x128xf32> -> vector<128x128xf32>
    %21 = arith.addf %18, %20 : vector<128x128xf32>
    %c0_18 = arith.constant 0 : index
    %c0_19 = arith.constant 0 : index
    %22 = vector.load %arg8[%c0_18, %c0_19] : memref<1x128xf32, #tpu.memory_space<vmem>>, vector<1x128xf32>
    %23 = vector.broadcast %22 : vector<1x128xf32> to vector<128x128xf32>
    %24 = arith.addf %21, %23 : vector<128x128xf32>
    %cst_20 = arith.constant 0.000000e+00 : f32
    %25 = vector.broadcast %cst_20 : f32 to vector<128x128xf32>
    %26 = arith.maximumf %24, %25 : vector<128x128xf32>
    %27 = arith.truncf %26 : vector<128x128xf32> to vector<128x128xbf16>
    %c0_21 = arith.constant 0 : index
    %c0_22 = arith.constant 0 : index
    %28 = vector.load %arg9[%c0_21, %c0_22] : memref<128x128xbf16, #tpu.memory_space<vmem>>, vector<128x128xbf16>
    %cst_23 = arith.constant dense<0.000000e+00> : vector<128x128xf32>
    %29 = tpu.matmul %27, %28, %cst_23 {dimension_numbers = #tpu.dot_dimension_numbers<[1], [0], [0], [1], [0, 0, 1, 1], [], []>} : vector<128x128xbf16>, vector<128x128xbf16>, vector<128x128xf32> -> vector<128x128xf32>
    %c0_24 = arith.constant 0 : index
    %c0_25 = arith.constant 0 : index
    %30 = vector.load %arg10[%c0_24, %c0_25] : memref<1x128xf32, #tpu.memory_space<vmem>>, vector<1x128xf32>
    %31 = vector.broadcast %30 : vector<1x128xf32> to vector<128x128xf32>
    %32 = arith.addf %29, %31 : vector<128x128xf32>
    %cst_26 = arith.constant 0.000000e+00 : f32
    %33 = vector.broadcast %cst_26 : f32 to vector<128x128xf32>
    %34 = arith.maximumf %32, %33 : vector<128x128xf32>
    %35 = arith.truncf %34 : vector<128x128xf32> to vector<128x128xbf16>
    %c0_27 = arith.constant 0 : index
    %c0_28 = arith.constant 0 : index
    %36 = vector.load %arg11[%c0_27, %c0_28] : memref<128x128xbf16, #tpu.memory_space<vmem>>, vector<128x128xbf16>
    %cst_29 = arith.constant dense<0.000000e+00> : vector<128x128xf32>
    %37 = tpu.matmul %35, %36, %cst_29 {dimension_numbers = #tpu.dot_dimension_numbers<[1], [0], [0], [1], [0, 0, 1, 1], [], []>} : vector<128x128xbf16>, vector<128x128xbf16>, vector<128x128xf32> -> vector<128x128xf32>
    %c0_30 = arith.constant 0 : index
    %c0_31 = arith.constant 0 : index
    %38 = vector.load %arg12[%c0_30, %c0_31] : memref<1x128xf32, #tpu.memory_space<vmem>>, vector<1x128xf32>
    %39 = vector.broadcast %38 : vector<1x128xf32> to vector<128x128xf32>
    %40 = arith.addf %37, %39 : vector<128x128xf32>
    %41 = arith.negf %40 : vector<128x128xf32>
    %42 = math.exp %41 : vector<128x128xf32>
    %cst_32 = arith.constant 1.000000e+00 : f32
    %43 = vector.broadcast %cst_32 : f32 to vector<128x128xf32>
    %44 = arith.addf %43, %42 : vector<128x128xf32>
    %45 = arith.divf %43, %44 : vector<128x128xf32>
    %46 = arith.truncf %45 : vector<128x128xf32> to vector<128x128xbf16>
    %c0_33 = arith.constant 0 : index
    %c0_34 = arith.constant 0 : index
    %47 = vector.load %arg13[%c0_33, %c0_34] : memref<128x128xbf16, #tpu.memory_space<vmem>>, vector<128x128xbf16>
    tpu.vector_store %arg13[%c0_33, %c0_34], %46 {strides = array<i32>} : memref<128x128xbf16, #tpu.memory_space<vmem>>, vector<128x128xbf16>,
    return
  }
  func.func @transform_0(%arg0: i32) -> (i32, i32) {
    %c0_i32 = arith.constant 0 : i32
    %c0_i32_0 = arith.constant 0 : i32
    return %arg0, %c0_i32 : i32, i32
  }
  func.func @transform_1(%arg0: i32) -> (i32, i32) {
    %c0_i32 = arith.constant 0 : i32
    %c0_i32_0 = arith.constant 0 : i32
    %c0_i32_1 = arith.constant 0 : i32
    return %c0_i32, %c0_i32_0 : i32, i32
  }
  func.func @transform_2(%arg0: i32) -> (i32, i32) {
    %c0_i32 = arith.constant 0 : i32
    %c0_i32_0 = arith.constant 0 : i32
    %c0_i32_1 = arith.constant 0 : i32
    return %c0_i32, %c0_i32_0 : i32, i32
  }
  func.func @transform_3(%arg0: i32) -> (i32, i32) {
    %c0_i32 = arith.constant 0 : i32
    %c0_i32_0 = arith.constant 0 : i32
    %c0_i32_1 = arith.constant 0 : i32
    return %c0_i32, %c0_i32_0 : i32, i32
  }
  func.func @transform_4(%arg0: i32) -> (i32, i32) {
    %c0_i32 = arith.constant 0 : i32
    %c0_i32_0 = arith.constant 0 : i32
    %c0_i32_1 = arith.constant 0 : i32
    return %c0_i32, %c0_i32_0 : i32, i32
  }
  func.func @transform_5(%arg0: i32) -> (i32, i32) {
    %c0_i32 = arith.constant 0 : i32
    %c0_i32_0 = arith.constant 0 : i32
    %c0_i32_1 = arith.constant 0 : i32
    return %c0_i32, %c0_i32_0 : i32, i32
  }
  func.func @transform_6(%arg0: i32) -> (i32, i32) {
    %c0_i32 = arith.constant 0 : i32
    %c0_i32_0 = arith.constant 0 : i32
    %c0_i32_1 = arith.constant 0 : i32
    return %c0_i32, %c0_i32_0 : i32, i32
  }
  func.func @transform_7(%arg0: i32) -> (i32, i32) {
    %c0_i32 = arith.constant 0 : i32
    %c0_i32_0 = arith.constant 0 : i32
    %c0_i32_1 = arith.constant 0 : i32
    return %c0_i32, %c0_i32_0 : i32, i32
  }
  func.func @transform_8(%arg0: i32) -> (i32, i32) {
    %c0_i32 = arith.constant 0 : i32
    %c0_i32_0 = arith.constant 0 : i32
    %c0_i32_1 = arith.constant 0 : i32
    return %c0_i32, %c0_i32_0 : i32, i32
  }
  func.func @transform_9(%arg0: i32) -> (i32, i32) {
    %c0_i32 = arith.constant 0 : i32
    %c0_i32_0 = arith.constant 0 : i32
    %c0_i32_1 = arith.constant 0 : i32
    return %c0_i32, %c0_i32_0 : i32, i32
  }
  func.func @transform_10(%arg0: i32) -> (i32, i32) {
    %c0_i32 = arith.constant 0 : i32
    %c0_i32_0 = arith.constant 0 : i32
    %c0_i32_1 = arith.constant 0 : i32
    return %c0_i32, %c0_i32_0 : i32, i32
  }
  func.func @transform_11(%arg0: i32) -> (i32, i32) {
    %c0_i32 = arith.constant 0 : i32
    %c0_i32_0 = arith.constant 0 : i32
    %c0_i32_1 = arith.constant 0 : i32
    return %c0_i32, %c0_i32_0 : i32, i32
  }
  func.func @transform_12(%arg0: i32) -> (i32, i32) {
    %c0_i32 = arith.constant 0 : i32
    %c0_i32_0 = arith.constant 0 : i32
    return %arg0, %c0_i32 : i32, i32
  }
}

</mosaic_0001>

<llo_original>
// kernel: tpu_custom_call.1
$region0: #{tpu_custom_call.1}
  #allocation0 [shape = 'u32[]', space=smem, size = 0x4, offset = 0x4, fixed_abs, tag = 'smem constant byte address 0x4 - core index']
  #allocation1 [shape = 'u32[144,128]{1,0:T(1,128)}', space=vmem, size = 0x12000, scoped, tag = 'internal scratch']
  %s0 = inlined_call_operand.hbm [shape: bf16[128,128], index: 0, kind: input, shape index: {}]
  %s1 = inlined_call_operand.hbm [shape: bf16[128,128], index: 1, kind: input, shape index: {}]
  %s2 = inlined_call_operand.vmem [shape: f32[1,128], index: 2, kind: input, shape index: {}]
  %s3 = inlined_call_operand.hbm [shape: bf16[128,128], index: 3, kind: input, shape index: {}]
  %s4 = inlined_call_operand.vmem [shape: f32[1,128], index: 4, kind: input, shape index: {}]
  %s5 = inlined_call_operand.hbm [shape: bf16[128,128], index: 5, kind: input, shape index: {}]
  %s6 = inlined_call_operand.hbm [shape: bf16[128,128], index: 6, kind: input, shape index: {}]
  %s7 = inlined_call_operand.vmem [shape: f32[1,128], index: 7, kind: input, shape index: {}]
  %s8 = inlined_call_operand.hbm [shape: bf16[128,128], index: 8, kind: input, shape index: {}]
  %s9 = inlined_call_operand.vmem [shape: f32[1,128], index: 9, kind: input, shape index: {}]
  %s10 = inlined_call_operand.hbm [shape: bf16[128,128], index: 10, kind: input, shape index: {}]
  %s11 = inlined_call_operand.vmem [shape: f32[1,128], index: 11, kind: input, shape index: {}]
  %s12 = inlined_call_operand.hbm [shape: bf16[128,128], index: 12, kind: output, shape index: {}]
  %s13 = sld [smem:[#allocation0]]
  $region86: #{tpu_custom_call.1} parent=0
    _
  %s15 = ssub.s32 1, %s13
  %s16 = scalar_select 0, %s15, %s13
  $region1: #{tpu_custom_call.1} parent=0
    #allocation2 [shape = 'u8[32768]{0}', space=vmem, size = 0x8000, scoped, tag = 'input window, operand 0, single buffered']
    #allocation3 [shape = 's32[1]{0}', space=sflag, size = 0x4, scoped, tag = 'scoped memory for tpu_custom_call.1']
    #allocation4 [shape = 's32[1]{0}', space=sflag, size = 0x4, scoped, tag = 'scoped memory for tpu_custom_call.1']
    #allocation5 [shape = 'u8[32768]{0}', space=vmem, size = 0x8000, scoped, tag = 'input window, operand 1, single buffered']
    #allocation6 [shape = 's32[1]{0}', space=sflag, size = 0x4, scoped, tag = 'scoped memory for tpu_custom_call.1']
    #allocation7 [shape = 'u8[32768]{0}', space=vmem, size = 0x8000, scoped, tag = 'input window, operand 3, single buffered']
    #allocation8 [shape = 'u8[32768]{0}', space=vmem, size = 0x8000, scoped, tag = 'input window, operand 5, single buffered']
    #allocation9 [shape = 's32[1]{0}', space=sflag, size = 0x4, scoped, tag = 'scoped memory for tpu_custom_call.1']
    #allocation10 [shape = 'u8[32768]{0}', space=vmem, size = 0x8000, scoped, tag = 'input window, operand 6, single buffered']
    #allocation11 [shape = 'u8[32768]{0}', space=vmem, size = 0x8000, scoped, tag = 'input window, operand 8, single buffered']
    #allocation12 [shape = 's32[1]{0}', space=sflag, size = 0x4, scoped, tag = 'scoped memory for tpu_custom_call.1']
    #allocation13 [shape = 'u8[32768]{0}', space=vmem, size = 0x8000, scoped, tag = 'input window, operand 10, single buffered']
    #allocation14 [shape = 'u8[32768]{0}', space=vmem, size = 0x8000, scoped, tag = 'output window, operand 0, single buffered']
    %17 = vsyncpa [#allocation3], 0
    %18 = vsyncpa [#allocation6], 0
    %19 = vsyncpa [#allocation9], 0
    %20 = vsyncpa [#allocation12], 0
    %21 = vsyncpa [#allocation4], 0
    // Predicated region
    $region2: #{tpu_custom_call.1} parent=1 // pred_check
      _
    $region3: #{tpu_custom_call.1} parent=1 // pred_check_branch
      %23 = sbr.rel (0) target = $region5
    $region4: #{tpu_custom_call.1} parent=1 // pred_region
      %s25 = ssub.s32 1024, 1024
      %26 = vsyncadd [#allocation3], %s25
      %s27 = sshll.u32 [#allocation2], 4
      %s28 = int_to_ptr.vmem [resolvable:$true] %s27
      %33 = dma.hbm_to_vmem [thread:$0]  %s0, 1024, %s28, [#allocation3], 64, 64, 4
    $region5: #{tpu_custom_call.1} parent=1 // pred_fallthru
      _
    // Predicated region
    $region6: #{tpu_custom_call.1} parent=1 // pred_check
      _
    $region7: #{tpu_custom_call.1} parent=1 // pred_check_branch
      %35 = sbr.rel (0) target = $region9
    $region8: #{tpu_custom_call.1} parent=1 // pred_region
      %s37 = ssub.s32 1024, 1024
      %38 = vsyncadd [#allocation6], %s37
      %s39 = sshll.u32 [#allocation5], 4
      %s40 = int_to_ptr.vmem [resolvable:$true] %s39
      %45 = dma.hbm_to_vmem [thread:$0]  %s1, 1024, %s40, [#allocation6], 64, 64, 4
    $region9: #{tpu_custom_call.1} parent=1 // pred_fallthru
      _
    // Predicated region
    $region10: #{tpu_custom_call.1} parent=1 // pred_check
      _
    $region11: #{tpu_custom_call.1} parent=1 // pred_check_branch
      %47 = sbr.rel (0) target = $region13
    $region12: #{tpu_custom_call.1} parent=1 // pred_region
      _
    $region13: #{tpu_custom_call.1} parent=1 // pred_fallthru
      _
    // Predicated region
    $region14: #{tpu_custom_call.1} parent=1 // pred_check
      _
    $region15: #{tpu_custom_call.1} parent=1 // pred_check_branch
      %49 = sbr.rel (0) target = $region17
    $region16: #{tpu_custom_call.1} parent=1 // pred_region
      %s51 = ssub.s32 1024, 1024
      %52 = vsyncadd [#allocation6], %s51
      %s53 = sshll.u32 [#allocation7], 4
      %s54 = int_to_ptr.vmem [resolvable:$true] %s53
      %59 = dma.hbm_to_vmem [thread:$0]  %s3, 1024, %s54, [#allocation6], 64, 64, 4
    $region17: #{tpu_custom_call.1} parent=1 // pred_fallthru
      _
    // Predicated region
    $region18: #{tpu_custom_call.1} parent=1 // pred_check
      _
    $region19: #{tpu_custom_call.1} parent=1 // pred_check_branch
      %61 = sbr.rel (0) target = $region21
    $region20: #{tpu_custom_call.1} parent=1 // pred_region
      _
    $region21: #{tpu_custom_call.1} parent=1 // pred_fallthru
      _
    // Predicated region
    $region22: #{tpu_custom_call.1} parent=1 // pred_check
      _
    $region23: #{tpu_custom_call.1} parent=1 // pred_check_branch
      %63 = sbr.rel (0) target = $region25
    $region24: #{tpu_custom_call.1} parent=1 // pred_region
      %s65 = ssub.s32 1024, 1024
      %66 = vsyncadd [#allocation9], %s65
      %s67 = sshll.u32 [#allocation8], 4
      %s68 = int_to_ptr.vmem [resolvable:$true] %s67
      %73 = dma.hbm_to_vmem [thread:$0]  %s5, 1024, %s68, [#allocation9], 64, 64, 4
    $region25: #{tpu_custom_call.1} parent=1 // pred_fallthru
      _
    // Predicated region
    $region26: #{tpu_custom_call.1} parent=1 // pred_check
      _
    $region27: #{tpu_custom_call.1} parent=1 // pred_check_branch
      %75 = sbr.rel (0) target = $region29
    $region28: #{tpu_custom_call.1} parent=1 // pred_region
      %s77 = ssub.s32 1024, 1024
      %78 = vsyncadd [#allocation9], %s77
      %s79 = sshll.u32 [#allocation10], 4
      %s80 = int_to_ptr.vmem [resolvable:$true] %s79
      %85 = dma.hbm_to_vmem [thread:$0]  %s6, 1024, %s80, [#allocation9], 64, 64, 4
    $region29: #{tpu_custom_call.1} parent=1 // pred_fallthru
      _
    // Predicated region
    $region30: #{tpu_custom_call.1} parent=1 // pred_check
      _
    $region31: #{tpu_custom_call.1} parent=1 // pred_check_branch
      %87 = sbr.rel (0) target = $region33
    $region32: #{tpu_custom_call.1} parent=1 // pred_region
      _
    $region33: #{tpu_custom_call.1} parent=1 // pred_fallthru
      _
    // Predicated region
    $region34: #{tpu_custom_call.1} parent=1 // pred_check
      _
    $region35: #{tpu_custom_call.1} parent=1 // pred_check_branch
      %89 = sbr.rel (0) target = $region37
    $region36: #{tpu_custom_call.1} parent=1 // pred_region
      %s91 = ssub.s32 1024, 1024
      %92 = vsyncadd [#allocation12], %s91
      %s93 = sshll.u32 [#allocation11], 4
      %s94 = int_to_ptr.vmem [resolvable:$true] %s93
      %99 = dma.hbm_to_vmem [thread:$0]  %s8, 1024, %s94, [#allocation12], 64, 64, 4
    $region37: #{tpu_custom_call.1} parent=1 // pred_fallthru
      _
    // Predicated region
    $region38: #{tpu_custom_call.1} parent=1 // pred_check
      _
    $region39: #{tpu_custom_call.1} parent=1 // pred_check_branch
      %101 = sbr.rel (0) target = $region41
    $region40: #{tpu_custom_call.1} parent=1 // pred_region
      _
    $region41: #{tpu_custom_call.1} parent=1 // pred_fallthru
      _
    // Predicated region
    $region42: #{tpu_custom_call.1} parent=1 // pred_check
      _
    $region43: #{tpu_custom_call.1} parent=1 // pred_check_branch
      %103 = sbr.rel (0) target = $region45
    $region44: #{tpu_custom_call.1} parent=1 // pred_region
      %s105 = ssub.s32 1024, 1024
      %106 = vsyncadd [#allocation12], %s105
      %s107 = sshll.u32 [#allocation13], 4
      %s108 = int_to_ptr.vmem [resolvable:$true] %s107
      %113 = dma.hbm_to_vmem [thread:$0]  %s10, 1024, %s108, [#allocation12], 64, 64, 4
    $region45: #{tpu_custom_call.1} parent=1 // pred_fallthru
      _
    // Predicated region
    $region46: #{tpu_custom_call.1} parent=1 // pred_check
      _
    $region47: #{tpu_custom_call.1} parent=1 // pred_check_branch
      %115 = sbr.rel (0) target = $region49
    $region48: #{tpu_custom_call.1} parent=1 // pred_region
      _
    $region49: #{tpu_custom_call.1} parent=1 // pred_fallthru
      _
    // Predicated region
    $region50: #{tpu_custom_call.1} parent=1 // pred_check
      _
    $region51: #{tpu_custom_call.1} parent=1 // pred_check_branch
      %117 = sbr.rel (0) target = $region53
    $region52: #{tpu_custom_call.1} parent=1 // pred_region
      %118 = dma.done [#allocation3], 1024
    $region53: #{tpu_custom_call.1} parent=1 // pred_fallthru
      _
    // Predicated region
    $region54: #{tpu_custom_call.1} parent=1 // pred_check
      _
    $region55: #{tpu_custom_call.1} parent=1 // pred_check_branch
      %120 = sbr.rel (0) target = $region57
    $region56: #{tpu_custom_call.1} parent=1 // pred_region
      %121 = dma.done [#allocation6], 1024
    $region57: #{tpu_custom_call.1} parent=1 // pred_fallthru
      _
    // Predicated region
    $region58: #{tpu_custom_call.1} parent=1 // pred_check
      _
    $region59: #{tpu_custom_call.1} parent=1 // pred_check_branch
      %123 = sbr.rel (0) target = $region61
    $region60: #{tpu_custom_call.1} parent=1 // pred_region
      %124 = dma.done [#allocation6], 1024
    $region61: #{tpu_custom_call.1} parent=1 // pred_fallthru
      _
    // Predicated region
    $region62: #{tpu_custom_call.1} parent=1 // pred_check
      _
    $region63: #{tpu_custom_call.1} parent=1 // pred_check_branch
      %126 = sbr.rel (0) target = $region65
    $region64: #{tpu_custom_call.1} parent=1 // pred_region
      %127 = dma.done [#allocation9], 1024
    $region65: #{tpu_custom_call.1} parent=1 // pred_fallthru
      _
    // Predicated region
    $region66: #{tpu_custom_call.1} parent=1 // pred_check
      _
    $region67: #{tpu_custom_call.1} parent=1 // pred_check_branch
      %129 = sbr.rel (0) target = $region69
    $region68: #{tpu_custom_call.1} parent=1 // pred_region
      %130 = dma.done [#allocation9], 1024
    $region69: #{tpu_custom_call.1} parent=1 // pred_fallthru
      _
    // Predicated region
    $region70: #{tpu_custom_call.1} parent=1 // pred_check
      _
    $region71: #{tpu_custom_call.1} parent=1 // pred_check_branch
      %132 = sbr.rel (0) target = $region73
    $region72: #{tpu_custom_call.1} parent=1 // pred_region
      %133 = dma.done [#allocation12], 1024
    $region73: #{tpu_custom_call.1} parent=1 // pred_fallthru
      _
    // Predicated region
    $region74: #{tpu_custom_call.1} parent=1 // pred_check
      _
    $region75: #{tpu_custom_call.1} parent=1 // pred_check_branch
      %135 = sbr.rel (0) target = $region77
    $region76: #{tpu_custom_call.1} parent=1 // pred_region
      %136 = dma.done [#allocation12], 1024
    $region77: #{tpu_custom_call.1} parent=1 // pred_fallthru
      _
    %v138 = vld [vmem:[#allocation2] sm:$0xf]
    %v139 = vld [vmem:[#allocation2 + $0x4] sm:$0xf]
    %v140 = vld [vmem:[#allocation2 + $0x8] sm:$0xf]
    %v141 = vld [vmem:[#allocation2 + $0xc] sm:$0xf]
    %v142 = vld [vmem:[#allocation2 + $0x10] sm:$0xf]
    %v143 = vld [vmem:[#allocation2 + $0x14] sm:$0xf]
    %v144 = vld [vmem:[#allocation2 + $0x18] sm:$0xf]
    %v145 = vld [vmem:[#allocation2 + $0x1c] sm:$0xf]
    %v146 = vld [vmem:[#allocation2 + $0x20] sm:$0xf]
    %v147 = vld [vmem:[#allocation2 + $0x24] sm:$0xf]
    %v148 = vld [vmem:[#allocation2 + $0x28] sm:$0xf]
    %v149 = vld [vmem:[#allocation2 + $0x2c] sm:$0xf]
    %v150 = vld [vmem:[#allocation2 + $0x30] sm:$0xf]
    %v151 = vld [vmem:[#allocation2 + $0x34] sm:$0xf]
    %v152 = vld [vmem:[#allocation2 + $0x38] sm:$0xf]
    %v153 = vld [vmem:[#allocation2 + $0x3c] sm:$0xf]
    %v154 = vld [vmem:[#allocation5] sm:$0xf]
    %v155 = vld [vmem:[#allocation5 + $0x4] sm:$0xf]
    %v156 = vld [vmem:[#allocation5 + $0x8] sm:$0xf]
    %v157 = vld [vmem:[#allocation5 + $0xc] sm:$0xf]
    %v158 = vld [vmem:[#allocation5 + $0x10] sm:$0xf]
    %v159 = vld [vmem:[#allocation5 + $0x14] sm:$0xf]
    %v160 = vld [vmem:[#allocation5 + $0x18] sm:$0xf]
    %v161 = vld [vmem:[#allocation5 + $0x1c] sm:$0xf]
    %v162 = vld [vmem:[#allocation5 + $0x20] sm:$0xf]
    %v163 = vld [vmem:[#allocation5 + $0x24] sm:$0xf]
    %v164 = vld [vmem:[#allocation5 + $0x28] sm:$0xf]
    %v165 = vld [vmem:[#allocation5 + $0x2c] sm:$0xf]
    %v166 = vld [vmem:[#allocation5 + $0x30] sm:$0xf]
    %v167 = vld [vmem:[#allocation5 + $0x34] sm:$0xf]
    %v168 = vld [vmem:[#allocation5 + $0x38] sm:$0xf]
    %v169 = vld [vmem:[#allocation5 + $0x3c] sm:$0xf]
    %v170 = vld [vmem:[%s2] sm:$0x1]
    %v172 = vlaneseq
    %v173 = vshrl.u32 %v172, 7
    %v174 = vsub.s32 0, %v173
    %v175 = vrot.slane %v170, %v174
    %v193 = vunpack.c.l.b16 %v138
    %v194 = vunpack.c.l.b16 %v139
    %v195 = vunpack.c.l.b16 %v140
    %v196 = vunpack.c.l.b16 %v141
    %v197 = vunpack.c.l.b16 %v142
    %v198 = vunpack.c.l.b16 %v143
    %v199 = vunpack.c.l.b16 %v144
    %v200 = vunpack.c.l.b16 %v145
    %v201 = vunpack.c.l.b16 %v146
    %v202 = vunpack.c.l.b16 %v147
    %v203 = vunpack.c.l.b16 %v148
    %v204 = vunpack.c.l.b16 %v149
    %v205 = vunpack.c.l.b16 %v150
    %v206 = vunpack.c.l.b16 %v151
    %v207 = vunpack.c.l.b16 %v152
    %v208 = vunpack.c.l.b16 %v153
    %v209 = vpack.c.b16 %v194, %v193
    %v210 = vpack.c.b16 %v196, %v195
    %v211 = vpack.c.b16 %v198, %v197
    %v212 = vpack.c.b16 %v200, %v199
    %v213 = vpack.c.b16 %v202, %v201
    %v214 = vpack.c.b16 %v204, %v203
    %v215 = vpack.c.b16 %v206, %v205
    %v216 = vpack.c.b16 %v208, %v207
    %v241 = vunpack.c.l.b16 %v154
    %v242 = vunpack.c.l.b16 %v155
    %v243 = vunpack.c.l.b16 %v156
    %v244 = vunpack.c.l.b16 %v157
    %v245 = vunpack.c.l.b16 %v158
    %v246 = vunpack.c.l.b16 %v159
    %v247 = vunpack.c.l.b16 %v160
    %v248 = vunpack.c.l.b16 %v161
    %v249 = vunpack.c.l.b16 %v162
    %v250 = vunpack.c.l.b16 %v163
    %v251 = vunpack.c.l.b16 %v164
    %v252 = vunpack.c.l.b16 %v165
    %v253 = vunpack.c.l.b16 %v166
    %v254 = vunpack.c.l.b16 %v167
    %v255 = vunpack.c.l.b16 %v168
    %v256 = vunpack.c.l.b16 %v169
    %v257 = vpack.c.b16 %v242, %v241
    %v258 = vpack.c.b16 %v244, %v243
    %v259 = vpack.c.b16 %v246, %v245
    %v260 = vpack.c.b16 %v248, %v247
    %v261 = vpack.c.b16 %v250, %v249
    %v262 = vpack.c.b16 %v252, %v251
    %v263 = vpack.c.b16 %v254, %v253
    %v264 = vpack.c.b16 %v256, %v255
    %273 = vmatprep.subr.bf16.mxu0 0
    %274 = vmatpush1.bf16.msra.mxu0 %v257
    %275 = vmatprep.subr.bf16.mxu0 0
    %276 = vmatpush1.bf16.msra.mxu0 %v258
    %277 = vmatprep.subr.bf16.mxu0 0
    %278 = vmatpush1.bf16.msra.mxu0 %v259
    %279 = vmatprep.subr.bf16.mxu0 0
    %280 = vmatpush1.bf16.msra.mxu0 %v260
    %281 = vmatprep.subr.bf16.mxu0 0
    %282 = vmatpush1.bf16.msra.mxu0 %v261
    %283 = vmatprep.subr.bf16.mxu0 0
    %284 = vmatpush1.bf16.msra.mxu0 %v262
    %285 = vmatprep.subr.bf16.mxu0 0
    %286 = vmatpush1.bf16.msra.mxu0 %v263
    %287 = vmatprep.subr.bf16.mxu0 0
    %288 = vmatpush1.bf16.msra.mxu0 %v264
    %289 = vmatprep.subr.bf16.mxu0 0
    %290 = vmatpush1.bf16.msra.mxu0 0
    %291 = vmatprep.subr.bf16.mxu0 0
    %292 = vmatpush1.bf16.msra.mxu0 0
    %293 = vmatprep.subr.bf16.mxu0 0
    %294 = vmatpush1.bf16.msra.mxu0 0
    %295 = vmatprep.subr.bf16.mxu0 0
    %296 = vmatpush1.bf16.msra.mxu0 0
    %297 = vmatprep.subr.bf16.mxu0 0
    %298 = vmatpush1.bf16.msra.mxu0 0
    %299 = vmatprep.subr.bf16.mxu0 0
    %300 = vmatpush1.bf16.msra.mxu0 0
    %301 = vmatprep.subr.bf16.mxu0 0
    %302 = vmatpush1.bf16.msra.mxu0 0
    %303 = vmatprep.subr.bf16.mxu0 0
    %304 = vmatpush1.bf16.msra.mxu0 0
    %305 = vmatprep.mubr.bf16.mxu0 0
    %306 = vmatmul.mubr.bf16.gmra.mrb[0].mxu0 %v209
    %v307 = vpop.f32.mrb[0].mxu0
    %v308 = vadd.f32 %v175, %v307
    %v309 = vpop.f32.mrb[0].mxu0
    %v310 = vpop.f32.mrb[0].mxu0
    %v311 = vadd.f32 %v175, %v310
    %v312 = vpop.f32.mrb[0].mxu0
    %313 = vmatprep.mubr.bf16.mxu0 0
    %314 = vmatmul.mubr.bf16.gmra.mrb[0].mxu0 %v210
    %v315 = vpop.f32.mrb[0].mxu0
    %v316 = vadd.f32 %v175, %v315
    %v317 = vpop.f32.mrb[0].mxu0
    %v318 = vpop.f32.mrb[0].mxu0
    %v319 = vadd.f32 %v175, %v318
    %v320 = vpop.f32.mrb[0].mxu0
    %321 = vmatprep.mubr.bf16.mxu0 0
    %322 = vmatmul.mubr.bf16.gmra.mrb[0].mxu0 %v211
    %v323 = vpop.f32.mrb[0].mxu0
    %v324 = vadd.f32 %v175, %v323
    %v325 = vpop.f32.mrb[0].mxu0
    %v326 = vpop.f32.mrb[0].mxu0
    %v327 = vadd.f32 %v175, %v326
    %v328 = vpop.f32.mrb[0].mxu0
    %329 = vmatprep.mubr.bf16.mxu0 0
    %330 = vmatmul.mubr.bf16.gmra.mrb[0].mxu0 %v212
    %v331 = vpop.f32.mrb[0].mxu0
    %v332 = vadd.f32 %v175, %v331
    %v333 = vpop.f32.mrb[0].mxu0
    %v334 = vpop.f32.mrb[0].mxu0
    %v335 = vadd.f32 %v175, %v334
    %v336 = vpop.f32.mrb[0].mxu0
    %337 = vmatprep.mubr.bf16.mxu0 0
    %338 = vmatmul.mubr.bf16.gmra.mrb[0].mxu0 %v213
    %v339 = vpop.f32.mrb[0].mxu0
    %v340 = vadd.f32 %v175, %v339
    %v341 = vpop.f32.mrb[0].mxu0
    %v342 = vpop.f32.mrb[0].mxu0
    %v343 = vadd.f32 %v175, %v342
    %v344 = vpop.f32.mrb[0].mxu0
    %345 = vmatprep.mubr.bf16.mxu0 0
    %346 = vmatmul.mubr.bf16.gmra.mrb[0].mxu0 %v214
    %v347 = vpop.f32.mrb[0].mxu0
    %v348 = vadd.f32 %v175, %v347
    %v349 = vpop.f32.mrb[0].mxu0
    %v350 = vpop.f32.mrb[0].mxu0
    %v351 = vadd.f32 %v175, %v350
    %v352 = vpop.f32.mrb[0].mxu0
    %353 = vmatprep.mubr.bf16.mxu0 0
    %354 = vmatmul.mubr.bf16.gmra.mrb[0].mxu0 %v215
    %v355 = vpop.f32.mrb[0].mxu0
    %v356 = vadd.f32 %v175, %v355
    %v357 = vpop.f32.mrb[0].mxu0
    %v358 = vpop.f32.mrb[0].mxu0
    %v359 = vadd.f32 %v175, %v358
    %v360 = vpop.f32.mrb[0].mxu0
    %361 = vmatprep.mubr.bf16.mxu0 0
    %362 = vmatmul.mubr.bf16.gmra.mrb[0].mxu0 %v216
    %v363 = vpop.f32.mrb[0].mxu0
    %v364 = vadd.f32 %v175, %v363
    %v365 = vpop.f32.mrb[0].mxu0
    %v366 = vpop.f32.mrb[0].mxu0
    %v367 = vadd.f32 %v175, %v366
    %v368 = vpop.f32.mrb[0].mxu0
    %369 = vdwg.mxu0
    %v370 = vmax.f32 %v308, 0.0
    %v371 = vmax.f32 %v311, 0.0
    %v372 = vmax.f32 %v316, 0.0
    %v373 = vmax.f32 %v319, 0.0
    %v374 = vmax.f32 %v324, 0.0
    %v375 = vmax.f32 %v327, 0.0
    %v376 = vmax.f32 %v332, 0.0
    %v377 = vmax.f32 %v335, 0.0
    %v378 = vmax.f32 %v340, 0.0
    %v379 = vmax.f32 %v343, 0.0
    %v380 = vmax.f32 %v348, 0.0
    %v381 = vmax.f32 %v351, 0.0
    %v382 = vmax.f32 %v356, 0.0
    %v383 = vmax.f32 %v359, 0.0
    %v384 = vmax.f32 %v364, 0.0
    %v385 = vmax.f32 %v367, 0.0
    %v386 = vpack.c.bf16 %v371, %v370
    %v387 = vpack.c.bf16 %v373, %v372
    %v388 = vpack.c.bf16 %v375, %v374
    %v389 = vpack.c.bf16 %v377, %v376
    %v390 = vpack.c.bf16 %v379, %v378
    %v391 = vpack.c.bf16 %v381, %v380
    %v392 = vpack.c.bf16 %v383, %v382
    %v393 = vpack.c.bf16 %v385, %v384
    %v394 = vld [vmem:[#allocation7] sm:$0xf]
    %v395 = vld [vmem:[#allocation7 + $0x4] sm:$0xf]
    %v396 = vld [vmem:[#allocation7 + $0x8] sm:$0xf]
    %v397 = vld [vmem:[#allocation7 + $0xc] sm:$0xf]
    %v398 = vld [vmem:[#allocation7 + $0x10] sm:$0xf]
    %v399 = vld [vmem:[#allocation7 + $0x14] sm:$0xf]
    %v400 = vld [vmem:[#allocation7 + $0x18] sm:$0xf]
    %v401 = vld [vmem:[#allocation7 + $0x1c] sm:$0xf]
    %v402 = vld [vmem:[#allocation7 + $0x20] sm:$0xf]
    %v403 = vld [vmem:[#allocation7 + $0x24] sm:$0xf]
    %v404 = vld [vmem:[#allocation7 + $0x28] sm:$0xf]
    %v405 = vld [vmem:[#allocation7 + $0x2c] sm:$0xf]
    %v406 = vld [vmem:[#allocation7 + $0x30] sm:$0xf]
    %v407 = vld [vmem:[#allocation7 + $0x34] sm:$0xf]
    %v408 = vld [vmem:[#allocation7 + $0x38] sm:$0xf]
    %v409 = vld [vmem:[#allocation7 + $0x3c] sm:$0xf]
    %v410 = vld [vmem:[%s4] sm:$0x1]
    %v412 = vlaneseq
    %v413 = vshrl.u32 %v412, 7
    %v414 = vsub.s32 0, %v413
    %v415 = vrot.slane %v410, %v414
    %v433 = vunpack.c.l.b16 %v394
    %v434 = vunpack.c.l.b16 %v395
    %v435 = vunpack.c.l.b16 %v396
    %v436 = vunpack.c.l.b16 %v397
    %v437 = vunpack.c.l.b16 %v398
    %v438 = vunpack.c.l.b16 %v399
    %v439 = vunpack.c.l.b16 %v400
    %v440 = vunpack.c.l.b16 %v401
    %v441 = vunpack.c.l.b16 %v402
    %v442 = vunpack.c.l.b16 %v403
    %v443 = vunpack.c.l.b16 %v404
    %v444 = vunpack.c.l.b16 %v405
    %v445 = vunpack.c.l.b16 %v406
    %v446 = vunpack.c.l.b16 %v407
    %v447 = vunpack.c.l.b16 %v408
    %v448 = vunpack.c.l.b16 %v409
    %v449 = vpack.c.b16 %v434, %v433
    %v450 = vpack.c.b16 %v436, %v435
    %v451 = vpack.c.b16 %v438, %v437
    %v452 = vpack.c.b16 %v440, %v439
    %v453 = vpack.c.b16 %v442, %v441
    %v454 = vpack.c.b16 %v444, %v443
    %v455 = vpack.c.b16 %v446, %v445
    %v456 = vpack.c.b16 %v448, %v447
    %465 = vmatprep.subr.bf16.mxu0 0
    %466 = vmatpush1.bf16.msra.mxu0 %v449
    %467 = vmatprep.subr.bf16.mxu0 0
    %468 = vmatpush1.bf16.msra.mxu0 %v450
    %469 = vmatprep.subr.bf16.mxu0 0
    %470 = vmatpush1.bf16.msra.mxu0 %v451
    %471 = vmatprep.subr.bf16.mxu0 0
    %472 = vmatpush1.bf16.msra.mxu0 %v452
    %473 = vmatprep.subr.bf16.mxu0 0
    %474 = vmatpush1.bf16.msra.mxu0 %v453
    %475 = vmatprep.subr.bf16.mxu0 0
    %476 = vmatpush1.bf16.msra.mxu0 %v454
    %477 = vmatprep.subr.bf16.mxu0 0
    %478 = vmatpush1.bf16.msra.mxu0 %v455
    %479 = vmatprep.subr.bf16.mxu0 0
    %480 = vmatpush1.bf16.msra.mxu0 %v456
    %481 = vmatprep.subr.bf16.mxu0 0
    %482 = vmatpush1.bf16.msra.mxu0 0
    %483 = vmatprep.subr.bf16.mxu0 0
    %484 = vmatpush1.bf16.msra.mxu0 0
    %485 = vmatprep.subr.bf16.mxu0 0
    %486 = vmatpush1.bf16.msra.mxu0 0
    %487 = vmatprep.subr.bf16.mxu0 0
    %488 = vmatpush1.bf16.msra.mxu0 0
    %489 = vmatprep.subr.bf16.mxu0 0
    %490 = vmatpush1.bf16.msra.mxu0 0
    %491 = vmatprep.subr.bf16.mxu0 0
    %492 = vmatpush1.bf16.msra.mxu0 0
    %493 = vmatprep.subr.bf16.mxu0 0
    %494 = vmatpush1.bf16.msra.mxu0 0
    %495 = vmatprep.subr.bf16.mxu0 0
    %496 = vmatpush1.bf16.msra.mxu0 0
    %497 = vmatprep.mubr.bf16.mxu0 0
    %498 = vmatmul.mubr.bf16.gmra.mrb[0].mxu0 %v386
    %v499 = vpop.f32.mrb[0].mxu0
    %v500 = vadd.f32 %v415, %v499
    %v501 = vpop.f32.mrb[0].mxu0
    %v502 = vpop.f32.mrb[0].mxu0
    %v503 = vadd.f32 %v415, %v502
    %v504 = vpop.f32.mrb[0].mxu0
    %505 = vmatprep.mubr.bf16.mxu0 0
    %506 = vmatmul.mubr.bf16.gmra.mrb[0].mxu0 %v387
    %v507 = vpop.f32.mrb[0].mxu0
    %v508 = vadd.f32 %v415, %v507
    %v509 = vpop.f32.mrb[0].mxu0
    %v510 = vpop.f32.mrb[0].mxu0
    %v511 = vadd.f32 %v415, %v510
    %v512 = vpop.f32.mrb[0].mxu0
    %513 = vmatprep.mubr.bf16.mxu0 0
    %514 = vmatmul.mubr.bf16.gmra.mrb[0].mxu0 %v388
    %v515 = vpop.f32.mrb[0].mxu0
    %v516 = vadd.f32 %v415, %v515
    %v517 = vpop.f32.mrb[0].mxu0
    %v518 = vpop.f32.mrb[0].mxu0
    %v519 = vadd.f32 %v415, %v518
    %v520 = vpop.f32.mrb[0].mxu0
    %521 = vmatprep.mubr.bf16.mxu0 0
    %522 = vmatmul.mubr.bf16.gmra.mrb[0].mxu0 %v389
    %v523 = vpop.f32.mrb[0].mxu0
    %v524 = vadd.f32 %v415, %v523
    %v525 = vpop.f32.mrb[0].mxu0
    %v526 = vpop.f32.mrb[0].mxu0
    %v527 = vadd.f32 %v415, %v526
    %v528 = vpop.f32.mrb[0].mxu0
    %529 = vmatprep.mubr.bf16.mxu0 0
    %530 = vmatmul.mubr.bf16.gmra.mrb[0].mxu0 %v390
    %v531 = vpop.f32.mrb[0].mxu0
    %v532 = vadd.f32 %v415, %v531
    %v533 = vpop.f32.mrb[0].mxu0
    %v534 = vpop.f32.mrb[0].mxu0
    %v535 = vadd.f32 %v415, %v534
    %v536 = vpop.f32.mrb[0].mxu0
    %537 = vmatprep.mubr.bf16.mxu0 0
    %538 = vmatmul.mubr.bf16.gmra.mrb[0].mxu0 %v391
    %v539 = vpop.f32.mrb[0].mxu0
    %v540 = vadd.f32 %v415, %v539
    %v541 = vpop.f32.mrb[0].mxu0
    %v542 = vpop.f32.mrb[0].mxu0
    %v543 = vadd.f32 %v415, %v542
    %v544 = vpop.f32.mrb[0].mxu0
    %545 = vmatprep.mubr.bf16.mxu0 0
    %546 = vmatmul.mubr.bf16.gmra.mrb[0].mxu0 %v392
    %v547 = vpop.f32.mrb[0].mxu0
    %v548 = vadd.f32 %v415, %v547
    %v549 = vpop.f32.mrb[0].mxu0
    %v550 = vpop.f32.mrb[0].mxu0
    %v551 = vadd.f32 %v415, %v550
    %v552 = vpop.f32.mrb[0].mxu0
    %553 = vmatprep.mubr.bf16.mxu0 0
    %554 = vmatmul.mubr.bf16.gmra.mrb[0].mxu0 %v393
    %v555 = vpop.f32.mrb[0].mxu0
    %v556 = vadd.f32 %v415, %v555
    %v557 = vpop.f32.mrb[0].mxu0
    %v558 = vpop.f32.mrb[0].mxu0
    %v559 = vadd.f32 %v415, %v558
    %v560 = vpop.f32.mrb[0].mxu0
    %561 = vdwg.mxu0
    %v562 = vmax.f32 %v500, 0.0
    %v563 = vmax.f32 %v503, 0.0
    %v564 = vmax.f32 %v508, 0.0
    %v565 = vmax.f32 %v511, 0.0
    %v566 = vmax.f32 %v516, 0.0
    %v567 = vmax.f32 %v519, 0.0
    %v568 = vmax.f32 %v524, 0.0
    %v569 = vmax.f32 %v527, 0.0
    %v570 = vmax.f32 %v532, 0.0
    %v571 = vmax.f32 %v535, 0.0
    %v572 = vmax.f32 %v540, 0.0
    %v573 = vmax.f32 %v543, 0.0
    %v574 = vmax.f32 %v548, 0.0
    %v575 = vmax.f32 %v551, 0.0
    %v576 = vmax.f32 %v556, 0.0
    %v577 = vmax.f32 %v559, 0.0
    %v578 = vpack.c.bf16 %v563, %v562
    %v579 = vpack.c.bf16 %v565, %v564
    %v580 = vpack.c.bf16 %v567, %v566
    %v581 = vpack.c.bf16 %v569, %v568
    %v582 = vpack.c.bf16 %v571, %v570
    %v583 = vpack.c.bf16 %v573, %v572
    %v584 = vpack.c.bf16 %v575, %v574
    %v585 = vpack.c.bf16 %v577, %v576
    %v586 = vld [vmem:[#allocation8] sm:$0xf]
    %v587 = vld [vmem:[#allocation8 + $0x4] sm:$0xf]
    %v588 = vld [vmem:[#allocation8 + $0x8] sm:$0xf]
    %v589 = vld [vmem:[#allocation8 + $0xc] sm:$0xf]
    %v590 = vld [vmem:[#allocation8 + $0x10] sm:$0xf]
    %v591 = vld [vmem:[#allocation8 + $0x14] sm:$0xf]
    %v592 = vld [vmem:[#allocation8 + $0x18] sm:$0xf]
    %v593 = vld [vmem:[#allocation8 + $0x1c] sm:$0xf]
    %v594 = vld [vmem:[#allocation8 + $0x20] sm:$0xf]
    %v595 = vld [vmem:[#allocation8 + $0x24] sm:$0xf]
    %v596 = vld [vmem:[#allocation8 + $0x28] sm:$0xf]
    %v597 = vld [vmem:[#allocation8 + $0x2c] sm:$0xf]
    %v598 = vld [vmem:[#allocation8 + $0x30] sm:$0xf]
    %v599 = vld [vmem:[#allocation8 + $0x34] sm:$0xf]
    %v600 = vld [vmem:[#allocation8 + $0x38] sm:$0xf]
    %v601 = vld [vmem:[#allocation8 + $0x3c] sm:$0xf]
    %v602 = vld [vmem:[#allocation10] sm:$0xf]
    %v603 = vld [vmem:[#allocation10 + $0x4] sm:$0xf]
    %v604 = vld [vmem:[#allocation10 + $0x8] sm:$0xf]
    %v605 = vld [vmem:[#allocation10 + $0xc] sm:$0xf]
    %v606 = vld [vmem:[#allocation10 + $0x10] sm:$0xf]
    %v607 = vld [vmem:[#allocation10 + $0x14] sm:$0xf]
    %v608 = vld [vmem:[#allocation10 + $0x18] sm:$0xf]
    %v609 = vld [vmem:[#allocation10 + $0x1c] sm:$0xf]
    %v610 = vld [vmem:[#allocation10 + $0x20] sm:$0xf]
    %v611 = vld [vmem:[#allocation10 + $0x24] sm:$0xf]
    %v612 = vld [vmem:[#allocation10 + $0x28] sm:$0xf]
    %v613 = vld [vmem:[#allocation10 + $0x2c] sm:$0xf]
    %v614 = vld [vmem:[#allocation10 + $0x30] sm:$0xf]
    %v615 = vld [vmem:[#allocation10 + $0x34] sm:$0xf]
    %v616 = vld [vmem:[#allocation10 + $0x38] sm:$0xf]
    %v617 = vld [vmem:[#allocation10 + $0x3c] sm:$0xf]
    %v634 = vunpack.c.l.b16 %v602
    %v635 = vunpack.c.l.b16 %v603
    %v636 = vunpack.c.l.b16 %v604
    %v637 = vunpack.c.l.b16 %v605
    %v638 = vunpack.c.l.b16 %v606
    %v639 = vunpack.c.l.b16 %v607
    %v640 = vunpack.c.l.b16 %v608
    %v641 = vunpack.c.l.b16 %v609
    %v642 = vunpack.c.l.b16 %v610
    %v643 = vunpack.c.l.b16 %v611
    %v644 = vunpack.c.l.b16 %v612
    %v645 = vunpack.c.l.b16 %v613
    %v646 = vunpack.c.l.b16 %v614
    %v647 = vunpack.c.l.b16 %v615
    %v648 = vunpack.c.l.b16 %v616
    %v649 = vunpack.c.l.b16 %v617
    %v650 = vpack.c.b16 %v635, %v634
    %v651 = vpack.c.b16 %v637, %v636
    %v652 = vpack.c.b16 %v639, %v638
    %v653 = vpack.c.b16 %v641, %v640
    %v654 = vpack.c.b16 %v643, %v642
    %v655 = vpack.c.b16 %v645, %v644
    %v656 = vpack.c.b16 %v647, %v646
    %v657 = vpack.c.b16 %v649, %v648
    %666 = vmatprep.subr.bf16.mxu0 0
    %667 = vmatpush1.bf16.msra.mxu0 %v650
    %668 = vmatprep.subr.bf16.mxu0 0
    %669 = vmatpush1.bf16.msra.mxu0 %v651
    %670 = vmatprep.subr.bf16.mxu0 0
    %671 = vmatpush1.bf16.msra.mxu0 %v652
    %672 = vmatprep.subr.bf16.mxu0 0
    %673 = vmatpush1.bf16.msra.mxu0 %v653
    %674 = vmatprep.subr.bf16.mxu0 0
    %675 = vmatpush1.bf16.msra.mxu0 %v654
    %676 = vmatprep.subr.bf16.mxu0 0
    %677 = vmatpush1.bf16.msra.mxu0 %v655
    %678 = vmatprep.subr.bf16.mxu0 0
    %679 = vmatpush1.bf16.msra.mxu0 %v656
    %680 = vmatprep.subr.bf16.mxu0 0
    %681 = vmatpush1.bf16.msra.mxu0 %v657
    %682 = vmatprep.subr.bf16.mxu0 0
    %683 = vmatpush1.bf16.msra.mxu0 0
    %684 = vmatprep.subr.bf16.mxu0 0
    %685 = vmatpush1.bf16.msra.mxu0 0
    %686 = vmatprep.subr.bf16.mxu0 0
    %687 = vmatpush1.bf16.msra.mxu0 0
    %688 = vmatprep.subr.bf16.mxu0 0
    %689 = vmatpush1.bf16.msra.mxu0 0
    %690 = vmatprep.subr.bf16.mxu0 0
    %691 = vmatpush1.bf16.msra.mxu0 0
    %692 = vmatprep.subr.bf16.mxu0 0
    %693 = vmatpush1.bf16.msra.mxu0 0
    %694 = vmatprep.subr.bf16.mxu0 0
    %695 = vmatpush1.bf16.msra.mxu0 0
    %696 = vmatprep.subr.bf16.mxu0 0
    %697 = vmatpush1.bf16.msra.mxu0 0
    %698 = vmatprep.mubr.bf16.mxu0 0
    %699 = vmatmul.mubr.bf16.gmra.mrb[0].mxu0 %v209
    %v700 = vpop.f32.mrb[0].mxu0
    %v701 = vadd.f32 0.0, %v700
    %v702 = vpop.f32.mrb[0].mxu0
    %v703 = vpop.f32.mrb[0].mxu0
    %v704 = vadd.f32 0.0, %v703
    %v705 = vpop.f32.mrb[0].mxu0
    %706 = vmatprep.mubr.bf16.mxu0 0
    %707 = vmatmul.mubr.bf16.gmra.mrb[0].mxu0 %v210
    %v708 = vpop.f32.mrb[0].mxu0
    %v709 = vadd.f32 0.0, %v708
    %v710 = vpop.f32.mrb[0].mxu0
    %v711 = vpop.f32.mrb[0].mxu0
    %v712 = vadd.f32 0.0, %v711
    %v713 = vpop.f32.mrb[0].mxu0
    %714 = vmatprep.mubr.bf16.mxu0 0
    %715 = vmatmul.mubr.bf16.gmra.mrb[0].mxu0 %v211
    %v716 = vpop.f32.mrb[0].mxu0
    %v717 = vadd.f32 0.0, %v716
    %v718 = vpop.f32.mrb[0].mxu0
    %v719 = vpop.f32.mrb[0].mxu0
    %v720 = vadd.f32 0.0, %v719
    %v721 = vpop.f32.mrb[0].mxu0
    %722 = vmatprep.mubr.bf16.mxu0 0
    %723 = vmatmul.mubr.bf16.gmra.mrb[0].mxu0 %v212
    %v724 = vpop.f32.mrb[0].mxu0
    %v725 = vadd.f32 0.0, %v724
    %v726 = vpop.f32.mrb[0].mxu0
    %v727 = vpop.f32.mrb[0].mxu0
    %v728 = vadd.f32 0.0, %v727
    %v729 = vpop.f32.mrb[0].mxu0
    %730 = vmatprep.mubr.bf16.mxu0 0
    %731 = vmatmul.mubr.bf16.gmra.mrb[0].mxu0 %v213
    %v732 = vpop.f32.mrb[0].mxu0
    %v733 = vadd.f32 0.0, %v732
    %v734 = vpop.f32.mrb[0].mxu0
    %v735 = vpop.f32.mrb[0].mxu0
    %v736 = vadd.f32 0.0, %v735
    %v737 = vpop.f32.mrb[0].mxu0
    %738 = vmatprep.mubr.bf16.mxu0 0
    %739 = vmatmul.mubr.bf16.gmra.mrb[0].mxu0 %v214
    %v740 = vpop.f32.mrb[0].mxu0
    %v741 = vadd.f32 0.0, %v740
    %v742 = vpop.f32.mrb[0].mxu0
    %v743 = vpop.f32.mrb[0].mxu0
    %v744 = vadd.f32 0.0, %v743
    %v745 = vpop.f32.mrb[0].mxu0
    %746 = vmatprep.mubr.bf16.mxu0 0
    %747 = vmatmul.mubr.bf16.gmra.mrb[0].mxu0 %v215
    %v748 = vpop.f32.mrb[0].mxu0
    %v749 = vadd.f32 0.0, %v748
    %v750 = vpop.f32.mrb[0].mxu0
    %v751 = vpop.f32.mrb[0].mxu0
    %v752 = vadd.f32 0.0, %v751
    %v753 = vpop.f32.mrb[0].mxu0
    %754 = vmatprep.mubr.bf16.mxu0 0
    %755 = vmatmul.mubr.bf16.gmra.mrb[0].mxu0 %v216
    %v756 = vpop.f32.mrb[0].mxu0
    %v757 = vadd.f32 0.0, %v756
    %v758 = vpop.f32.mrb[0].mxu0
    %v759 = vpop.f32.mrb[0].mxu0
    %v760 = vadd.f32 0.0, %v759
    %v761 = vpop.f32.mrb[0].mxu0
    %762 = vdwg.mxu0
    %v779 = vunpack.c.l.b16 %v586
    %v780 = vunpack.c.l.b16 %v587
    %v781 = vunpack.c.l.b16 %v588
    %v782 = vunpack.c.l.b16 %v589
    %v783 = vunpack.c.l.b16 %v590
    %v784 = vunpack.c.l.b16 %v591
    %v785 = vunpack.c.l.b16 %v592
    %v786 = vunpack.c.l.b16 %v593
    %v787 = vunpack.c.l.b16 %v594
    %v788 = vunpack.c.l.b16 %v595
    %v789 = vunpack.c.l.b16 %v596
    %v790 = vunpack.c.l.b16 %v597
    %v791 = vunpack.c.l.b16 %v598
    %v792 = vunpack.c.l.b16 %v599
    %v793 = vunpack.c.l.b16 %v600
    %v794 = vunpack.c.l.b16 %v601
    %v795 = vpack.c.b16 %v780, %v779
    %v796 = vpack.c.b16 %v782, %v781
    %v797 = vpack.c.b16 %v784, %v783
    %v798 = vpack.c.b16 %v786, %v785
    %v799 = vpack.c.b16 %v788, %v787
    %v800 = vpack.c.b16 %v790, %v789
    %v801 = vpack.c.b16 %v792, %v791
    %v802 = vpack.c.b16 %v794, %v793
    %811 = vmatprep.subr.bf16.mxu0 0
    %812 = vmatpush1.bf16.msra.mxu0 %v795
    %813 = vmatprep.subr.bf16.mxu0 0
    %814 = vmatpush1.bf16.msra.mxu0 %v796
    %815 = vmatprep.subr.bf16.mxu0 0
    %816 = vmatpush1.bf16.msra.mxu0 %v797
    %817 = vmatprep.subr.bf16.mxu0 0
    %818 = vmatpush1.bf16.msra.mxu0 %v798
    %819 = vmatprep.subr.bf16.mxu0 0
    %820 = vmatpush1.bf16.msra.mxu0 %v799
    %821 = vmatprep.subr.bf16.mxu0 0
    %822 = vmatpush1.bf16.msra.mxu0 %v800
    %823 = vmatprep.subr.bf16.mxu0 0
    %824 = vmatpush1.bf16.msra.mxu0 %v801
    %825 = vmatprep.subr.bf16.mxu0 0
    %826 = vmatpush1.bf16.msra.mxu0 %v802
    %827 = vmatprep.subr.bf16.mxu0 0
    %828 = vmatpush1.bf16.msra.mxu0 0
    %829 = vmatprep.subr.bf16.mxu0 0
    %830 = vmatpush1.bf16.msra.mxu0 0
    %831 = vmatprep.subr.bf16.mxu0 0
    %832 = vmatpush1.bf16.msra.mxu0 0
    %833 = vmatprep.subr.bf16.mxu0 0
    %834 = vmatpush1.bf16.msra.mxu0 0
    %835 = vmatprep.subr.bf16.mxu0 0
    %836 = vmatpush1.bf16.msra.mxu0 0
    %837 = vmatprep.subr.bf16.mxu0 0
    %838 = vmatpush1.bf16.msra.mxu0 0
    %839 = vmatprep.subr.bf16.mxu0 0
    %840 = vmatpush1.bf16.msra.mxu0 0
    %841 = vmatprep.subr.bf16.mxu0 0
    %842 = vmatpush1.bf16.msra.mxu0 0
    %843 = vmatprep.mubr.bf16.mxu0 0
    %844 = vmatmul.mubr.bf16.gmra.mrb[0].mxu0 %v578
    %v845 = vpop.f32.mrb[0].mxu0
    %v846 = vadd.f32 %v701, %v845
    %v847 = vpop.f32.mrb[0].mxu0
    %v848 = vpop.f32.mrb[0].mxu0
    %v849 = vadd.f32 %v704, %v848
    %v850 = vpop.f32.mrb[0].mxu0
    %851 = vmatprep.mubr.bf16.mxu0 0
    %852 = vmatmul.mubr.bf16.gmra.mrb[0].mxu0 %v579
    %v853 = vpop.f32.mrb[0].mxu0
    %v854 = vadd.f32 %v709, %v853
    %v855 = vpop.f32.mrb[0].mxu0
    %v856 = vpop.f32.mrb[0].mxu0
    %v857 = vadd.f32 %v712, %v856
    %v858 = vpop.f32.mrb[0].mxu0
    %859 = vmatprep.mubr.bf16.mxu0 0
    %860 = vmatmul.mubr.bf16.gmra.mrb[0].mxu0 %v580
    %v861 = vpop.f32.mrb[0].mxu0
    %v862 = vadd.f32 %v717, %v861
    %v863 = vpop.f32.mrb[0].mxu0
    %v864 = vpop.f32.mrb[0].mxu0
    %v865 = vadd.f32 %v720, %v864
    %v866 = vpop.f32.mrb[0].mxu0
    %867 = vmatprep.mubr.bf16.mxu0 0
    %868 = vmatmul.mubr.bf16.gmra.mrb[0].mxu0 %v581
    %v869 = vpop.f32.mrb[0].mxu0
    %v870 = vadd.f32 %v725, %v869
    %v871 = vpop.f32.mrb[0].mxu0
    %v872 = vpop.f32.mrb[0].mxu0
    %v873 = vadd.f32 %v728, %v872
    %v874 = vpop.f32.mrb[0].mxu0
    %875 = vmatprep.mubr.bf16.mxu0 0
    %876 = vmatmul.mubr.bf16.gmra.mrb[0].mxu0 %v582
    %v877 = vpop.f32.mrb[0].mxu0
    %v878 = vadd.f32 %v733, %v877
    %v879 = vpop.f32.mrb[0].mxu0
    %v880 = vpop.f32.mrb[0].mxu0
    %v881 = vadd.f32 %v736, %v880
    %v882 = vpop.f32.mrb[0].mxu0
    %883 = vmatprep.mubr.bf16.mxu0 0
    %884 = vmatmul.mubr.bf16.gmra.mrb[0].mxu0 %v583
    %v885 = vpop.f32.mrb[0].mxu0
    %v886 = vadd.f32 %v741, %v885
    %v887 = vpop.f32.mrb[0].mxu0
    %v888 = vpop.f32.mrb[0].mxu0
    %v889 = vadd.f32 %v744, %v888
    %v890 = vpop.f32.mrb[0].mxu0
    %891 = vmatprep.mubr.bf16.mxu0 0
    %892 = vmatmul.mubr.bf16.gmra.mrb[0].mxu0 %v584
    %v893 = vpop.f32.mrb[0].mxu0
    %v894 = vadd.f32 %v749, %v893
    %v895 = vpop.f32.mrb[0].mxu0
    %v896 = vpop.f32.mrb[0].mxu0
    %v897 = vadd.f32 %v752, %v896
    %v898 = vpop.f32.mrb[0].mxu0
    %899 = vmatprep.mubr.bf16.mxu0 0
    %900 = vmatmul.mubr.bf16.gmra.mrb[0].mxu0 %v585
    %v901 = vpop.f32.mrb[0].mxu0
    %v902 = vadd.f32 %v757, %v901
    %v903 = vpop.f32.mrb[0].mxu0
    %v904 = vpop.f32.mrb[0].mxu0
    %v905 = vadd.f32 %v760, %v904
    %v906 = vpop.f32.mrb[0].mxu0
    %907 = vdwg.mxu0
    %v908 = vld [vmem:[%s7] sm:$0x1]
    %v910 = vlaneseq
    %v911 = vshrl.u32 %v910, 7
    %v912 = vsub.s32 0, %v911
    %v913 = vrot.slane %v908, %v912
    %v915 = vadd.f32 %v846, %v913
    %v916 = vadd.f32 %v849, %v913
    %v917 = vadd.f32 %v854, %v913
    %v918 = vadd.f32 %v857, %v913
    %v919 = vadd.f32 %v862, %v913
    %v920 = vadd.f32 %v865, %v913
    %v921 = vadd.f32 %v870, %v913
    %v922 = vadd.f32 %v873, %v913
    %v923 = vadd.f32 %v878, %v913
    %v924 = vadd.f32 %v881, %v913
    %v925 = vadd.f32 %v886, %v913
    %v926 = vadd.f32 %v889, %v913
    %v927 = vadd.f32 %v894, %v913
    %v928 = vadd.f32 %v897, %v913
    %v929 = vadd.f32 %v902, %v913
    %v930 = vadd.f32 %v905, %v913
    %v931 = vmax.f32 %v915, 0.0
    %v932 = vmax.f32 %v916, 0.0
    %v933 = vmax.f32 %v917, 0.0
    %v934 = vmax.f32 %v918, 0.0
    %v935 = vmax.f32 %v919, 0.0
    %v936 = vmax.f32 %v920, 0.0
    %v937 = vmax.f32 %v921, 0.0
    %v938 = vmax.f32 %v922, 0.0
    %v939 = vmax.f32 %v923, 0.0
    %v940 = vmax.f32 %v924, 0.0
    %v941 = vmax.f32 %v925, 0.0
    %v942 = vmax.f32 %v926, 0.0
    %v943 = vmax.f32 %v927, 0.0
    %v944 = vmax.f32 %v928, 0.0
    %v945 = vmax.f32 %v929, 0.0
    %v946 = vmax.f32 %v930, 0.0
    %v947 = vpack.c.bf16 %v932, %v931
    %v948 = vpack.c.bf16 %v934, %v933
    %v949 = vpack.c.bf16 %v936, %v935
    %v950 = vpack.c.bf16 %v938, %v937
    %v951 = vpack.c.bf16 %v940, %v939
    %v952 = vpack.c.bf16 %v942, %v941
    %v953 = vpack.c.bf16 %v944, %v943
    %v954 = vpack.c.bf16 %v946, %v945
    %v955 = vld [vmem:[#allocation11] sm:$0xf]
    %v956 = vld [vmem:[#allocation11 + $0x4] sm:$0xf]
    %v957 = vld [vmem:[#allocation11 + $0x8] sm:$0xf]
    %v958 = vld [vmem:[#allocation11 + $0xc] sm:$0xf]
    %v959 = vld [vmem:[#allocation11 + $0x10] sm:$0xf]
    %v960 = vld [vmem:[#allocation11 + $0x14] sm:$0xf]
    %v961 = vld [vmem:[#allocation11 + $0x18] sm:$0xf]
    %v962 = vld [vmem:[#allocation11 + $0x1c] sm:$0xf]
    %v963 = vld [vmem:[#allocation11 + $0x20] sm:$0xf]
    %v964 = vld [vmem:[#allocation11 + $0x24] sm:$0xf]
    %v965 = vld [vmem:[#allocation11 + $0x28] sm:$0xf]
    %v966 = vld [vmem:[#allocation11 + $0x2c] sm:$0xf]
    %v967 = vld [vmem:[#allocation11 + $0x30] sm:$0xf]
    %v968 = vld [vmem:[#allocation11 + $0x34] sm:$0xf]
    %v969 = vld [vmem:[#allocation11 + $0x38] sm:$0xf]
    %v970 = vld [vmem:[#allocation11 + $0x3c] sm:$0xf]
    %v971 = vld [vmem:[%s9] sm:$0x1]
    %v973 = vlaneseq
    %v974 = vshrl.u32 %v973, 7
    %v975 = vsub.s32 0, %v974
    %v976 = vrot.slane %v971, %v975
    %v994 = vunpack.c.l.b16 %v955
    %v995 = vunpack.c.l.b16 %v956
    %v996 = vunpack.c.l.b16 %v957
    %v997 = vunpack.c.l.b16 %v958
    %v998 = vunpack.c.l.b16 %v959
    %v999 = vunpack.c.l.b16 %v960
    %v1000 = vunpack.c.l.b16 %v961
    %v1001 = vunpack.c.l.b16 %v962
    %v1002 = vunpack.c.l.b16 %v963
    %v1003 = vunpack.c.l.b16 %v964
    %v1004 = vunpack.c.l.b16 %v965
    %v1005 = vunpack.c.l.b16 %v966
    %v1006 = vunpack.c.l.b16 %v967
    %v1007 = vunpack.c.l.b16 %v968
    %v1008 = vunpack.c.l.b16 %v969
    %v1009 = vunpack.c.l.b16 %v970
    %v1010 = vpack.c.b16 %v995, %v994
    %v1011 = vpack.c.b16 %v997, %v996
    %v1012 = vpack.c.b16 %v999, %v998
    %v1013 = vpack.c.b16 %v1001, %v1000
    %v1014 = vpack.c.b16 %v1003, %v1002
    %v1015 = vpack.c.b16 %v1005, %v1004
    %v1016 = vpack.c.b16 %v1007, %v1006
    %v1017 = vpack.c.b16 %v1009, %v1008
    %1026 = vmatprep.subr.bf16.mxu0 0
    %1027 = vmatpush1.bf16.msra.mxu0 %v1010
    %1028 = vmatprep.subr.bf16.mxu0 0
    %1029 = vmatpush1.bf16.msra.mxu0 %v1011
    %1030 = vmatprep.subr.bf16.mxu0 0
    %1031 = vmatpush1.bf16.msra.mxu0 %v1012
    %1032 = vmatprep.subr.bf16.mxu0 0
    %1033 = vmatpush1.bf16.msra.mxu0 %v1013
    %1034 = vmatprep.subr.bf16.mxu0 0
    %1035 = vmatpush1.bf16.msra.mxu0 %v1014
    %1036 = vmatprep.subr.bf16.mxu0 0
    %1037 = vmatpush1.bf16.msra.mxu0 %v1015
    %1038 = vmatprep.subr.bf16.mxu0 0
    %1039 = vmatpush1.bf16.msra.mxu0 %v1016
    %1040 = vmatprep.subr.bf16.mxu0 0
    %1041 = vmatpush1.bf16.msra.mxu0 %v1017
    %1042 = vmatprep.subr.bf16.mxu0 0
    %1043 = vmatpush1.bf16.msra.mxu0 0
    %1044 = vmatprep.subr.bf16.mxu0 0
    %1045 = vmatpush1.bf16.msra.mxu0 0
    %1046 = vmatprep.subr.bf16.mxu0 0
    %1047 = vmatpush1.bf16.msra.mxu0 0
    %1048 = vmatprep.subr.bf16.mxu0 0
    %1049 = vmatpush1.bf16.msra.mxu0 0
    %1050 = vmatprep.subr.bf16.mxu0 0
    %1051 = vmatpush1.bf16.msra.mxu0 0
    %1052 = vmatprep.subr.bf16.mxu0 0
    %1053 = vmatpush1.bf16.msra.mxu0 0
    %1054 = vmatprep.subr.bf16.mxu0 0
    %1055 = vmatpush1.bf16.msra.mxu0 0
    %1056 = vmatprep.subr.bf16.mxu0 0
    %1057 = vmatpush1.bf16.msra.mxu0 0
    %1058 = vmatprep.mubr.bf16.mxu0 0
    %1059 = vmatmul.mubr.bf16.gmra.mrb[0].mxu0 %v947
    %v1060 = vpop.f32.mrb[0].mxu0
    %v1061 = vadd.f32 %v976, %v1060
    %v1062 = vpop.f32.mrb[0].mxu0
    %v1063 = vpop.f32.mrb[0].mxu0
    %v1064 = vadd.f32 %v976, %v1063
    %v1065 = vpop.f32.mrb[0].mxu0
    %1066 = vmatprep.mubr.bf16.mxu0 0
    %1067 = vmatmul.mubr.bf16.gmra.mrb[0].mxu0 %v948
    %v1068 = vpop.f32.mrb[0].mxu0
    %v1069 = vadd.f32 %v976, %v1068
    %v1070 = vpop.f32.mrb[0].mxu0
    %v1071 = vpop.f32.mrb[0].mxu0
    %v1072 = vadd.f32 %v976, %v1071
    %v1073 = vpop.f32.mrb[0].mxu0
    %1074 = vmatprep.mubr.bf16.mxu0 0
    %1075 = vmatmul.mubr.bf16.gmra.mrb[0].mxu0 %v949
    %v1076 = vpop.f32.mrb[0].mxu0
    %v1077 = vadd.f32 %v976, %v1076
    %v1078 = vpop.f32.mrb[0].mxu0
    %v1079 = vpop.f32.mrb[0].mxu0
    %v1080 = vadd.f32 %v976, %v1079
    %v1081 = vpop.f32.mrb[0].mxu0
    %1082 = vmatprep.mubr.bf16.mxu0 0
    %1083 = vmatmul.mubr.bf16.gmra.mrb[0].mxu0 %v950
    %v1084 = vpop.f32.mrb[0].mxu0
    %v1085 = vadd.f32 %v976, %v1084
    %v1086 = vpop.f32.mrb[0].mxu0
    %v1087 = vpop.f32.mrb[0].mxu0
    %v1088 = vadd.f32 %v976, %v1087
    %v1089 = vpop.f32.mrb[0].mxu0
    %1090 = vmatprep.mubr.bf16.mxu0 0
    %1091 = vmatmul.mubr.bf16.gmra.mrb[0].mxu0 %v951
    %v1092 = vpop.f32.mrb[0].mxu0
    %v1093 = vadd.f32 %v976, %v1092
    %v1094 = vpop.f32.mrb[0].mxu0
    %v1095 = vpop.f32.mrb[0].mxu0
    %v1096 = vadd.f32 %v976, %v1095
    %v1097 = vpop.f32.mrb[0].mxu0
    %1098 = vmatprep.mubr.bf16.mxu0 0
    %1099 = vmatmul.mubr.bf16.gmra.mrb[0].mxu0 %v952
    %v1100 = vpop.f32.mrb[0].mxu0
    %v1101 = vadd.f32 %v976, %v1100
    %v1102 = vpop.f32.mrb[0].mxu0
    %v1103 = vpop.f32.mrb[0].mxu0
    %v1104 = vadd.f32 %v976, %v1103
    %v1105 = vpop.f32.mrb[0].mxu0
    %1106 = vmatprep.mubr.bf16.mxu0 0
    %1107 = vmatmul.mubr.bf16.gmra.mrb[0].mxu0 %v953
    %v1108 = vpop.f32.mrb[0].mxu0
    %v1109 = vadd.f32 %v976, %v1108
    %v1110 = vpop.f32.mrb[0].mxu0
    %v1111 = vpop.f32.mrb[0].mxu0
    %v1112 = vadd.f32 %v976, %v1111
    %v1113 = vpop.f32.mrb[0].mxu0
    %1114 = vmatprep.mubr.bf16.mxu0 0
    %1115 = vmatmul.mubr.bf16.gmra.mrb[0].mxu0 %v954
    %v1116 = vpop.f32.mrb[0].mxu0
    %v1117 = vadd.f32 %v976, %v1116
    %v1118 = vpop.f32.mrb[0].mxu0
    %v1119 = vpop.f32.mrb[0].mxu0
    %v1120 = vadd.f32 %v976, %v1119
    %v1121 = vpop.f32.mrb[0].mxu0
    %1122 = vdwg.mxu0
    %v1123 = vmax.f32 %v1061, 0.0
    %v1124 = vmax.f32 %v1064, 0.0
    %v1125 = vmax.f32 %v1069, 0.0
    %v1126 = vmax.f32 %v1072, 0.0
    %v1127 = vmax.f32 %v1077, 0.0
    %v1128 = vmax.f32 %v1080, 0.0
    %v1129 = vmax.f32 %v1085, 0.0
    %v1130 = vmax.f32 %v1088, 0.0
    %v1131 = vmax.f32 %v1093, 0.0
    %v1132 = vmax.f32 %v1096, 0.0
    %v1133 = vmax.f32 %v1101, 0.0
    %v1134 = vmax.f32 %v1104, 0.0
    %v1135 = vmax.f32 %v1109, 0.0
    %v1136 = vmax.f32 %v1112, 0.0
    %v1137 = vmax.f32 %v1117, 0.0
    %v1138 = vmax.f32 %v1120, 0.0
    %v1139 = vpack.c.bf16 %v1124, %v1123
    %v1140 = vpack.c.bf16 %v1126, %v1125
    %v1141 = vpack.c.bf16 %v1128, %v1127
    %v1142 = vpack.c.bf16 %v1130, %v1129
    %v1143 = vpack.c.bf16 %v1132, %v1131
    %v1144 = vpack.c.bf16 %v1134, %v1133
    %v1145 = vpack.c.bf16 %v1136, %v1135
    %v1146 = vpack.c.bf16 %v1138, %v1137
    %v1147 = vld [vmem:[#allocation13] sm:$0xf]
    %v1148 = vld [vmem:[#allocation13 + $0x4] sm:$0xf]
    %v1149 = vld [vmem:[#allocation13 + $0x8] sm:$0xf]
    %v1150 = vld [vmem:[#allocation13 + $0xc] sm:$0xf]
    %v1151 = vld [vmem:[#allocation13 + $0x10] sm:$0xf]
    %v1152 = vld [vmem:[#allocation13 + $0x14] sm:$0xf]
    %v1153 = vld [vmem:[#allocation13 + $0x18] sm:$0xf]
    %v1154 = vld [vmem:[#allocation13 + $0x1c] sm:$0xf]
    %v1155 = vld [vmem:[#allocation13 + $0x20] sm:$0xf]
    %v1156 = vld [vmem:[#allocation13 + $0x24] sm:$0xf]
    %v1157 = vld [vmem:[#allocation13 + $0x28] sm:$0xf]
    %v1158 = vld [vmem:[#allocation13 + $0x2c] sm:$0xf]
    %v1159 = vld [vmem:[#allocation13 + $0x30] sm:$0xf]
    %v1160 = vld [vmem:[#allocation13 + $0x34] sm:$0xf]
    %v1161 = vld [vmem:[#allocation13 + $0x38] sm:$0xf]
    %v1162 = vld [vmem:[#allocation13 + $0x3c] sm:$0xf]
    %v1163 = vld [vmem:[%s11] sm:$0x1]
    %v1165 = vlaneseq
    %v1166 = vshrl.u32 %v1165, 7
    %v1167 = vsub.s32 0, %v1166
    %v1168 = vrot.slane %v1163, %v1167
    %v1186 = vunpack.c.l.b16 %v1147
    %v1187 = vunpack.c.l.b16 %v1148
    %v1188 = vunpack.c.l.b16 %v1149
    %v1189 = vunpack.c.l.b16 %v1150
    %v1190 = vunpack.c.l.b16 %v1151
    %v1191 = vunpack.c.l.b16 %v1152
    %v1192 = vunpack.c.l.b16 %v1153
    %v1193 = vunpack.c.l.b16 %v1154
    %v1194 = vunpack.c.l.b16 %v1155
    %v1195 = vunpack.c.l.b16 %v1156
    %v1196 = vunpack.c.l.b16 %v1157
    %v1197 = vunpack.c.l.b16 %v1158
    %v1198 = vunpack.c.l.b16 %v1159
    %v1199 = vunpack.c.l.b16 %v1160
    %v1200 = vunpack.c.l.b16 %v1161
    %v1201 = vunpack.c.l.b16 %v1162
    %v1202 = vpack.c.b16 %v1187, %v1186
    %v1203 = vpack.c.b16 %v1189, %v1188
    %v1204 = vpack.c.b16 %v1191, %v1190
    %v1205 = vpack.c.b16 %v1193, %v1192
    %v1206 = vpack.c.b16 %v1195, %v1194
    %v1207 = vpack.c.b16 %v1197, %v1196
    %v1208 = vpack.c.b16 %v1199, %v1198
    %v1209 = vpack.c.b16 %v1201, %v1200
    %1218 = vmatprep.subr.bf16.mxu0 0
    %1219 = vmatpush1.bf16.msra.mxu0 %v1202
    %1220 = vmatprep.subr.bf16.mxu0 0
    %1221 = vmatpush1.bf16.msra.mxu0 %v1203
    %1222 = vmatprep.subr.bf16.mxu0 0
    %1223 = vmatpush1.bf16.msra.mxu0 %v1204
    %1224 = vmatprep.subr.bf16.mxu0 0
    %1225 = vmatpush1.bf16.msra.mxu0 %v1205
    %1226 = vmatprep.subr.bf16.mxu0 0
    %1227 = vmatpush1.bf16.msra.mxu0 %v1206
    %1228 = vmatprep.subr.bf16.mxu0 0
    %1229 = vmatpush1.bf16.msra.mxu0 %v1207
    %1230 = vmatprep.subr.bf16.mxu0 0
    %1231 = vmatpush1.bf16.msra.mxu0 %v1208
    %1232 = vmatprep.subr.bf16.mxu0 0
    %1233 = vmatpush1.bf16.msra.mxu0 %v1209
    %1234 = vmatprep.subr.bf16.mxu0 0
    %1235 = vmatpush1.bf16.msra.mxu0 0
    %1236 = vmatprep.subr.bf16.mxu0 0
    %1237 = vmatpush1.bf16.msra.mxu0 0
    %1238 = vmatprep.subr.bf16.mxu0 0
    %1239 = vmatpush1.bf16.msra.mxu0 0
    %1240 = vmatprep.subr.bf16.mxu0 0
    %1241 = vmatpush1.bf16.msra.mxu0 0
    %1242 = vmatprep.subr.bf16.mxu0 0
    %1243 = vmatpush1.bf16.msra.mxu0 0
    %1244 = vmatprep.subr.bf16.mxu0 0
    %1245 = vmatpush1.bf16.msra.mxu0 0
    %1246 = vmatprep.subr.bf16.mxu0 0
    %1247 = vmatpush1.bf16.msra.mxu0 0
    %1248 = vmatprep.subr.bf16.mxu0 0
    %1249 = vmatpush1.bf16.msra.mxu0 0
    %1250 = vmatprep.mubr.bf16.mxu0 0
    %1251 = vmatmul.mubr.bf16.gmra.mrb[0].mxu0 %v1139
    %v1252 = vpop.f32.mrb[0].mxu0
    %v1253 = vadd.f32 %v1168, %v1252
    %v1254 = vpop.f32.mrb[0].mxu0
    %v1255 = vpop.f32.mrb[0].mxu0
    %v1256 = vadd.f32 %v1168, %v1255
    %v1257 = vpop.f32.mrb[0].mxu0
    %1258 = vmatprep.mubr.bf16.mxu0 0
    %1259 = vmatmul.mubr.bf16.gmra.mrb[0].mxu0 %v1140
    %v1260 = vpop.f32.mrb[0].mxu0
    %v1261 = vadd.f32 %v1168, %v1260
    %v1262 = vpop.f32.mrb[0].mxu0
    %v1263 = vpop.f32.mrb[0].mxu0
    %v1264 = vadd.f32 %v1168, %v1263
    %v1265 = vpop.f32.mrb[0].mxu0
    %1266 = vmatprep.mubr.bf16.mxu0 0
    %1267 = vmatmul.mubr.bf16.gmra.mrb[0].mxu0 %v1141
    %v1268 = vpop.f32.mrb[0].mxu0
    %v1269 = vadd.f32 %v1168, %v1268
    %v1270 = vpop.f32.mrb[0].mxu0
    %v1271 = vpop.f32.mrb[0].mxu0
    %v1272 = vadd.f32 %v1168, %v1271
    %v1273 = vpop.f32.mrb[0].mxu0
    %1274 = vmatprep.mubr.bf16.mxu0 0
    %1275 = vmatmul.mubr.bf16.gmra.mrb[0].mxu0 %v1142
    %v1276 = vpop.f32.mrb[0].mxu0
    %v1277 = vadd.f32 %v1168, %v1276
    %v1278 = vpop.f32.mrb[0].mxu0
    %v1279 = vpop.f32.mrb[0].mxu0
    %v1280 = vadd.f32 %v1168, %v1279
    %v1281 = vpop.f32.mrb[0].mxu0
    %1282 = vmatprep.mubr.bf16.mxu0 0
    %1283 = vmatmul.mubr.bf16.gmra.mrb[0].mxu0 %v1143
    %v1284 = vpop.f32.mrb[0].mxu0
    %v1285 = vadd.f32 %v1168, %v1284
    %v1286 = vpop.f32.mrb[0].mxu0
    %v1287 = vpop.f32.mrb[0].mxu0
    %v1288 = vadd.f32 %v1168, %v1287
    %v1289 = vpop.f32.mrb[0].mxu0
    %1290 = vmatprep.mubr.bf16.mxu0 0
    %1291 = vmatmul.mubr.bf16.gmra.mrb[0].mxu0 %v1144
    %v1292 = vpop.f32.mrb[0].mxu0
    %v1293 = vadd.f32 %v1168, %v1292
    %v1294 = vpop.f32.mrb[0].mxu0
    %v1295 = vpop.f32.mrb[0].mxu0
    %v1296 = vadd.f32 %v1168, %v1295
    %v1297 = vpop.f32.mrb[0].mxu0
    %1298 = vmatprep.mubr.bf16.mxu0 0
    %1299 = vmatmul.mubr.bf16.gmra.mrb[0].mxu0 %v1145
    %v1300 = vpop.f32.mrb[0].mxu0
    %v1301 = vadd.f32 %v1168, %v1300
    %v1302 = vpop.f32.mrb[0].mxu0
    %v1303 = vpop.f32.mrb[0].mxu0
    %v1304 = vadd.f32 %v1168, %v1303
    %v1305 = vpop.f32.mrb[0].mxu0
    %1306 = vmatprep.mubr.bf16.mxu0 0
    %1307 = vmatmul.mubr.bf16.gmra.mrb[0].mxu0 %v1146
    %v1308 = vpop.f32.mrb[0].mxu0
    %v1309 = vadd.f32 %v1168, %v1308
    %v1310 = vpop.f32.mrb[0].mxu0
    %v1311 = vpop.f32.mrb[0].mxu0
    %v1312 = vadd.f32 %v1168, %v1311
    %v1313 = vpop.f32.mrb[0].mxu0
    %1314 = vdwg.mxu0
    %v1315 = vxor.u32 %v1253, 2147483648
    %v1316 = vxor.u32 %v1256, 2147483648
    %v1317 = vxor.u32 %v1261, 2147483648
    %v1318 = vxor.u32 %v1264, 2147483648
    %v1319 = vxor.u32 %v1269, 2147483648
    %v1320 = vxor.u32 %v1272, 2147483648
    %v1321 = vxor.u32 %v1277, 2147483648
    %v1322 = vxor.u32 %v1280, 2147483648
    %v1323 = vxor.u32 %v1285, 2147483648
    %v1324 = vxor.u32 %v1288, 2147483648
    %v1325 = vxor.u32 %v1293, 2147483648
    %v1326 = vxor.u32 %v1296, 2147483648
    %v1327 = vxor.u32 %v1301, 2147483648
    %v1328 = vxor.u32 %v1304, 2147483648
    %v1329 = vxor.u32 %v1309, 2147483648
    %v1330 = vxor.u32 %v1312, 2147483648
    %v1331 = vmul.f32 %v1315, 1.442695
    %v1332 = vpow.pop %v1331
    %v1333 = vmul.f32 %v1316, 1.442695
    %v1334 = vpow.pop %v1333
    %v1335 = vmul.f32 %v1317, 1.442695
    %v1336 = vpow.pop %v1335
    %v1337 = vmul.f32 %v1318, 1.442695
    %v1338 = vpow.pop %v1337
    %v1339 = vmul.f32 %v1319, 1.442695
    %v1340 = vpow.pop %v1339
    %v1341 = vmul.f32 %v1320, 1.442695
    %v1342 = vpow.pop %v1341
    %v1343 = vmul.f32 %v1321, 1.442695
    %v1344 = vpow.pop %v1343
    %v1345 = vmul.f32 %v1322, 1.442695
    %v1346 = vpow.pop %v1345
    %v1347 = vmul.f32 %v1323, 1.442695
    %v1348 = vpow.pop %v1347
    %v1349 = vmul.f32 %v1324, 1.442695
    %v1350 = vpow.pop %v1349
    %v1351 = vmul.f32 %v1325, 1.442695
    %v1352 = vpow.pop %v1351
    %v1353 = vmul.f32 %v1326, 1.442695
    %v1354 = vpow.pop %v1353
    %v1355 = vmul.f32 %v1327, 1.442695
    %v1356 = vpow.pop %v1355
    %v1357 = vmul.f32 %v1328, 1.442695
    %v1358 = vpow.pop %v1357
    %v1359 = vmul.f32 %v1329, 1.442695
    %v1360 = vpow.pop %v1359
    %v1361 = vmul.f32 %v1330, 1.442695
    %v1362 = vpow.pop %v1361
    %v1363 = vadd.f32 %v1332, 1.0
    %v1364 = vadd.f32 %v1334, 1.0
    %v1365 = vadd.f32 %v1336, 1.0
    %v1366 = vadd.f32 %v1338, 1.0
    %v1367 = vadd.f32 %v1340, 1.0
    %v1368 = vadd.f32 %v1342, 1.0
    %v1369 = vadd.f32 %v1344, 1.0
    %v1370 = vadd.f32 %v1346, 1.0
    %v1371 = vadd.f32 %v1348, 1.0
    %v1372 = vadd.f32 %v1350, 1.0
    %v1373 = vadd.f32 %v1352, 1.0
    %v1374 = vadd.f32 %v1354, 1.0
    %v1375 = vadd.f32 %v1356, 1.0
    %v1376 = vadd.f32 %v1358, 1.0
    %v1377 = vadd.f32 %v1360, 1.0
    %v1378 = vadd.f32 %v1362, 1.0
    %v1379 = vrcp.pop %v1363
    %v1380 = vmul.f32 1.0, %v1379
    %v1381 = vrcp.pop %v1364
    %v1382 = vmul.f32 1.0, %v1381
    %v1383 = vrcp.pop %v1365
    %v1384 = vmul.f32 1.0, %v1383
    %v1385 = vrcp.pop %v1366
    %v1386 = vmul.f32 1.0, %v1385
    %v1387 = vrcp.pop %v1367
    %v1388 = vmul.f32 1.0, %v1387
    %v1389 = vrcp.pop %v1368
    %v1390 = vmul.f32 1.0, %v1389
    %v1391 = vrcp.pop %v1369
    %v1392 = vmul.f32 1.0, %v1391
    %v1393 = vrcp.pop %v1370
    %v1394 = vmul.f32 1.0, %v1393
    %v1395 = vrcp.pop %v1371
    %v1396 = vmul.f32 1.0, %v1395
    %v1397 = vrcp.pop %v1372
    %v1398 = vmul.f32 1.0, %v1397
    %v1399 = vrcp.pop %v1373
    %v1400 = vmul.f32 1.0, %v1399
    %v1401 = vrcp.pop %v1374
    %v1402 = vmul.f32 1.0, %v1401
    %v1403 = vrcp.pop %v1375
    %v1404 = vmul.f32 1.0, %v1403
    %v1405 = vrcp.pop %v1376
    %v1406 = vmul.f32 1.0, %v1405
    %v1407 = vrcp.pop %v1377
    %v1408 = vmul.f32 1.0, %v1407
    %v1409 = vrcp.pop %v1378
    %v1410 = vmul.f32 1.0, %v1409
    %v1411 = vpack.c.bf16 %v1382, %v1380
    %v1412 = vpack.c.bf16 %v1386, %v1384
    %v1413 = vpack.c.bf16 %v1390, %v1388
    %v1414 = vpack.c.bf16 %v1394, %v1392
    %v1415 = vpack.c.bf16 %v1398, %v1396
    %v1416 = vpack.c.bf16 %v1402, %v1400
    %v1417 = vpack.c.bf16 %v1406, %v1404
    %v1418 = vpack.c.bf16 %v1410, %v1408
    %v1427 = vunpack.c.l.b16 %v1411
    %v1428 = vunpack.c.h.b16 %v1411
    %v1429 = vunpack.c.l.b16 %v1412
    %v1430 = vunpack.c.h.b16 %v1412
    %v1431 = vunpack.c.l.b16 %v1413
    %v1432 = vunpack.c.h.b16 %v1413
    %v1433 = vunpack.c.l.b16 %v1414
    %v1434 = vunpack.c.h.b16 %v1414
    %v1435 = vunpack.c.l.b16 %v1415
    %v1436 = vunpack.c.h.b16 %v1415
    %v1437 = vunpack.c.l.b16 %v1416
    %v1438 = vunpack.c.h.b16 %v1416
    %v1439 = vunpack.c.l.b16 %v1417
    %v1440 = vunpack.c.h.b16 %v1417
    %v1441 = vunpack.c.l.b16 %v1418
    %v1442 = vunpack.c.h.b16 %v1418
    %v1443 = vpack.c.b16 %v1427, %v1427
    %v1444 = vpack.c.b16 %v1428, %v1428
    %v1445 = vpack.c.b16 %v1429, %v1429
    %v1446 = vpack.c.b16 %v1430, %v1430
    %v1447 = vpack.c.b16 %v1431, %v1431
    %v1448 = vpack.c.b16 %v1432, %v1432
    %v1449 = vpack.c.b16 %v1433, %v1433
    %v1450 = vpack.c.b16 %v1434, %v1434
    %v1451 = vpack.c.b16 %v1435, %v1435
    %v1452 = vpack.c.b16 %v1436, %v1436
    %v1453 = vpack.c.b16 %v1437, %v1437
    %v1454 = vpack.c.b16 %v1438, %v1438
    %v1455 = vpack.c.b16 %v1439, %v1439
    %v1456 = vpack.c.b16 %v1440, %v1440
    %v1457 = vpack.c.b16 %v1441, %v1441
    %v1458 = vpack.c.b16 %v1442, %v1442
    %1475 = vst [vmem:[#allocation14] sm:$0xf] %v1443
    %1476 = vst [vmem:[#allocation14 + $0x4] sm:$0xf] %v1444
    %1477 = vst [vmem:[#allocation14 + $0x8] sm:$0xf] %v1445
    %1478 = vst [vmem:[#allocation14 + $0xc] sm:$0xf] %v1446
    %1479 = vst [vmem:[#allocation14 + $0x10] sm:$0xf] %v1447
    %1480 = vst [vmem:[#allocation14 + $0x14] sm:$0xf] %v1448
    %1481 = vst [vmem:[#allocation14 + $0x18] sm:$0xf] %v1449
    %1482 = vst [vmem:[#allocation14 + $0x1c] sm:$0xf] %v1450
    %1483 = vst [vmem:[#allocation14 + $0x20] sm:$0xf] %v1451
    %1484 = vst [vmem:[#allocation14 + $0x24] sm:$0xf] %v1452
    %1485 = vst [vmem:[#allocation14 + $0x28] sm:$0xf] %v1453
    %1486 = vst [vmem:[#allocation14 + $0x2c] sm:$0xf] %v1454
    %1487 = vst [vmem:[#allocation14 + $0x30] sm:$0xf] %v1455
    %1488 = vst [vmem:[#allocation14 + $0x34] sm:$0xf] %v1456
    %1489 = vst [vmem:[#allocation14 + $0x38] sm:$0xf] %v1457
    %1490 = vst [vmem:[#allocation14 + $0x3c] sm:$0xf] %v1458
    // Predicated region
    $region78: #{tpu_custom_call.1} parent=1 // pred_check
      _
    $region79: #{tpu_custom_call.1} parent=1 // pred_check_branch
      %1492 = sbr.rel (0) target = $region81
    $region80: #{tpu_custom_call.1} parent=1 // pred_region
      %s1494 = ssub.s32 1024, 1024
      %1495 = vsyncadd [#allocation4], %s1494
      %s1496 = sshll.u32 [#allocation14], 4
      %s1497 = int_to_ptr.vmem [resolvable:$true] %s1496
      %1502 = dma.vmem_to_hbm [thread:$0]  %s1497, 1024, %s12, [#allocation4], 64, 64, 4
    $region81: #{tpu_custom_call.1} parent=1 // pred_fallthru
      _
    // Predicated region
    $region82: #{tpu_custom_call.1} parent=1 // pred_check
      _
    $region83: #{tpu_custom_call.1} parent=1 // pred_check_branch
      %1504 = sbr.rel (0) target = $region85
    $region84: #{tpu_custom_call.1} parent=1 // pred_region
      %1505 = dma.done [#allocation4], 1024
    $region85: #{tpu_custom_call.1} parent=1 // pred_fallthru
      _
    %1506 = vsyncpa [#allocation3], 1
    %1507 = vsyncpa [#allocation6], 1
    %1508 = vsyncpa [#allocation9], 1
    %1509 = vsyncpa [#allocation12], 1
    %1510 = vsyncpa [#allocation4], 1

// kernel: tpu_custom_call.1
$region0: #{tpu_custom_call.1}
  #allocation0 [shape = 'u32[]', space=smem, size = 0x4, offset = 0x4, fixed_abs, tag = 'smem constant byte address 0x4 - core index']
  #allocation1 [shape = 'u32[144,128]{1,0:T(1,128)}', space=vmem, size = 0x12000, scoped, tag = 'internal scratch']
  %s0 = inlined_call_operand.hbm [shape: bf16[128,128], index: 0, kind: input, shape index: {}]
  %s1 = inlined_call_operand.hbm [shape: bf16[128,128], index: 1, kind: input, shape index: {}]
  %s2 = inlined_call_operand.vmem [shape: f32[1,128], index: 2, kind: input, shape index: {}]
  %s3 = inlined_call_operand.hbm [shape: bf16[128,128], index: 3, kind: input, shape index: {}]
  %s4 = inlined_call_operand.vmem [shape: f32[1,128], index: 4, kind: input, shape index: {}]
  %s5 = inlined_call_operand.hbm [shape: bf16[128,128], index: 5, kind: input, shape index: {}]
  %s6 = inlined_call_operand.hbm [shape: bf16[128,128], index: 6, kind: input, shape index: {}]
  %s7 = inlined_call_operand.vmem [shape: f32[1,128], index: 7, kind: input, shape index: {}]
  %s8 = inlined_call_operand.hbm [shape: bf16[128,128], index: 8, kind: input, shape index: {}]
  %s9 = inlined_call_operand.vmem [shape: f32[1,128], index: 9, kind: input, shape index: {}]
  %s10 = inlined_call_operand.hbm [shape: bf16[128,128], index: 10, kind: input, shape index: {}]
  %s11 = inlined_call_operand.vmem [shape: f32[1,128], index: 11, kind: input, shape index: {}]
  %s12 = inlined_call_operand.hbm [shape: bf16[128,128], index: 12, kind: output, shape index: {}]
  %s13 = sld [smem:[#allocation0]]
  $region86: #{tpu_custom_call.1} parent=0
    _
  %s15 = ssub.s32 1, %s13
  %s16 = scalar_select 0, %s15, %s13
  $region1: #{tpu_custom_call.1} parent=0
    #allocation2 [shape = 'u8[32768]{0}', space=vmem, size = 0x8000, scoped, tag = 'input window, operand 0, single buffered']
    #allocation3 [shape = 's32[1]{0}', space=sflag, size = 0x4, scoped, tag = 'scoped memory for tpu_custom_call.1']
    #allocation4 [shape = 's32[1]{0}', space=sflag, size = 0x4, scoped, tag = 'scoped memory for tpu_custom_call.1']
    #allocation5 [shape = 'u8[32768]{0}', space=vmem, size = 0x8000, scoped, tag = 'input window, operand 1, single buffered']
    #allocation6 [shape = 's32[1]{0}', space=sflag, size = 0x4, scoped, tag = 'scoped memory for tpu_custom_call.1']
    #allocation7 [shape = 'u8[32768]{0}', space=vmem, size = 0x8000, scoped, tag = 'input window, operand 3, single buffered']
    #allocation8 [shape = 'u8[32768]{0}', space=vmem, size = 0x8000, scoped, tag = 'input window, operand 5, single buffered']
    #allocation9 [shape = 's32[1]{0}', space=sflag, size = 0x4, scoped, tag = 'scoped memory for tpu_custom_call.1']
    #allocation10 [shape = 'u8[32768]{0}', space=vmem, size = 0x8000, scoped, tag = 'input window, operand 6, single buffered']
    #allocation11 [shape = 'u8[32768]{0}', space=vmem, size = 0x8000, scoped, tag = 'input window, operand 8, single buffered']
    #allocation12 [shape = 's32[1]{0}', space=sflag, size = 0x4, scoped, tag = 'scoped memory for tpu_custom_call.1']
    #allocation13 [shape = 'u8[32768]{0}', space=vmem, size = 0x8000, scoped, tag = 'input window, operand 10, single buffered']
    #allocation14 [shape = 'u8[32768]{0}', space=vmem, size = 0x8000, scoped, tag = 'output window, operand 0, single buffered']
    %17 = vsyncpa [#allocation3], 0
    %18 = vsyncpa [#allocation6], 0
    %19 = vsyncpa [#allocation9], 0
    %20 = vsyncpa [#allocation12], 0
    %21 = vsyncpa [#allocation4], 0
    // Predicated region
    $region2: #{tpu_custom_call.1} parent=1 // pred_check
      _
    $region3: #{tpu_custom_call.1} parent=1 // pred_check_branch
      %23 = sbr.rel (0) target = $region5
    $region4: #{tpu_custom_call.1} parent=1 // pred_region
      %s25 = ssub.s32 1024, 1024
      %26 = vsyncadd [#allocation3], %s25
      %s27 = sshll.u32 [#allocation2], 4
      %s28 = int_to_ptr.vmem [resolvable:$true] %s27
      %33 = dma.hbm_to_vmem [thread:$0]  %s0, 1024, %s28, [#allocation3], 64, 64, 4
    $region5: #{tpu_custom_call.1} parent=1 // pred_fallthru
      _
    // Predicated region
    $region6: #{tpu_custom_call.1} parent=1 // pred_check
      _
    $region7: #{tpu_custom_call.1} parent=1 // pred_check_branch
      %35 = sbr.rel (0) target = $region9
    $region8: #{tpu_custom_call.1} parent=1 // pred_region
      %s37 = ssub.s32 1024, 1024
      %38 = vsyncadd [#allocation6], %s37
      %s39 = sshll.u32 [#allocation5], 4
      %s40 = int_to_ptr.vmem [resolvable:$true] %s39
      %45 = dma.hbm_to_vmem [thread:$0]  %s1, 1024, %s40, [#allocation6], 64, 64, 4
    $region9: #{tpu_custom_call.1} parent=1 // pred_fallthru
      _
    // Predicated region
    $region10: #{tpu_custom_call.1} parent=1 // pred_check
      _
    $region11: #{tpu_custom_call.1} parent=1 // pred_check_branch
      %47 = sbr.rel (0) target = $region13
    $region12: #{tpu_custom_call.1} parent=1 // pred_region
      _
    $region13: #{tpu_custom_call.1} parent=1 // pred_fallthru
      _
    // Predicated region
    $region14: #{tpu_custom_call.1} parent=1 // pred_check
      _
    $region15: #{tpu_custom_call.1} parent=1 // pred_check_branch
      %49 = sbr.rel (0) target = $region17
    $region16: #{tpu_custom_call.1} parent=1 // pred_region
      %s51 = ssub.s32 1024, 1024
      %52 = vsyncadd [#allocation6], %s51
      %s53 = sshll.u32 [#allocation7], 4
      %s54 = int_to_ptr.vmem [resolvable:$true] %s53
      %59 = dma.hbm_to_vmem [thread:$0]  %s3, 1024, %s54, [#allocation6], 64, 64, 4
    $region17: #{tpu_custom_call.1} parent=1 // pred_fallthru
      _
    // Predicated region
    $region18: #{tpu_custom_call.1} parent=1 // pred_check
      _
    $region19: #{tpu_custom_call.1} parent=1 // pred_check_branch
      %61 = sbr.rel (0) target = $region21
    $region20: #{tpu_custom_call.1} parent=1 // pred_region
      _
    $region21: #{tpu_custom_call.1} parent=1 // pred_fallthru
      _
    // Predicated region
    $region22: #{tpu_custom_call.1} parent=1 // pred_check
      _
    $region23: #{tpu_custom_call.1} parent=1 // pred_check_branch
      %63 = sbr.rel (0) target = $region25
    $region24: #{tpu_custom_call.1} parent=1 // pred_region
      %s65 = ssub.s32 1024, 1024
      %66 = vsyncadd [#allocation9], %s65
      %s67 = sshll.u32 [#allocation8], 4
      %s68 = int_to_ptr.vmem [resolvable:$true] %s67
      %73 = dma.hbm_to_vmem [thread:$0]  %s5, 1024, %s68, [#allocation9], 64, 64, 4
    $region25: #{tpu_custom_call.1} parent=1 // pred_fallthru
      _
    // Predicated region
    $region26: #{tpu_custom_call.1} parent=1 // pred_check
      _
    $region27: #{tpu_custom_call.1} parent=1 // pred_check_branch
      %75 = sbr.rel (0) target = $region29
    $region28: #{tpu_custom_call.1} parent=1 // pred_region
      %s77 = ssub.s32 1024, 1024
      %78 = vsyncadd [#allocation9], %s77
      %s79 = sshll.u32 [#allocation10], 4
      %s80 = int_to_ptr.vmem [resolvable:$true] %s79
      %85 = dma.hbm_to_vmem [thread:$0]  %s6, 1024, %s80, [#allocation9], 64, 64, 4
    $region29: #{tpu_custom_call.1} parent=1 // pred_fallthru
      _
    // Predicated region
    $region30: #{tpu_custom_call.1} parent=1 // pred_check
      _
    $region31: #{tpu_custom_call.1} parent=1 // pred_check_branch
      %87 = sbr.rel (0) target = $region33
    $region32: #{tpu_custom_call.1} parent=1 // pred_region
      _
    $region33: #{tpu_custom_call.1} parent=1 // pred_fallthru
      _
    // Predicated region
    $region34: #{tpu_custom_call.1} parent=1 // pred_check
      _
    $region35: #{tpu_custom_call.1} parent=1 // pred_check_branch
      %89 = sbr.rel (0) target = $region37
    $region36: #{tpu_custom_call.1} parent=1 // pred_region
      %s91 = ssub.s32 1024, 1024
      %92 = vsyncadd [#allocation12], %s91
      %s93 = sshll.u32 [#allocation11], 4
      %s94 = int_to_ptr.vmem [resolvable:$true] %s93
      %99 = dma.hbm_to_vmem [thread:$0]  %s8, 1024, %s94, [#allocation12], 64, 64, 4
    $region37: #{tpu_custom_call.1} parent=1 // pred_fallthru
      _
    // Predicated region
    $region38: #{tpu_custom_call.1} parent=1 // pred_check
      _
    $region39: #{tpu_custom_call.1} parent=1 // pred_check_branch
      %101 = sbr.rel (0) target = $region41
    $region40: #{tpu_custom_call.1} parent=1 // pred_region
      _
    $region41: #{tpu_custom_call.1} parent=1 // pred_fallthru
      _
    // Predicated region
    $region42: #{tpu_custom_call.1} parent=1 // pred_check
      _
    $region43: #{tpu_custom_call.1} parent=1 // pred_check_branch
      %103 = sbr.rel (0) target = $region45
    $region44: #{tpu_custom_call.1} parent=1 // pred_region
      %s105 = ssub.s32 1024, 1024
      %106 = vsyncadd [#allocation12], %s105
      %s107 = sshll.u32 [#allocation13], 4
      %s108 = int_to_ptr.vmem [resolvable:$true] %s107
      %113 = dma.hbm_to_vmem [thread:$0]  %s10, 1024, %s108, [#allocation12], 64, 64, 4
    $region45: #{tpu_custom_call.1} parent=1 // pred_fallthru
      _
    // Predicated region
    $region46: #{tpu_custom_call.1} parent=1 // pred_check
      _
    $region47: #{tpu_custom_call.1} parent=1 // pred_check_branch
      %115 = sbr.rel (0) target = $region49
    $region48: #{tpu_custom_call.1} parent=1 // pred_region
      _
    $region49: #{tpu_custom_call.1} parent=1 // pred_fallthru
      _
    // Predicated region
    $region50: #{tpu_custom_call.1} parent=1 // pred_check
      _
    $region51: #{tpu_custom_call.1} parent=1 // pred_check_branch
      %117 = sbr.rel (0) target = $region53
    $region52: #{tpu_custom_call.1} parent=1 // pred_region
      %118 = dma.done [#allocation3], 1024
    $region53: #{tpu_custom_call.1} parent=1 // pred_fallthru
      _
    // Predicated region
    $region54: #{tpu_custom_call.1} parent=1 // pred_check
      _
    $region55: #{tpu_custom_call.1} parent=1 // pred_check_branch
      %120 = sbr.rel (0) target = $region57
    $region56: #{tpu_custom_call.1} parent=1 // pred_region
      %121 = dma.done [#allocation6], 1024
    $region57: #{tpu_custom_call.1} parent=1 // pred_fallthru
      _
    // Predicated region
    $region58: #{tpu_custom_call.1} parent=1 // pred_check
      _
    $region59: #{tpu_custom_call.1} parent=1 // pred_check_branch
      %123 = sbr.rel (0) target = $region61
    $region60: #{tpu_custom_call.1} parent=1 // pred_region
      %124 = dma.done [#allocation6], 1024
    $region61: #{tpu_custom_call.1} parent=1 // pred_fallthru
      _
    // Predicated region
    $region62: #{tpu_custom_call.1} parent=1 // pred_check
      _
    $region63: #{tpu_custom_call.1} parent=1 // pred_check_branch
      %126 = sbr.rel (0) target = $region65
    $region64: #{tpu_custom_call.1} parent=1 // pred_region
      %127 = dma.done [#allocation9], 1024
    $region65: #{tpu_custom_call.1} parent=1 // pred_fallthru
      _
    // Predicated region
    $region66: #{tpu_custom_call.1} parent=1 // pred_check
      _
    $region67: #{tpu_custom_call.1} parent=1 // pred_check_branch
      %129 = sbr.rel (0) target = $region69
    $region68: #{tpu_custom_call.1} parent=1 // pred_region
      %130 = dma.done [#allocation9], 1024
    $region69: #{tpu_custom_call.1} parent=1 // pred_fallthru
      _
    // Predicated region
    $region70: #{tpu_custom_call.1} parent=1 // pred_check
      _
    $region71: #{tpu_custom_call.1} parent=1 // pred_check_branch
      %132 = sbr.rel (0) target = $region73
    $region72: #{tpu_custom_call.1} parent=1 // pred_region
      %133 = dma.done [#allocation12], 1024
    $region73: #{tpu_custom_call.1} parent=1 // pred_fallthru
      _
    // Predicated region
    $region74: #{tpu_custom_call.1} parent=1 // pred_check
      _
    $region75: #{tpu_custom_call.1} parent=1 // pred_check_branch
      %135 = sbr.rel (0) target = $region77
    $region76: #{tpu_custom_call.1} parent=1 // pred_region
      %136 = dma.done [#allocation12], 1024
    $region77: #{tpu_custom_call.1} parent=1 // pred_fallthru
      _
    %v138 = vld [vmem:[#allocation2] sm:$0xf]
    %v139 = vld [vmem:[#allocation2 + $0x4] sm:$0xf]
    %v140 = vld [vmem:[#allocation2 + $0x8] sm:$0xf]
    %v141 = vld [vmem:[#allocation2 + $0xc] sm:$0xf]
    %v142 = vld [vmem:[#allocation2 + $0x10] sm:$0xf]
    %v143 = vld [vmem:[#allocation2 + $0x14] sm:$0xf]
    %v144 = vld [vmem:[#allocation2 + $0x18] sm:$0xf]
    %v145 = vld [vmem:[#allocation2 + $0x1c] sm:$0xf]
    %v146 = vld [vmem:[#allocation2 + $0x20] sm:$0xf]
    %v147 = vld [vmem:[#allocation2 + $0x24] sm:$0xf]
    %v148 = vld [vmem:[#allocation2 + $0x28] sm:$0xf]
    %v149 = vld [vmem:[#allocation2 + $0x2c] sm:$0xf]
    %v150 = vld [vmem:[#allocation2 + $0x30] sm:$0xf]
    %v151 = vld [vmem:[#allocation2 + $0x34] sm:$0xf]
    %v152 = vld [vmem:[#allocation2 + $0x38] sm:$0xf]
    %v153 = vld [vmem:[#allocation2 + $0x3c] sm:$0xf]
    %v154 = vld [vmem:[#allocation5] sm:$0xf]
    %v155 = vld [vmem:[#allocation5 + $0x4] sm:$0xf]
    %v156 = vld [vmem:[#allocation5 + $0x8] sm:$0xf]
    %v157 = vld [vmem:[#allocation5 + $0xc] sm:$0xf]
    %v158 = vld [vmem:[#allocation5 + $0x10] sm:$0xf]
    %v159 = vld [vmem:[#allocation5 + $0x14] sm:$0xf]
    %v160 = vld [vmem:[#allocation5 + $0x18] sm:$0xf]
    %v161 = vld [vmem:[#allocation5 + $0x1c] sm:$0xf]
    %v162 = vld [vmem:[#allocation5 + $0x20] sm:$0xf]
    %v163 = vld [vmem:[#allocation5 + $0x24] sm:$0xf]
    %v164 = vld [vmem:[#allocation5 + $0x28] sm:$0xf]
    %v165 = vld [vmem:[#allocation5 + $0x2c] sm:$0xf]
    %v166 = vld [vmem:[#allocation5 + $0x30] sm:$0xf]
    %v167 = vld [vmem:[#allocation5 + $0x34] sm:$0xf]
    %v168 = vld [vmem:[#allocation5 + $0x38] sm:$0xf]
    %v169 = vld [vmem:[#allocation5 + $0x3c] sm:$0xf]
    %v170 = vld [vmem:[%s2] sm:$0x1]
    %v172 = vlaneseq
    %v173 = vshrl.u32 %v172, 7
    %v174 = vsub.s32 0, %v173
    %v175 = vrot.slane %v170, %v174
    %v193 = vunpack.c.l.b16 %v138
    %v194 = vunpack.c.l.b16 %v139
    %v195 = vunpack.c.l.b16 %v140
    %v196 = vunpack.c.l.b16 %v141
    %v197 = vunpack.c.l.b16 %v142
    %v198 = vunpack.c.l.b16 %v143
    %v199 = vunpack.c.l.b16 %v144
    %v200 = vunpack.c.l.b16 %v145
    %v201 = vunpack.c.l.b16 %v146
    %v202 = vunpack.c.l.b16 %v147
    %v203 = vunpack.c.l.b16 %v148
    %v204 = vunpack.c.l.b16 %v149
    %v205 = vunpack.c.l.b16 %v150
    %v206 = vunpack.c.l.b16 %v151
    %v207 = vunpack.c.l.b16 %v152
    %v208 = vunpack.c.l.b16 %v153
    %v209 = vpack.c.b16 %v194, %v193
    %v210 = vpack.c.b16 %v196, %v195
    %v211 = vpack.c.b16 %v198, %v197
    %v212 = vpack.c.b16 %v200, %v199
    %v213 = vpack.c.b16 %v202, %v201
    %v214 = vpack.c.b16 %v204, %v203
    %v215 = vpack.c.b16 %v206, %v205
    %v216 = vpack.c.b16 %v208, %v207
    %v241 = vunpack.c.l.b16 %v154
    %v242 = vunpack.c.l.b16 %v155
    %v243 = vunpack.c.l.b16 %v156
    %v244 = vunpack.c.l.b16 %v157
    %v245 = vunpack.c.l.b16 %v158
    %v246 = vunpack.c.l.b16 %v159
    %v247 = vunpack.c.l.b16 %v160
    %v248 = vunpack.c.l.b16 %v161
    %v249 = vunpack.c.l.b16 %v162
    %v250 = vunpack.c.l.b16 %v163
    %v251 = vunpack.c.l.b16 %v164
    %v252 = vunpack.c.l.b16 %v165
    %v253 = vunpack.c.l.b16 %v166
    %v254 = vunpack.c.l.b16 %v167
    %v255 = vunpack.c.l.b16 %v168
    %v256 = vunpack.c.l.b16 %v169
    %v257 = vpack.c.b16 %v242, %v241
    %v258 = vpack.c.b16 %v244, %v243
    %v259 = vpack.c.b16 %v246, %v245
    %v260 = vpack.c.b16 %v248, %v247
    %v261 = vpack.c.b16 %v250, %v249
    %v262 = vpack.c.b16 %v252, %v251
    %v263 = vpack.c.b16 %v254, %v253
    %v264 = vpack.c.b16 %v256, %v255
    %273 = vmatprep.subr.bf16.mxu0 0
    %274 = vmatpush1.bf16.msra.mxu0 %v257
    %275 = vmatprep.subr.bf16.mxu0 0
    %276 = vmatpush1.bf16.msra.mxu0 %v258
    %277 = vmatprep.subr.bf16.mxu0 0
    %278 = vmatpush1.bf16.msra.mxu0 %v259
    %279 = vmatprep.subr.bf16.mxu0 0
    %280 = vmatpush1.bf16.msra.mxu0 %v260
    %281 = vmatprep.subr.bf16.mxu0 0
    %282 = vmatpush1.bf16.msra.mxu0 %v261
    %283 = vmatprep.subr.bf16.mxu0 0
    %284 = vmatpush1.bf16.msra.mxu0 %v262
    %285 = vmatprep.subr.bf16.mxu0 0
    %286 = vmatpush1.bf16.msra.mxu0 %v263
    %287 = vmatprep.subr.bf16.mxu0 0
    %288 = vmatpush1.bf16.msra.mxu0 %v264
    %289 = vmatprep.subr.bf16.mxu0 0
    %290 = vmatpush1.bf16.msra.mxu0 0
    %291 = vmatprep.subr.bf16.mxu0 0
    %292 = vmatpush1.bf16.msra.mxu0 0
    %293 = vmatprep.subr.bf16.mxu0 0
    %294 = vmatpush1.bf16.msra.mxu0 0
    %295 = vmatprep.subr.bf16.mxu0 0
    %296 = vmatpush1.bf16.msra.mxu0 0
    %297 = vmatprep.subr.bf16.mxu0 0
    %298 = vmatpush1.bf16.msra.mxu0 0
    %299 = vmatprep.subr.bf16.mxu0 0
    %300 = vmatpush1.bf16.msra.mxu0 0
    %301 = vmatprep.subr.bf16.mxu0 0
    %302 = vmatpush1.bf16.msra.mxu0 0
    %303 = vmatprep.subr.bf16.mxu0 0
    %304 = vmatpush1.bf16.msra.mxu0 0
    %305 = vmatprep.mubr.bf16.mxu0 0
    %306 = vmatmul.mubr.bf16.gmra.mrb[0].mxu0 %v209
    %v307 = vpop.f32.mrb[0].mxu0
    %v308 = vadd.f32 %v175, %v307
    %v309 = vpop.f32.mrb[0].mxu0
    %v310 = vpop.f32.mrb[0].mxu0
    %v311 = vadd.f32 %v175, %v310
    %v312 = vpop.f32.mrb[0].mxu0
    %313 = vmatprep.mubr.bf16.mxu0 0
    %314 = vmatmul.mubr.bf16.gmra.mrb[0].mxu0 %v210
    %v315 = vpop.f32.mrb[0].mxu0
    %v316 = vadd.f32 %v175, %v315
    %v317 = vpop.f32.mrb[0].mxu0
    %v318 = vpop.f32.mrb[0].mxu0
    %v319 = vadd.f32 %v175, %v318
    %v320 = vpop.f32.mrb[0].mxu0
    %321 = vmatprep.mubr.bf16.mxu0 0
    %322 = vmatmul.mubr.bf16.gmra.mrb[0].mxu0 %v211
    %v323 = vpop.f32.mrb[0].mxu0
    %v324 = vadd.f32 %v175, %v323
    %v325 = vpop.f32.mrb[0].mxu0
    %v326 = vpop.f32.mrb[0].mxu0
    %v327 = vadd.f32 %v175, %v326
    %v328 = vpop.f32.mrb[0].mxu0
    %329 = vmatprep.mubr.bf16.mxu0 0
    %330 = vmatmul.mubr.bf16.gmra.mrb[0].mxu0 %v212
    %v331 = vpop.f32.mrb[0].mxu0
    %v332 = vadd.f32 %v175, %v331
    %v333 = vpop.f32.mrb[0].mxu0
    %v334 = vpop.f32.mrb[0].mxu0
    %v335 = vadd.f32 %v175, %v334
    %v336 = vpop.f32.mrb[0].mxu0
    %337 = vmatprep.mubr.bf16.mxu0 0
    %338 = vmatmul.mubr.bf16.gmra.mrb[0].mxu0 %v213
    %v339 = vpop.f32.mrb[0].mxu0
    %v340 = vadd.f32 %v175, %v339
    %v341 = vpop.f32.mrb[0].mxu0
    %v342 = vpop.f32.mrb[0].mxu0
    %v343 = vadd.f32 %v175, %v342
    %v344 = vpop.f32.mrb[0].mxu0
    %345 = vmatprep.mubr.bf16.mxu0 0
    %346 = vmatmul.mubr.bf16.gmra.mrb[0].mxu0 %v214
    %v347 = vpop.f32.mrb[0].mxu0
    %v348 = vadd.f32 %v175, %v347
    %v349 = vpop.f32.mrb[0].mxu0
    %v350 = vpop.f32.mrb[0].mxu0
    %v351 = vadd.f32 %v175, %v350
    %v352 = vpop.f32.mrb[0].mxu0
    %353 = vmatprep.mubr.bf16.mxu0 0
    %354 = vmatmul.mubr.bf16.gmra.mrb[0].mxu0 %v215
    %v355 = vpop.f32.mrb[0].mxu0
    %v356 = vadd.f32 %v175, %v355
    %v357 = vpop.f32.mrb[0].mxu0
    %v358 = vpop.f32.mrb[0].mxu0
    %v359 = vadd.f32 %v175, %v358
    %v360 = vpop.f32.mrb[0].mxu0
    %361 = vmatprep.mubr.bf16.mxu0 0
    %362 = vmatmul.mubr.bf16.gmra.mrb[0].mxu0 %v216
    %v363 = vpop.f32.mrb[0].mxu0
    %v364 = vadd.f32 %v175, %v363
    %v365 = vpop.f32.mrb[0].mxu0
    %v366 = vpop.f32.mrb[0].mxu0
    %v367 = vadd.f32 %v175, %v366
    %v368 = vpop.f32.mrb[0].mxu0
    %369 = vdwg.mxu0
    %v370 = vmax.f32 %v308, 0.0
    %v371 = vmax.f32 %v311, 0.0
    %v372 = vmax.f32 %v316, 0.0
    %v373 = vmax.f32 %v319, 0.0
    %v374 = vmax.f32 %v324, 0.0
    %v375 = vmax.f32 %v327, 0.0
    %v376 = vmax.f32 %v332, 0.0
    %v377 = vmax.f32 %v335, 0.0
    %v378 = vmax.f32 %v340, 0.0
    %v379 = vmax.f32 %v343, 0.0
    %v380 = vmax.f32 %v348, 0.0
    %v381 = vmax.f32 %v351, 0.0
    %v382 = vmax.f32 %v356, 0.0
    %v383 = vmax.f32 %v359, 0.0
    %v384 = vmax.f32 %v364, 0.0
    %v385 = vmax.f32 %v367, 0.0
    %v386 = vpack.c.bf16 %v371, %v370
    %v387 = vpack.c.bf16 %v373, %v372
    %v388 = vpack.c.bf16 %v375, %v374
    %v389 = vpack.c.bf16 %v377, %v376
    %v390 = vpack.c.bf16 %v379, %v378
    %v391 = vpack.c.bf16 %v381, %v380
    %v392 = vpack.c.bf16 %v383, %v382
    %v393 = vpack.c.bf16 %v385, %v384
    %v394 = vld [vmem:[#allocation7] sm:$0xf]
    %v395 = vld [vmem:[#allocation7 + $0x4] sm:$0xf]
    %v396 = vld [vmem:[#allocation7 + $0x8] sm:$0xf]
    %v397 = vld [vmem:[#allocation7 + $0xc] sm:$0xf]
    %v398 = vld [vmem:[#allocation7 + $0x10] sm:$0xf]
    %v399 = vld [vmem:[#allocation7 + $0x14] sm:$0xf]
    %v400 = vld [vmem:[#allocation7 + $0x18] sm:$0xf]
    %v401 = vld [vmem:[#allocation7 + $0x1c] sm:$0xf]
    %v402 = vld [vmem:[#allocation7 + $0x20] sm:$0xf]
    %v403 = vld [vmem:[#allocation7 + $0x24] sm:$0xf]
    %v404 = vld [vmem:[#allocation7 + $0x28] sm:$0xf]
    %v405 = vld [vmem:[#allocation7 + $0x2c] sm:$0xf]
    %v406 = vld [vmem:[#allocation7 + $0x30] sm:$0xf]
    %v407 = vld [vmem:[#allocation7 + $0x34] sm:$0xf]
    %v408 = vld [vmem:[#allocation7 + $0x38] sm:$0xf]
    %v409 = vld [vmem:[#allocation7 + $0x3c] sm:$0xf]
    %v410 = vld [vmem:[%s4] sm:$0x1]
    %v412 = vlaneseq
    %v413 = vshrl.u32 %v412, 7
    %v414 = vsub.s32 0, %v413
    %v415 = vrot.slane %v410, %v414
    %v433 = vunpack.c.l.b16 %v394
    %v434 = vunpack.c.l.b16 %v395
    %v435 = vunpack.c.l.b16 %v396
    %v436 = vunpack.c.l.b16 %v397
    %v437 = vunpack.c.l.b16 %v398
    %v438 = vunpack.c.l.b16 %v399
    %v439 = vunpack.c.l.b16 %v400
    %v440 = vunpack.c.l.b16 %v401
    %v441 = vunpack.c.l.b16 %v402
    %v442 = vunpack.c.l.b16 %v403
    %v443 = vunpack.c.l.b16 %v404
    %v444 = vunpack.c.l.b16 %v405
    %v445 = vunpack.c.l.b16 %v406
    %v446 = vunpack.c.l.b16 %v407
    %v447 = vunpack.c.l.b16 %v408
    %v448 = vunpack.c.l.b16 %v409
    %v449 = vpack.c.b16 %v434, %v433
    %v450 = vpack.c.b16 %v436, %v435
    %v451 = vpack.c.b16 %v438, %v437
    %v452 = vpack.c.b16 %v440, %v439
    %v453 = vpack.c.b16 %v442, %v441
    %v454 = vpack.c.b16 %v444, %v443
    %v455 = vpack.c.b16 %v446, %v445
    %v456 = vpack.c.b16 %v448, %v447
    %465 = vmatprep.subr.bf16.mxu0 0
    %466 = vmatpush1.bf16.msra.mxu0 %v449
    %467 = vmatprep.subr.bf16.mxu0 0
    %468 = vmatpush1.bf16.msra.mxu0 %v450
    %469 = vmatprep.subr.bf16.mxu0 0
    %470 = vmatpush1.bf16.msra.mxu0 %v451
    %471 = vmatprep.subr.bf16.mxu0 0
    %472 = vmatpush1.bf16.msra.mxu0 %v452
    %473 = vmatprep.subr.bf16.mxu0 0
    %474 = vmatpush1.bf16.msra.mxu0 %v453
    %475 = vmatprep.subr.bf16.mxu0 0
    %476 = vmatpush1.bf16.msra.mxu0 %v454
    %477 = vmatprep.subr.bf16.mxu0 0
    %478 = vmatpush1.bf16.msra.mxu0 %v455
    %479 = vmatprep.subr.bf16.mxu0 0
    %480 = vmatpush1.bf16.msra.mxu0 %v456
    %481 = vmatprep.subr.bf16.mxu0 0
    %482 = vmatpush1.bf16.msra.mxu0 0
    %483 = vmatprep.subr.bf16.mxu0 0
    %484 = vmatpush1.bf16.msra.mxu0 0
    %485 = vmatprep.subr.bf16.mxu0 0
    %486 = vmatpush1.bf16.msra.mxu0 0
    %487 = vmatprep.subr.bf16.mxu0 0
    %488 = vmatpush1.bf16.msra.mxu0 0
    %489 = vmatprep.subr.bf16.mxu0 0
    %490 = vmatpush1.bf16.msra.mxu0 0
    %491 = vmatprep.subr.bf16.mxu0 0
    %492 = vmatpush1.bf16.msra.mxu0 0
    %493 = vmatprep.subr.bf16.mxu0 0
    %494 = vmatpush1.bf16.msra.mxu0 0
    %495 = vmatprep.subr.bf16.mxu0 0
    %496 = vmatpush1.bf16.msra.mxu0 0
    %497 = vmatprep.mubr.bf16.mxu0 0
    %498 = vmatmul.mubr.bf16.gmra.mrb[0].mxu0 %v386
    %v499 = vpop.f32.mrb[0].mxu0
    %v500 = vadd.f32 %v415, %v499
    %v501 = vpop.f32.mrb[0].mxu0
    %v502 = vpop.f32.mrb[0].mxu0
    %v503 = vadd.f32 %v415, %v502
    %v504 = vpop.f32.mrb[0].mxu0
    %505 = vmatprep.mubr.bf16.mxu0 0
    %506 = vmatmul.mubr.bf16.gmra.mrb[0].mxu0 %v387
    %v507 = vpop.f32.mrb[0].mxu0
    %v508 = vadd.f32 %v415, %v507
    %v509 = vpop.f32.mrb[0].mxu0
    %v510 = vpop.f32.mrb[0].mxu0
    %v511 = vadd.f32 %v415, %v510
    %v512 = vpop.f32.mrb[0].mxu0
    %513 = vmatprep.mubr.bf16.mxu0 0
    %514 = vmatmul.mubr.bf16.gmra.mrb[0].mxu0 %v388
    %v515 = vpop.f32.mrb[0].mxu0
    %v516 = vadd.f32 %v415, %v515
    %v517 = vpop.f32.mrb[0].mxu0
    %v518 = vpop.f32.mrb[0].mxu0
    %v519 = vadd.f32 %v415, %v518
    %v520 = vpop.f32.mrb[0].mxu0
    %521 = vmatprep.mubr.bf16.mxu0 0
    %522 = vmatmul.mubr.bf16.gmra.mrb[0].mxu0 %v389
    %v523 = vpop.f32.mrb[0].mxu0
    %v524 = vadd.f32 %v415, %v523
    %v525 = vpop.f32.mrb[0].mxu0
    %v526 = vpop.f32.mrb[0].mxu0
    %v527 = vadd.f32 %v415, %v526
    %v528 = vpop.f32.mrb[0].mxu0
    %529 = vmatprep.mubr.bf16.mxu0 0
    %530 = vmatmul.mubr.bf16.gmra.mrb[0].mxu0 %v390
    %v531 = vpop.f32.mrb[0].mxu0
    %v532 = vadd.f32 %v415, %v531
    %v533 = vpop.f32.mrb[0].mxu0
    %v534 = vpop.f32.mrb[0].mxu0
    %v535 = vadd.f32 %v415, %v534
    %v536 = vpop.f32.mrb[0].mxu0
    %537 = vmatprep.mubr.bf16.mxu0 0
    %538 = vmatmul.mubr.bf16.gmra.mrb[0].mxu0 %v391
    %v539 = vpop.f32.mrb[0].mxu0
    %v540 = vadd.f32 %v415, %v539
    %v541 = vpop.f32.mrb[0].mxu0
    %v542 = vpop.f32.mrb[0].mxu0
    %v543 = vadd.f32 %v415, %v542
    %v544 = vpop.f32.mrb[0].mxu0
    %545 = vmatprep.mubr.bf16.mxu0 0
    %546 = vmatmul.mubr.bf16.gmra.mrb[0].mxu0 %v392
    %v547 = vpop.f32.mrb[0].mxu0
    %v548 = vadd.f32 %v415, %v547
    %v549 = vpop.f32.mrb[0].mxu0
    %v550 = vpop.f32.mrb[0].mxu0
    %v551 = vadd.f32 %v415, %v550
    %v552 = vpop.f32.mrb[0].mxu0
    %553 = vmatprep.mubr.bf16.mxu0 0
    %554 = vmatmul.mubr.bf16.gmra.mrb[0].mxu0 %v393
    %v555 = vpop.f32.mrb[0].mxu0
    %v556 = vadd.f32 %v415, %v555
    %v557 = vpop.f32.mrb[0].mxu0
    %v558 = vpop.f32.mrb[0].mxu0
    %v559 = vadd.f32 %v415, %v558
    %v560 = vpop.f32.mrb[0].mxu0
    %561 = vdwg.mxu0
    %v562 = vmax.f32 %v500, 0.0
    %v563 = vmax.f32 %v503, 0.0
    %v564 = vmax.f32 %v508, 0.0
    %v565 = vmax.f32 %v511, 0.0
    %v566 = vmax.f32 %v516, 0.0
    %v567 = vmax.f32 %v519, 0.0
    %v568 = vmax.f32 %v524, 0.0
    %v569 = vmax.f32 %v527, 0.0
    %v570 = vmax.f32 %v532, 0.0
    %v571 = vmax.f32 %v535, 0.0
    %v572 = vmax.f32 %v540, 0.0
    %v573 = vmax.f32 %v543, 0.0
    %v574 = vmax.f32 %v548, 0.0
    %v575 = vmax.f32 %v551, 0.0
    %v576 = vmax.f32 %v556, 0.0
    %v577 = vmax.f32 %v559, 0.0
    %v578 = vpack.c.bf16 %v563, %v562
    %v579 = vpack.c.bf16 %v565, %v564
    %v580 = vpack.c.bf16 %v567, %v566
    %v581 = vpack.c.bf16 %v569, %v568
    %v582 = vpack.c.bf16 %v571, %v570
    %v583 = vpack.c.bf16 %v573, %v572
    %v584 = vpack.c.bf16 %v575, %v574
    %v585 = vpack.c.bf16 %v577, %v576
    %v586 = vld [vmem:[#allocation8] sm:$0xf]
    %v587 = vld [vmem:[#allocation8 + $0x4] sm:$0xf]
    %v588 = vld [vmem:[#allocation8 + $0x8] sm:$0xf]
    %v589 = vld [vmem:[#allocation8 + $0xc] sm:$0xf]
    %v590 = vld [vmem:[#allocation8 + $0x10] sm:$0xf]
    %v591 = vld [vmem:[#allocation8 + $0x14] sm:$0xf]
    %v592 = vld [vmem:[#allocation8 + $0x18] sm:$0xf]
    %v593 = vld [vmem:[#allocation8 + $0x1c] sm:$0xf]
    %v594 = vld [vmem:[#allocation8 + $0x20] sm:$0xf]
    %v595 = vld [vmem:[#allocation8 + $0x24] sm:$0xf]
    %v596 = vld [vmem:[#allocation8 + $0x28] sm:$0xf]
    %v597 = vld [vmem:[#allocation8 + $0x2c] sm:$0xf]
    %v598 = vld [vmem:[#allocation8 + $0x30] sm:$0xf]
    %v599 = vld [vmem:[#allocation8 + $0x34] sm:$0xf]
    %v600 = vld [vmem:[#allocation8 + $0x38] sm:$0xf]
    %v601 = vld [vmem:[#allocation8 + $0x3c] sm:$0xf]
    %v602 = vld [vmem:[#allocation10] sm:$0xf]
    %v603 = vld [vmem:[#allocation10 + $0x4] sm:$0xf]
    %v604 = vld [vmem:[#allocation10 + $0x8] sm:$0xf]
    %v605 = vld [vmem:[#allocation10 + $0xc] sm:$0xf]
    %v606 = vld [vmem:[#allocation10 + $0x10] sm:$0xf]
    %v607 = vld [vmem:[#allocation10 + $0x14] sm:$0xf]
    %v608 = vld [vmem:[#allocation10 + $0x18] sm:$0xf]
    %v609 = vld [vmem:[#allocation10 + $0x1c] sm:$0xf]
    %v610 = vld [vmem:[#allocation10 + $0x20] sm:$0xf]
    %v611 = vld [vmem:[#allocation10 + $0x24] sm:$0xf]
    %v612 = vld [vmem:[#allocation10 + $0x28] sm:$0xf]
    %v613 = vld [vmem:[#allocation10 + $0x2c] sm:$0xf]
    %v614 = vld [vmem:[#allocation10 + $0x30] sm:$0xf]
    %v615 = vld [vmem:[#allocation10 + $0x34] sm:$0xf]
    %v616 = vld [vmem:[#allocation10 + $0x38] sm:$0xf]
    %v617 = vld [vmem:[#allocation10 + $0x3c] sm:$0xf]
    %v634 = vunpack.c.l.b16 %v602
    %v635 = vunpack.c.l.b16 %v603
    %v636 = vunpack.c.l.b16 %v604
    %v637 = vunpack.c.l.b16 %v605
    %v638 = vunpack.c.l.b16 %v606
    %v639 = vunpack.c.l.b16 %v607
    %v640 = vunpack.c.l.b16 %v608
    %v641 = vunpack.c.l.b16 %v609
    %v642 = vunpack.c.l.b16 %v610
    %v643 = vunpack.c.l.b16 %v611
    %v644 = vunpack.c.l.b16 %v612
    %v645 = vunpack.c.l.b16 %v613
    %v646 = vunpack.c.l.b16 %v614
    %v647 = vunpack.c.l.b16 %v615
    %v648 = vunpack.c.l.b16 %v616
    %v649 = vunpack.c.l.b16 %v617
    %v650 = vpack.c.b16 %v635, %v634
    %v651 = vpack.c.b16 %v637, %v636
    %v652 = vpack.c.b16 %v639, %v638
    %v653 = vpack.c.b16 %v641, %v640
    %v654 = vpack.c.b16 %v643, %v642
    %v655 = vpack.c.b16 %v645, %v644
    %v656 = vpack.c.b16 %v647, %v646
    %v657 = vpack.c.b16 %v649, %v648
    %666 = vmatprep.subr.bf16.mxu0 0
    %667 = vmatpush1.bf16.msra.mxu0 %v650
    %668 = vmatprep.subr.bf16.mxu0 0
    %669 = vmatpush1.bf16.msra.mxu0 %v651
    %670 = vmatprep.subr.bf16.mxu0 0
    %671 = vmatpush1.bf16.msra.mxu0 %v652
    %672 = vmatprep.subr.bf16.mxu0 0
    %673 = vmatpush1.bf16.msra.mxu0 %v653
    %674 = vmatprep.subr.bf16.mxu0 0
    %675 = vmatpush1.bf16.msra.mxu0 %v654
    %676 = vmatprep.subr.bf16.mxu0 0
    %677 = vmatpush1.bf16.msra.mxu0 %v655
    %678 = vmatprep.subr.bf16.mxu0 0
    %679 = vmatpush1.bf16.msra.mxu0 %v656
    %680 = vmatprep.subr.bf16.mxu0 0
    %681 = vmatpush1.bf16.msra.mxu0 %v657
    %682 = vmatprep.subr.bf16.mxu0 0
    %683 = vmatpush1.bf16.msra.mxu0 0
    %684 = vmatprep.subr.bf16.mxu0 0
    %685 = vmatpush1.bf16.msra.mxu0 0
    %686 = vmatprep.subr.bf16.mxu0 0
    %687 = vmatpush1.bf16.msra.mxu0 0
    %688 = vmatprep.subr.bf16.mxu0 0
    %689 = vmatpush1.bf16.msra.mxu0 0
    %690 = vmatprep.subr.bf16.mxu0 0
    %691 = vmatpush1.bf16.msra.mxu0 0
    %692 = vmatprep.subr.bf16.mxu0 0
    %693 = vmatpush1.bf16.msra.mxu0 0
    %694 = vmatprep.subr.bf16.mxu0 0
    %695 = vmatpush1.bf16.msra.mxu0 0
    %696 = vmatprep.subr.bf16.mxu0 0
    %697 = vmatpush1.bf16.msra.mxu0 0
    %698 = vmatprep.mubr.bf16.mxu0 0
    %699 = vmatmul.mubr.bf16.gmra.mrb[0].mxu0 %v209
    %v700 = vpop.f32.mrb[0].mxu0
    %v701 = vadd.f32 0.0, %v700
    %v702 = vpop.f32.mrb[0].mxu0
    %v703 = vpop.f32.mrb[0].mxu0
    %v704 = vadd.f32 0.0, %v703
    %v705 = vpop.f32.mrb[0].mxu0
    %706 = vmatprep.mubr.bf16.mxu0 0
    %707 = vmatmul.mubr.bf16.gmra.mrb[0].mxu0 %v210
    %v708 = vpop.f32.mrb[0].mxu0
    %v709 = vadd.f32 0.0, %v708
    %v710 = vpop.f32.mrb[0].mxu0
    %v711 = vpop.f32.mrb[0].mxu0
    %v712 = vadd.f32 0.0, %v711
    %v713 = vpop.f32.mrb[0].mxu0
    %714 = vmatprep.mubr.bf16.mxu0 0
    %715 = vmatmul.mubr.bf16.gmra.mrb[0].mxu0 %v211
    %v716 = vpop.f32.mrb[0].mxu0
    %v717 = vadd.f32 0.0, %v716
    %v718 = vpop.f32.mrb[0].mxu0
    %v719 = vpop.f32.mrb[0].mxu0
    %v720 = vadd.f32 0.0, %v719
    %v721 = vpop.f32.mrb[0].mxu0
    %722 = vmatprep.mubr.bf16.mxu0 0
    %723 = vmatmul.mubr.bf16.gmra.mrb[0].mxu0 %v212
    %v724 = vpop.f32.mrb[0].mxu0
    %v725 = vadd.f32 0.0, %v724
    %v726 = vpop.f32.mrb[0].mxu0
    %v727 = vpop.f32.mrb[0].mxu0
    %v728 = vadd.f32 0.0, %v727
    %v729 = vpop.f32.mrb[0].mxu0
    %730 = vmatprep.mubr.bf16.mxu0 0
    %731 = vmatmul.mubr.bf16.gmra.mrb[0].mxu0 %v213
    %v732 = vpop.f32.mrb[0].mxu0
    %v733 = vadd.f32 0.0, %v732
    %v734 = vpop.f32.mrb[0].mxu0
    %v735 = vpop.f32.mrb[0].mxu0
    %v736 = vadd.f32 0.0, %v735
    %v737 = vpop.f32.mrb[0].mxu0
    %738 = vmatprep.mubr.bf16.mxu0 0
    %739 = vmatmul.mubr.bf16.gmra.mrb[0].mxu0 %v214
    %v740 = vpop.f32.mrb[0].mxu0
    %v741 = vadd.f32 0.0, %v740
    %v742 = vpop.f32.mrb[0].mxu0
    %v743 = vpop.f32.mrb[0].mxu0
    %v744 = vadd.f32 0.0, %v743
    %v745 = vpop.f32.mrb[0].mxu0
    %746 = vmatprep.mubr.bf16.mxu0 0
    %747 = vmatmul.mubr.bf16.gmra.mrb[0].mxu0 %v215
    %v748 = vpop.f32.mrb[0].mxu0
    %v749 = vadd.f32 0.0, %v748
    %v750 = vpop.f32.mrb[0].mxu0
    %v751 = vpop.f32.mrb[0].mxu0
    %v752 = vadd.f32 0.0, %v751
    %v753 = vpop.f32.mrb[0].mxu0
    %754 = vmatprep.mubr.bf16.mxu0 0
    %755 = vmatmul.mubr.bf16.gmra.mrb[0].mxu0 %v216
    %v756 = vpop.f32.mrb[0].mxu0
    %v757 = vadd.f32 0.0, %v756
    %v758 = vpop.f32.mrb[0].mxu0
    %v759 = vpop.f32.mrb[0].mxu0
    %v760 = vadd.f32 0.0, %v759
    %v761 = vpop.f32.mrb[0].mxu0
    %762 = vdwg.mxu0
    %v779 = vunpack.c.l.b16 %v586
    %v780 = vunpack.c.l.b16 %v587
    %v781 = vunpack.c.l.b16 %v588
    %v782 = vunpack.c.l.b16 %v589
    %v783 = vunpack.c.l.b16 %v590
    %v784 = vunpack.c.l.b16 %v591
    %v785 = vunpack.c.l.b16 %v592
    %v786 = vunpack.c.l.b16 %v593
    %v787 = vunpack.c.l.b16 %v594
    %v788 = vunpack.c.l.b16 %v595
    %v789 = vunpack.c.l.b16 %v596
    %v790 = vunpack.c.l.b16 %v597
    %v791 = vunpack.c.l.b16 %v598
    %v792 = vunpack.c.l.b16 %v599
    %v793 = vunpack.c.l.b16 %v600
    %v794 = vunpack.c.l.b16 %v601
    %v795 = vpack.c.b16 %v780, %v779
    %v796 = vpack.c.b16 %v782, %v781
    %v797 = vpack.c.b16 %v784, %v783
    %v798 = vpack.c.b16 %v786, %v785
    %v799 = vpack.c.b16 %v788, %v787
    %v800 = vpack.c.b16 %v790, %v789
    %v801 = vpack.c.b16 %v792, %v791
    %v802 = vpack.c.b16 %v794, %v793
    %811 = vmatprep.subr.bf16.mxu0 0
    %812 = vmatpush1.bf16.msra.mxu0 %v795
    %813 = vmatprep.subr.bf16.mxu0 0
    %814 = vmatpush1.bf16.msra.mxu0 %v796
    %815 = vmatprep.subr.bf16.mxu0 0
    %816 = vmatpush1.bf16.msra.mxu0 %v797
    %817 = vmatprep.subr.bf16.mxu0 0
    %818 = vmatpush1.bf16.msra.mxu0 %v798
    %819 = vmatprep.subr.bf16.mxu0 0
    %820 = vmatpush1.bf16.msra.mxu0 %v799
    %821 = vmatprep.subr.bf16.mxu0 0
    %822 = vmatpush1.bf16.msra.mxu0 %v800
    %823 = vmatprep.subr.bf16.mxu0 0
    %824 = vmatpush1.bf16.msra.mxu0 %v801
    %825 = vmatprep.subr.bf16.mxu0 0
    %826 = vmatpush1.bf16.msra.mxu0 %v802
    %827 = vmatprep.subr.bf16.mxu0 0
    %828 = vmatpush1.bf16.msra.mxu0 0
    %829 = vmatprep.subr.bf16.mxu0 0
    %830 = vmatpush1.bf16.msra.mxu0 0
    %831 = vmatprep.subr.bf16.mxu0 0
    %832 = vmatpush1.bf16.msra.mxu0 0
    %833 = vmatprep.subr.bf16.mxu0 0
    %834 = vmatpush1.bf16.msra.mxu0 0
    %835 = vmatprep.subr.bf16.mxu0 0
    %836 = vmatpush1.bf16.msra.mxu0 0
    %837 = vmatprep.subr.bf16.mxu0 0
    %838 = vmatpush1.bf16.msra.mxu0 0
    %839 = vmatprep.subr.bf16.mxu0 0
    %840 = vmatpush1.bf16.msra.mxu0 0
    %841 = vmatprep.subr.bf16.mxu0 0
    %842 = vmatpush1.bf16.msra.mxu0 0
    %843 = vmatprep.mubr.bf16.mxu0 0
    %844 = vmatmul.mubr.bf16.gmra.mrb[0].mxu0 %v578
    %v845 = vpop.f32.mrb[0].mxu0
    %v846 = vadd.f32 %v701, %v845
    %v847 = vpop.f32.mrb[0].mxu0
    %v848 = vpop.f32.mrb[0].mxu0
    %v849 = vadd.f32 %v704, %v848
    %v850 = vpop.f32.mrb[0].mxu0
    %851 = vmatprep.mubr.bf16.mxu0 0
    %852 = vmatmul.mubr.bf16.gmra.mrb[0].mxu0 %v579
    %v853 = vpop.f32.mrb[0].mxu0
    %v854 = vadd.f32 %v709, %v853
    %v855 = vpop.f32.mrb[0].mxu0
    %v856 = vpop.f32.mrb[0].mxu0
    %v857 = vadd.f32 %v712, %v856
    %v858 = vpop.f32.mrb[0].mxu0
    %859 = vmatprep.mubr.bf16.mxu0 0
    %860 = vmatmul.mubr.bf16.gmra.mrb[0].mxu0 %v580
    %v861 = vpop.f32.mrb[0].mxu0
    %v862 = vadd.f32 %v717, %v861
    %v863 = vpop.f32.mrb[0].mxu0
    %v864 = vpop.f32.mrb[0].mxu0
    %v865 = vadd.f32 %v720, %v864
    %v866 = vpop.f32.mrb[0].mxu0
    %867 = vmatprep.mubr.bf16.mxu0 0
    %868 = vmatmul.mubr.bf16.gmra.mrb[0].mxu0 %v581
    %v869 = vpop.f32.mrb[0].mxu0
    %v870 = vadd.f32 %v725, %v869
    %v871 = vpop.f32.mrb[0].mxu0
    %v872 = vpop.f32.mrb[0].mxu0
    %v873 = vadd.f32 %v728, %v872
    %v874 = vpop.f32.mrb[0].mxu0
    %875 = vmatprep.mubr.bf16.mxu0 0
    %876 = vmatmul.mubr.bf16.gmra.mrb[0].mxu0 %v582
    %v877 = vpop.f32.mrb[0].mxu0
    %v878 = vadd.f32 %v733, %v877
    %v879 = vpop.f32.mrb[0].mxu0
    %v880 = vpop.f32.mrb[0].mxu0
    %v881 = vadd.f32 %v736, %v880
    %v882 = vpop.f32.mrb[0].mxu0
    %883 = vmatprep.mubr.bf16.mxu0 0
    %884 = vmatmul.mubr.bf16.gmra.mrb[0].mxu0 %v583
    %v885 = vpop.f32.mrb[0].mxu0
    %v886 = vadd.f32 %v741, %v885
    %v887 = vpop.f32.mrb[0].mxu0
    %v888 = vpop.f32.mrb[0].mxu0
    %v889 = vadd.f32 %v744, %v888
    %v890 = vpop.f32.mrb[0].mxu0
    %891 = vmatprep.mubr.bf16.mxu0 0
    %892 = vmatmul.mubr.bf16.gmra.mrb[0].mxu0 %v584
    %v893 = vpop.f32.mrb[0].mxu0
    %v894 = vadd.f32 %v749, %v893
    %v895 = vpop.f32.mrb[0].mxu0
    %v896 = vpop.f32.mrb[0].mxu0
    %v897 = vadd.f32 %v752, %v896
    %v898 = vpop.f32.mrb[0].mxu0
    %899 = vmatprep.mubr.bf16.mxu0 0
    %900 = vmatmul.mubr.bf16.gmra.mrb[0].mxu0 %v585
    %v901 = vpop.f32.mrb[0].mxu0
    %v902 = vadd.f32 %v757, %v901
    %v903 = vpop.f32.mrb[0].mxu0
    %v904 = vpop.f32.mrb[0].mxu0
    %v905 = vadd.f32 %v760, %v904
    %v906 = vpop.f32.mrb[0].mxu0
    %907 = vdwg.mxu0
    %v908 = vld [vmem:[%s7] sm:$0x1]
    %v910 = vlaneseq
    %v911 = vshrl.u32 %v910, 7
    %v912 = vsub.s32 0, %v911
    %v913 = vrot.slane %v908, %v912
    %v915 = vadd.f32 %v846, %v913
    %v916 = vadd.f32 %v849, %v913
    %v917 = vadd.f32 %v854, %v913
    %v918 = vadd.f32 %v857, %v913
    %v919 = vadd.f32 %v862, %v913
    %v920 = vadd.f32 %v865, %v913
    %v921 = vadd.f32 %v870, %v913
    %v922 = vadd.f32 %v873, %v913
    %v923 = vadd.f32 %v878, %v913
    %v924 = vadd.f32 %v881, %v913
    %v925 = vadd.f32 %v886, %v913
    %v926 = vadd.f32 %v889, %v913
    %v927 = vadd.f32 %v894, %v913
    %v928 = vadd.f32 %v897, %v913
    %v929 = vadd.f32 %v902, %v913
    %v930 = vadd.f32 %v905, %v913
    %v931 = vmax.f32 %v915, 0.0
    %v932 = vmax.f32 %v916, 0.0
    %v933 = vmax.f32 %v917, 0.0
    %v934 = vmax.f32 %v918, 0.0
    %v935 = vmax.f32 %v919, 0.0
    %v936 = vmax.f32 %v920, 0.0
    %v937 = vmax.f32 %v921, 0.0
    %v938 = vmax.f32 %v922, 0.0
    %v939 = vmax.f32 %v923, 0.0
    %v940 = vmax.f32 %v924, 0.0
    %v941 = vmax.f32 %v925, 0.0
    %v942 = vmax.f32 %v926, 0.0
    %v943 = vmax.f32 %v927, 0.0
    %v944 = vmax.f32 %v928, 0.0
    %v945 = vmax.f32 %v929, 0.0
    %v946 = vmax.f32 %v930, 0.0
    %v947 = vpack.c.bf16 %v932, %v931
    %v948 = vpack.c.bf16 %v934, %v933
    %v949 = vpack.c.bf16 %v936, %v935
    %v950 = vpack.c.bf16 %v938, %v937
    %v951 = vpack.c.bf16 %v940, %v939
    %v952 = vpack.c.bf16 %v942, %v941
    %v953 = vpack.c.bf16 %v944, %v943
    %v954 = vpack.c.bf16 %v946, %v945
    %v955 = vld [vmem:[#allocation11] sm:$0xf]
    %v956 = vld [vmem:[#allocation11 + $0x4] sm:$0xf]
    %v957 = vld [vmem:[#allocation11 + $0x8] sm:$0xf]
    %v958 = vld [vmem:[#allocation11 + $0xc] sm:$0xf]
    %v959 = vld [vmem:[#allocation11 + $0x10] sm:$0xf]
    %v960 = vld [vmem:[#allocation11 + $0x14] sm:$0xf]
    %v961 = vld [vmem:[#allocation11 + $0x18] sm:$0xf]
    %v962 = vld [vmem:[#allocation11 + $0x1c] sm:$0xf]
    %v963 = vld [vmem:[#allocation11 + $0x20] sm:$0xf]
    %v964 = vld [vmem:[#allocation11 + $0x24] sm:$0xf]
    %v965 = vld [vmem:[#allocation11 + $0x28] sm:$0xf]
    %v966 = vld [vmem:[#allocation11 + $0x2c] sm:$0xf]
    %v967 = vld [vmem:[#allocation11 + $0x30] sm:$0xf]
    %v968 = vld [vmem:[#allocation11 + $0x34] sm:$0xf]
    %v969 = vld [vmem:[#allocation11 + $0x38] sm:$0xf]
    %v970 = vld [vmem:[#allocation11 + $0x3c] sm:$0xf]
    %v971 = vld [vmem:[%s9] sm:$0x1]
    %v973 = vlaneseq
    %v974 = vshrl.u32 %v973, 7
    %v975 = vsub.s32 0, %v974
    %v976 = vrot.slane %v971, %v975
    %v994 = vunpack.c.l.b16 %v955
    %v995 = vunpack.c.l.b16 %v956
    %v996 = vunpack.c.l.b16 %v957
    %v997 = vunpack.c.l.b16 %v958
    %v998 = vunpack.c.l.b16 %v959
    %v999 = vunpack.c.l.b16 %v960
    %v1000 = vunpack.c.l.b16 %v961
    %v1001 = vunpack.c.l.b16 %v962
    %v1002 = vunpack.c.l.b16 %v963
    %v1003 = vunpack.c.l.b16 %v964
    %v1004 = vunpack.c.l.b16 %v965
    %v1005 = vunpack.c.l.b16 %v966
    %v1006 = vunpack.c.l.b16 %v967
    %v1007 = vunpack.c.l.b16 %v968
    %v1008 = vunpack.c.l.b16 %v969
    %v1009 = vunpack.c.l.b16 %v970
    %v1010 = vpack.c.b16 %v995, %v994
    %v1011 = vpack.c.b16 %v997, %v996
    %v1012 = vpack.c.b16 %v999, %v998
    %v1013 = vpack.c.b16 %v1001, %v1000
    %v1014 = vpack.c.b16 %v1003, %v1002
    %v1015 = vpack.c.b16 %v1005, %v1004
    %v1016 = vpack.c.b16 %v1007, %v1006
    %v1017 = vpack.c.b16 %v1009, %v1008
    %1026 = vmatprep.subr.bf16.mxu0 0
    %1027 = vmatpush1.bf16.msra.mxu0 %v1010
    %1028 = vmatprep.subr.bf16.mxu0 0
    %1029 = vmatpush1.bf16.msra.mxu0 %v1011
    %1030 = vmatprep.subr.bf16.mxu0 0
    %1031 = vmatpush1.bf16.msra.mxu0 %v1012
    %1032 = vmatprep.subr.bf16.mxu0 0
    %1033 = vmatpush1.bf16.msra.mxu0 %v1013
    %1034 = vmatprep.subr.bf16.mxu0 0
    %1035 = vmatpush1.bf16.msra.mxu0 %v1014
    %1036 = vmatprep.subr.bf16.mxu0 0
    %1037 = vmatpush1.bf16.msra.mxu0 %v1015
    %1038 = vmatprep.subr.bf16.mxu0 0
    %1039 = vmatpush1.bf16.msra.mxu0 %v1016
    %1040 = vmatprep.subr.bf16.mxu0 0
    %1041 = vmatpush1.bf16.msra.mxu0 %v1017
    %1042 = vmatprep.subr.bf16.mxu0 0
    %1043 = vmatpush1.bf16.msra.mxu0 0
    %1044 = vmatprep.subr.bf16.mxu0 0
    %1045 = vmatpush1.bf16.msra.mxu0 0
    %1046 = vmatprep.subr.bf16.mxu0 0
    %1047 = vmatpush1.bf16.msra.mxu0 0
    %1048 = vmatprep.subr.bf16.mxu0 0
    %1049 = vmatpush1.bf16.msra.mxu0 0
    %1050 = vmatprep.subr.bf16.mxu0 0
    %1051 = vmatpush1.bf16.msra.mxu0 0
    %1052 = vmatprep.subr.bf16.mxu0 0
    %1053 = vmatpush1.bf16.msra.mxu0 0
    %1054 = vmatprep.subr.bf16.mxu0 0
    %1055 = vmatpush1.bf16.msra.mxu0 0
    %1056 = vmatprep.subr.bf16.mxu0 0
    %1057 = vmatpush1.bf16.msra.mxu0 0
    %1058 = vmatprep.mubr.bf16.mxu0 0
    %1059 = vmatmul.mubr.bf16.gmra.mrb[0].mxu0 %v947
    %v1060 = vpop.f32.mrb[0].mxu0
    %v1061 = vadd.f32 %v976, %v1060
    %v1062 = vpop.f32.mrb[0].mxu0
    %v1063 = vpop.f32.mrb[0].mxu0
    %v1064 = vadd.f32 %v976, %v1063
    %v1065 = vpop.f32.mrb[0].mxu0
    %1066 = vmatprep.mubr.bf16.mxu0 0
    %1067 = vmatmul.mubr.bf16.gmra.mrb[0].mxu0 %v948
    %v1068 = vpop.f32.mrb[0].mxu0
    %v1069 = vadd.f32 %v976, %v1068
    %v1070 = vpop.f32.mrb[0].mxu0
    %v1071 = vpop.f32.mrb[0].mxu0
    %v1072 = vadd.f32 %v976, %v1071
    %v1073 = vpop.f32.mrb[0].mxu0
    %1074 = vmatprep.mubr.bf16.mxu0 0
    %1075 = vmatmul.mubr.bf16.gmra.mrb[0].mxu0 %v949
    %v1076 = vpop.f32.mrb[0].mxu0
    %v1077 = vadd.f32 %v976, %v1076
    %v1078 = vpop.f32.mrb[0].mxu0
    %v1079 = vpop.f32.mrb[0].mxu0
    %v1080 = vadd.f32 %v976, %v1079
    %v1081 = vpop.f32.mrb[0].mxu0
    %1082 = vmatprep.mubr.bf16.mxu0 0
    %1083 = vmatmul.mubr.bf16.gmra.mrb[0].mxu0 %v950
    %v1084 = vpop.f32.mrb[0].mxu0
    %v1085 = vadd.f32 %v976, %v1084
    %v1086 = vpop.f32.mrb[0].mxu0
    %v1087 = vpop.f32.mrb[0].mxu0
    %v1088 = vadd.f32 %v976, %v1087
    %v1089 = vpop.f32.mrb[0].mxu0
    %1090 = vmatprep.mubr.bf16.mxu0 0
    %1091 = vmatmul.mubr.bf16.gmra.mrb[0].mxu0 %v951
    %v1092 = vpop.f32.mrb[0].mxu0
    %v1093 = vadd.f32 %v976, %v1092
    %v1094 = vpop.f32.mrb[0].mxu0
    %v1095 = vpop.f32.mrb[0].mxu0
    %v1096 = vadd.f32 %v976, %v1095
    %v1097 = vpop.f32.mrb[0].mxu0
    %1098 = vmatprep.mubr.bf16.mxu0 0
    %1099 = vmatmul.mubr.bf16.gmra.mrb[0].mxu0 %v952
    %v1100 = vpop.f32.mrb[0].mxu0
    %v1101 = vadd.f32 %v976, %v1100
    %v1102 = vpop.f32.mrb[0].mxu0
    %v1103 = vpop.f32.mrb[0].mxu0
    %v1104 = vadd.f32 %v976, %v1103
    %v1105 = vpop.f32.mrb[0].mxu0
    %1106 = vmatprep.mubr.bf16.mxu0 0
    %1107 = vmatmul.mubr.bf16.gmra.mrb[0].mxu0 %v953
    %v1108 = vpop.f32.mrb[0].mxu0
    %v1109 = vadd.f32 %v976, %v1108
    %v1110 = vpop.f32.mrb[0].mxu0
    %v1111 = vpop.f32.mrb[0].mxu0
    %v1112 = vadd.f32 %v976, %v1111
    %v1113 = vpop.f32.mrb[0].mxu0
    %1114 = vmatprep.mubr.bf16.mxu0 0
    %1115 = vmatmul.mubr.bf16.gmra.mrb[0].mxu0 %v954
    %v1116 = vpop.f32.mrb[0].mxu0
    %v1117 = vadd.f32 %v976, %v1116
    %v1118 = vpop.f32.mrb[0].mxu0
    %v1119 = vpop.f32.mrb[0].mxu0
    %v1120 = vadd.f32 %v976, %v1119
    %v1121 = vpop.f32.mrb[0].mxu0
    %1122 = vdwg.mxu0
    %v1123 = vmax.f32 %v1061, 0.0
    %v1124 = vmax.f32 %v1064, 0.0
    %v1125 = vmax.f32 %v1069, 0.0
    %v1126 = vmax.f32 %v1072, 0.0
    %v1127 = vmax.f32 %v1077, 0.0
    %v1128 = vmax.f32 %v1080, 0.0
    %v1129 = vmax.f32 %v1085, 0.0
    %v1130 = vmax.f32 %v1088, 0.0
    %v1131 = vmax.f32 %v1093, 0.0
    %v1132 = vmax.f32 %v1096, 0.0
    %v1133 = vmax.f32 %v1101, 0.0
    %v1134 = vmax.f32 %v1104, 0.0
    %v1135 = vmax.f32 %v1109, 0.0
    %v1136 = vmax.f32 %v1112, 0.0
    %v1137 = vmax.f32 %v1117, 0.0
    %v1138 = vmax.f32 %v1120, 0.0
    %v1139 = vpack.c.bf16 %v1124, %v1123
    %v1140 = vpack.c.bf16 %v1126, %v1125
    %v1141 = vpack.c.bf16 %v1128, %v1127
    %v1142 = vpack.c.bf16 %v1130, %v1129
    %v1143 = vpack.c.bf16 %v1132, %v1131
    %v1144 = vpack.c.bf16 %v1134, %v1133
    %v1145 = vpack.c.bf16 %v1136, %v1135
    %v1146 = vpack.c.bf16 %v1138, %v1137
    %v1147 = vld [vmem:[#allocation13] sm:$0xf]
    %v1148 = vld [vmem:[#allocation13 + $0x4] sm:$0xf]
    %v1149 = vld [vmem:[#allocation13 + $0x8] sm:$0xf]
    %v1150 = vld [vmem:[#allocation13 + $0xc] sm:$0xf]
    %v1151 = vld [vmem:[#allocation13 + $0x10] sm:$0xf]
    %v1152 = vld [vmem:[#allocation13 + $0x14] sm:$0xf]
    %v1153 = vld [vmem:[#allocation13 + $0x18] sm:$0xf]
    %v1154 = vld [vmem:[#allocation13 + $0x1c] sm:$0xf]
    %v1155 = vld [vmem:[#allocation13 + $0x20] sm:$0xf]
    %v1156 = vld [vmem:[#allocation13 + $0x24] sm:$0xf]
    %v1157 = vld [vmem:[#allocation13 + $0x28] sm:$0xf]
    %v1158 = vld [vmem:[#allocation13 + $0x2c] sm:$0xf]
    %v1159 = vld [vmem:[#allocation13 + $0x30] sm:$0xf]
    %v1160 = vld [vmem:[#allocation13 + $0x34] sm:$0xf]
    %v1161 = vld [vmem:[#allocation13 + $0x38] sm:$0xf]
    %v1162 = vld [vmem:[#allocation13 + $0x3c] sm:$0xf]
    %v1163 = vld [vmem:[%s11] sm:$0x1]
    %v1165 = vlaneseq
    %v1166 = vshrl.u32 %v1165, 7
    %v1167 = vsub.s32 0, %v1166
    %v1168 = vrot.slane %v1163, %v1167
    %v1186 = vunpack.c.l.b16 %v1147
    %v1187 = vunpack.c.l.b16 %v1148
    %v1188 = vunpack.c.l.b16 %v1149
    %v1189 = vunpack.c.l.b16 %v1150
    %v1190 = vunpack.c.l.b16 %v1151
    %v1191 = vunpack.c.l.b16 %v1152
    %v1192 = vunpack.c.l.b16 %v1153
    %v1193 = vunpack.c.l.b16 %v1154
    %v1194 = vunpack.c.l.b16 %v1155
    %v1195 = vunpack.c.l.b16 %v1156
    %v1196 = vunpack.c.l.b16 %v1157
    %v1197 = vunpack.c.l.b16 %v1158
    %v1198 = vunpack.c.l.b16 %v1159
    %v1199 = vunpack.c.l.b16 %v1160
    %v1200 = vunpack.c.l.b16 %v1161
    %v1201 = vunpack.c.l.b16 %v1162
    %v1202 = vpack.c.b16 %v1187, %v1186
    %v1203 = vpack.c.b16 %v1189, %v1188
    %v1204 = vpack.c.b16 %v1191, %v1190
    %v1205 = vpack.c.b16 %v1193, %v1192
    %v1206 = vpack.c.b16 %v1195, %v1194
    %v1207 = vpack.c.b16 %v1197, %v1196
    %v1208 = vpack.c.b16 %v1199, %v1198
    %v1209 = vpack.c.b16 %v1201, %v1200
    %1218 = vmatprep.subr.bf16.mxu0 0
    %1219 = vmatpush1.bf16.msra.mxu0 %v1202
    %1220 = vmatprep.subr.bf16.mxu0 0
    %1221 = vmatpush1.bf16.msra.mxu0 %v1203
    %1222 = vmatprep.subr.bf16.mxu0 0
    %1223 = vmatpush1.bf16.msra.mxu0 %v1204
    %1224 = vmatprep.subr.bf16.mxu0 0
    %1225 = vmatpush1.bf16.msra.mxu0 %v1205
    %1226 = vmatprep.subr.bf16.mxu0 0
    %1227 = vmatpush1.bf16.msra.mxu0 %v1206
    %1228 = vmatprep.subr.bf16.mxu0 0
    %1229 = vmatpush1.bf16.msra.mxu0 %v1207
    %1230 = vmatprep.subr.bf16.mxu0 0
    %1231 = vmatpush1.bf16.msra.mxu0 %v1208
    %1232 = vmatprep.subr.bf16.mxu0 0
    %1233 = vmatpush1.bf16.msra.mxu0 %v1209
    %1234 = vmatprep.subr.bf16.mxu0 0
    %1235 = vmatpush1.bf16.msra.mxu0 0
    %1236 = vmatprep.subr.bf16.mxu0 0
    %1237 = vmatpush1.bf16.msra.mxu0 0
    %1238 = vmatprep.subr.bf16.mxu0 0
    %1239 = vmatpush1.bf16.msra.mxu0 0
    %1240 = vmatprep.subr.bf16.mxu0 0
    %1241 = vmatpush1.bf16.msra.mxu0 0
    %1242 = vmatprep.subr.bf16.mxu0 0
    %1243 = vmatpush1.bf16.msra.mxu0 0
    %1244 = vmatprep.subr.bf16.mxu0 0
    %1245 = vmatpush1.bf16.msra.mxu0 0
    %1246 = vmatprep.subr.bf16.mxu0 0
    %1247 = vmatpush1.bf16.msra.mxu0 0
    %1248 = vmatprep.subr.bf16.mxu0 0
    %1249 = vmatpush1.bf16.msra.mxu0 0
    %1250 = vmatprep.mubr.bf16.mxu0 0
    %1251 = vmatmul.mubr.bf16.gmra.mrb[0].mxu0 %v1139
    %v1252 = vpop.f32.mrb[0].mxu0
    %v1253 = vadd.f32 %v1168, %v1252
    %v1254 = vpop.f32.mrb[0].mxu0
    %v1255 = vpop.f32.mrb[0].mxu0
    %v1256 = vadd.f32 %v1168, %v1255
    %v1257 = vpop.f32.mrb[0].mxu0
    %1258 = vmatprep.mubr.bf16.mxu0 0
    %1259 = vmatmul.mubr.bf16.gmra.mrb[0].mxu0 %v1140
    %v1260 = vpop.f32.mrb[0].mxu0
    %v1261 = vadd.f32 %v1168, %v1260
    %v1262 = vpop.f32.mrb[0].mxu0
    %v1263 = vpop.f32.mrb[0].mxu0
    %v1264 = vadd.f32 %v1168, %v1263
    %v1265 = vpop.f32.mrb[0].mxu0
    %1266 = vmatprep.mubr.bf16.mxu0 0
    %1267 = vmatmul.mubr.bf16.gmra.mrb[0].mxu0 %v1141
    %v1268 = vpop.f32.mrb[0].mxu0
    %v1269 = vadd.f32 %v1168, %v1268
    %v1270 = vpop.f32.mrb[0].mxu0
    %v1271 = vpop.f32.mrb[0].mxu0
    %v1272 = vadd.f32 %v1168, %v1271
    %v1273 = vpop.f32.mrb[0].mxu0
    %1274 = vmatprep.mubr.bf16.mxu0 0
    %1275 = vmatmul.mubr.bf16.gmra.mrb[0].mxu0 %v1142
    %v1276 = vpop.f32.mrb[0].mxu0
    %v1277 = vadd.f32 %v1168, %v1276
    %v1278 = vpop.f32.mrb[0].mxu0
    %v1279 = vpop.f32.mrb[0].mxu0
    %v1280 = vadd.f32 %v1168, %v1279
    %v1281 = vpop.f32.mrb[0].mxu0
    %1282 = vmatprep.mubr.bf16.mxu0 0
    %1283 = vmatmul.mubr.bf16.gmra.mrb[0].mxu0 %v1143
    %v1284 = vpop.f32.mrb[0].mxu0
    %v1285 = vadd.f32 %v1168, %v1284
    %v1286 = vpop.f32.mrb[0].mxu0
    %v1287 = vpop.f32.mrb[0].mxu0
    %v1288 = vadd.f32 %v1168, %v1287
    %v1289 = vpop.f32.mrb[0].mxu0
    %1290 = vmatprep.mubr.bf16.mxu0 0
    %1291 = vmatmul.mubr.bf16.gmra.mrb[0].mxu0 %v1144
    %v1292 = vpop.f32.mrb[0].mxu0
    %v1293 = vadd.f32 %v1168, %v1292
    %v1294 = vpop.f32.mrb[0].mxu0
    %v1295 = vpop.f32.mrb[0].mxu0
    %v1296 = vadd.f32 %v1168, %v1295
    %v1297 = vpop.f32.mrb[0].mxu0
    %1298 = vmatprep.mubr.bf16.mxu0 0
    %1299 = vmatmul.mubr.bf16.gmra.mrb[0].mxu0 %v1145
    %v1300 = vpop.f32.mrb[0].mxu0
    %v1301 = vadd.f32 %v1168, %v1300
    %v1302 = vpop.f32.mrb[0].mxu0
    %v1303 = vpop.f32.mrb[0].mxu0
    %v1304 = vadd.f32 %v1168, %v1303
    %v1305 = vpop.f32.mrb[0].mxu0
    %1306 = vmatprep.mubr.bf16.mxu0 0
    %1307 = vmatmul.mubr.bf16.gmra.mrb[0].mxu0 %v1146
    %v1308 = vpop.f32.mrb[0].mxu0
    %v1309 = vadd.f32 %v1168, %v1308
    %v1310 = vpop.f32.mrb[0].mxu0
    %v1311 = vpop.f32.mrb[0].mxu0
    %v1312 = vadd.f32 %v1168, %v1311
    %v1313 = vpop.f32.mrb[0].mxu0
    %1314 = vdwg.mxu0
    %v1315 = vxor.u32 %v1253, 2147483648
    %v1316 = vxor.u32 %v1256, 2147483648
    %v1317 = vxor.u32 %v1261, 2147483648
    %v1318 = vxor.u32 %v1264, 2147483648
    %v1319 = vxor.u32 %v1269, 2147483648
    %v1320 = vxor.u32 %v1272, 2147483648
    %v1321 = vxor.u32 %v1277, 2147483648
    %v1322 = vxor.u32 %v1280, 2147483648
    %v1323 = vxor.u32 %v1285, 2147483648
    %v1324 = vxor.u32 %v1288, 2147483648
    %v1325 = vxor.u32 %v1293, 2147483648
    %v1326 = vxor.u32 %v1296, 2147483648
    %v1327 = vxor.u32 %v1301, 2147483648
    %v1328 = vxor.u32 %v1304, 2147483648
    %v1329 = vxor.u32 %v1309, 2147483648
    %v1330 = vxor.u32 %v1312, 2147483648
    %v1331 = vmul.f32 %v1315, 1.442695
    %v1332 = vpow.pop %v1331
    %v1333 = vmul.f32 %v1316, 1.442695
    %v1334 = vpow.pop %v1333
    %v1335 = vmul.f32 %v1317, 1.442695
    %v1336 = vpow.pop %v1335
    %v1337 = vmul.f32 %v1318, 1.442695
    %v1338 = vpow.pop %v1337
    %v1339 = vmul.f32 %v1319, 1.442695
    %v1340 = vpow.pop %v1339
    %v1341 = vmul.f32 %v1320, 1.442695
    %v1342 = vpow.pop %v1341
    %v1343 = vmul.f32 %v1321, 1.442695
    %v1344 = vpow.pop %v1343
    %v1345 = vmul.f32 %v1322, 1.442695
    %v1346 = vpow.pop %v1345
    %v1347 = vmul.f32 %v1323, 1.442695
    %v1348 = vpow.pop %v1347
    %v1349 = vmul.f32 %v1324, 1.442695
    %v1350 = vpow.pop %v1349
    %v1351 = vmul.f32 %v1325, 1.442695
    %v1352 = vpow.pop %v1351
    %v1353 = vmul.f32 %v1326, 1.442695
    %v1354 = vpow.pop %v1353
    %v1355 = vmul.f32 %v1327, 1.442695
    %v1356 = vpow.pop %v1355
    %v1357 = vmul.f32 %v1328, 1.442695
    %v1358 = vpow.pop %v1357
    %v1359 = vmul.f32 %v1329, 1.442695
    %v1360 = vpow.pop %v1359
    %v1361 = vmul.f32 %v1330, 1.442695
    %v1362 = vpow.pop %v1361
    %v1363 = vadd.f32 %v1332, 1.0
    %v1364 = vadd.f32 %v1334, 1.0
    %v1365 = vadd.f32 %v1336, 1.0
    %v1366 = vadd.f32 %v1338, 1.0
    %v1367 = vadd.f32 %v1340, 1.0
    %v1368 = vadd.f32 %v1342, 1.0
    %v1369 = vadd.f32 %v1344, 1.0
    %v1370 = vadd.f32 %v1346, 1.0
    %v1371 = vadd.f32 %v1348, 1.0
    %v1372 = vadd.f32 %v1350, 1.0
    %v1373 = vadd.f32 %v1352, 1.0
    %v1374 = vadd.f32 %v1354, 1.0
    %v1375 = vadd.f32 %v1356, 1.0
    %v1376 = vadd.f32 %v1358, 1.0
    %v1377 = vadd.f32 %v1360, 1.0
    %v1378 = vadd.f32 %v1362, 1.0
    %v1379 = vrcp.pop %v1363
    %v1380 = vmul.f32 1.0, %v1379
    %v1381 = vrcp.pop %v1364
    %v1382 = vmul.f32 1.0, %v1381
    %v1383 = vrcp.pop %v1365
    %v1384 = vmul.f32 1.0, %v1383
    %v1385 = vrcp.pop %v1366
    %v1386 = vmul.f32 1.0, %v1385
    %v1387 = vrcp.pop %v1367
    %v1388 = vmul.f32 1.0, %v1387
    %v1389 = vrcp.pop %v1368
    %v1390 = vmul.f32 1.0, %v1389
    %v1391 = vrcp.pop %v1369
    %v1392 = vmul.f32 1.0, %v1391
    %v1393 = vrcp.pop %v1370
    %v1394 = vmul.f32 1.0, %v1393
    %v1395 = vrcp.pop %v1371
    %v1396 = vmul.f32 1.0, %v1395
    %v1397 = vrcp.pop %v1372
    %v1398 = vmul.f32 1.0, %v1397
    %v1399 = vrcp.pop %v1373
    %v1400 = vmul.f32 1.0, %v1399
    %v1401 = vrcp.pop %v1374
    %v1402 = vmul.f32 1.0, %v1401
    %v1403 = vrcp.pop %v1375
    %v1404 = vmul.f32 1.0, %v1403
    %v1405 = vrcp.pop %v1376
    %v1406 = vmul.f32 1.0, %v1405
    %v1407 = vrcp.pop %v1377
    %v1408 = vmul.f32 1.0, %v1407
    %v1409 = vrcp.pop %v1378
    %v1410 = vmul.f32 1.0, %v1409
    %v1411 = vpack.c.bf16 %v1382, %v1380
    %v1412 = vpack.c.bf16 %v1386, %v1384
    %v1413 = vpack.c.bf16 %v1390, %v1388
    %v1414 = vpack.c.bf16 %v1394, %v1392
    %v1415 = vpack.c.bf16 %v1398, %v1396
    %v1416 = vpack.c.bf16 %v1402, %v1400
    %v1417 = vpack.c.bf16 %v1406, %v1404
    %v1418 = vpack.c.bf16 %v1410, %v1408
    %v1427 = vunpack.c.l.b16 %v1411
    %v1428 = vunpack.c.h.b16 %v1411
    %v1429 = vunpack.c.l.b16 %v1412
    %v1430 = vunpack.c.h.b16 %v1412
    %v1431 = vunpack.c.l.b16 %v1413
    %v1432 = vunpack.c.h.b16 %v1413
    %v1433 = vunpack.c.l.b16 %v1414
    %v1434 = vunpack.c.h.b16 %v1414
    %v1435 = vunpack.c.l.b16 %v1415
    %v1436 = vunpack.c.h.b16 %v1415
    %v1437 = vunpack.c.l.b16 %v1416
    %v1438 = vunpack.c.h.b16 %v1416
    %v1439 = vunpack.c.l.b16 %v1417
    %v1440 = vunpack.c.h.b16 %v1417
    %v1441 = vunpack.c.l.b16 %v1418
    %v1442 = vunpack.c.h.b16 %v1418
    %v1443 = vpack.c.b16 %v1427, %v1427
    %v1444 = vpack.c.b16 %v1428, %v1428
    %v1445 = vpack.c.b16 %v1429, %v1429
    %v1446 = vpack.c.b16 %v1430, %v1430
    %v1447 = vpack.c.b16 %v1431, %v1431
    %v1448 = vpack.c.b16 %v1432, %v1432
    %v1449 = vpack.c.b16 %v1433, %v1433
    %v1450 = vpack.c.b16 %v1434, %v1434
    %v1451 = vpack.c.b16 %v1435, %v1435
    %v1452 = vpack.c.b16 %v1436, %v1436
    %v1453 = vpack.c.b16 %v1437, %v1437
    %v1454 = vpack.c.b16 %v1438, %v1438
    %v1455 = vpack.c.b16 %v1439, %v1439
    %v1456 = vpack.c.b16 %v1440, %v1440
    %v1457 = vpack.c.b16 %v1441, %v1441
    %v1458 = vpack.c.b16 %v1442, %v1442
    %1475 = vst [vmem:[#allocation14] sm:$0xf] %v1443
    %1476 = vst [vmem:[#allocation14 + $0x4] sm:$0xf] %v1444
    %1477 = vst [vmem:[#allocation14 + $0x8] sm:$0xf] %v1445
    %1478 = vst [vmem:[#allocation14 + $0xc] sm:$0xf] %v1446
    %1479 = vst [vmem:[#allocation14 + $0x10] sm:$0xf] %v1447
    %1480 = vst [vmem:[#allocation14 + $0x14] sm:$0xf] %v1448
    %1481 = vst [vmem:[#allocation14 + $0x18] sm:$0xf] %v1449
    %1482 = vst [vmem:[#allocation14 + $0x1c] sm:$0xf] %v1450
    %1483 = vst [vmem:[#allocation14 + $0x20] sm:$0xf] %v1451
    %1484 = vst [vmem:[#allocation14 + $0x24] sm:$0xf] %v1452
    %1485 = vst [vmem:[#allocation14 + $0x28] sm:$0xf] %v1453
    %1486 = vst [vmem:[#allocation14 + $0x2c] sm:$0xf] %v1454
    %1487 = vst [vmem:[#allocation14 + $0x30] sm:$0xf] %v1455
    %1488 = vst [vmem:[#allocation14 + $0x34] sm:$0xf] %v1456
    %1489 = vst [vmem:[#allocation14 + $0x38] sm:$0xf] %v1457
    %1490 = vst [vmem:[#allocation14 + $0x3c] sm:$0xf] %v1458
    // Predicated region
    $region78: #{tpu_custom_call.1} parent=1 // pred_check
      _
    $region79: #{tpu_custom_call.1} parent=1 // pred_check_branch
      %1492 = sbr.rel (0) target = $region81
    $region80: #{tpu_custom_call.1} parent=1 // pred_region
      %s1494 = ssub.s32 1024, 1024
      %1495 = vsyncadd [#allocation4], %s1494
      %s1496 = sshll.u32 [#allocation14], 4
      %s1497 = int_to_ptr.vmem [resolvable:$true] %s1496
      %1502 = dma.vmem_to_hbm [thread:$0]  %s1497, 1024, %s12, [#allocation4], 64, 64, 4
    $region81: #{tpu_custom_call.1} parent=1 // pred_fallthru
      _
    // Predicated region
    $region82: #{tpu_custom_call.1} parent=1 // pred_check
      _
    $region83: #{tpu_custom_call.1} parent=1 // pred_check_branch
      %1504 = sbr.rel (0) target = $region85
    $region84: #{tpu_custom_call.1} parent=1 // pred_region
      %1505 = dma.done [#allocation4], 1024
    $region85: #{tpu_custom_call.1} parent=1 // pred_fallthru
      _
    %1506 = vsyncpa [#allocation3], 1
    %1507 = vsyncpa [#allocation6], 1
    %1508 = vsyncpa [#allocation9], 1
    %1509 = vsyncpa [#allocation12], 1
    %1510 = vsyncpa [#allocation4], 1

</llo_original>
